<compile_context>
chip_gen: v7x
topology: tpu7x:2x2x1
jax: 0.10.0
libtpu: 0.0.40
codegen_flags: <defaults>
</compile_context>

<pallas_src>
import jax
import jax.numpy as jnp
from jax.experimental import pallas as pl
from jax.experimental.pallas import tpu as pltpu

# ------------------------- model hyperparameters (small) -------------------------
B = 2            # batch
NUM_MEL = 16     # mel bins (Whisper uses 80; scaled down)
T_AUDIO = 16     # input audio frames
D_MODEL = 32     # hidden size
N_HEADS = 4
HEAD_DIM = D_MODEL // N_HEADS
FFN = 64
N_ENC_LAYERS = 1
N_DEC_LAYERS = 1
VOCAB = 64       # hp.vocab_size (scaled down)
PROJ = 16        # hp.proj_size
T_DEC = 8        # decoder sequence length
T_ENC = T_AUDIO // 2   # conv2 has stride 2
OUT_LANES = 128        # lane-dense packed output width


# --------------------------- parameter slab layout --------------------------------
def _build_layout():
    """Static (name -> (row, nrows, ncols)) layout of the single parameter slab."""
    entries = []

    def add(name, nrows, ncols):
        entries.append((name, nrows, ncols))

    add("conv1_w", NUM_MEL, 3 * D_MODEL)     # taps stacked along columns
    add("conv1_b", 1, D_MODEL)
    add("conv2_w", D_MODEL, 3 * D_MODEL)
    add("conv2_b", 1, D_MODEL)
    add("enc_pos", T_ENC, D_MODEL)
    for i in range(N_ENC_LAYERS):
        pre = f"enc{i}"
        add(pre + "_ln1_g", 1, D_MODEL); add(pre + "_ln1_b", 1, D_MODEL)
        add(pre + "_qkv_w", D_MODEL, 3 * D_MODEL); add(pre + "_qkv_b", 1, 3 * D_MODEL)
        add(pre + "_o_w", D_MODEL, D_MODEL); add(pre + "_o_b", 1, D_MODEL)
        add(pre + "_ln2_g", 1, D_MODEL); add(pre + "_ln2_b", 1, D_MODEL)
        add(pre + "_fc1_w", D_MODEL, FFN); add(pre + "_fc1_b", 1, FFN)
        add(pre + "_fc2_w", FFN, D_MODEL); add(pre + "_fc2_b", 1, D_MODEL)
    add("enc_ln_g", 1, D_MODEL); add("enc_ln_b", 1, D_MODEL)
    add("embed", VOCAB, D_MODEL)
    add("dec_pos", T_DEC, D_MODEL)
    for i in range(N_DEC_LAYERS):
        pre = f"dec{i}"
        add(pre + "_ln1_g", 1, D_MODEL); add(pre + "_ln1_b", 1, D_MODEL)
        add(pre + "_qkv_w", D_MODEL, 3 * D_MODEL); add(pre + "_qkv_b", 1, 3 * D_MODEL)
        add(pre + "_o_w", D_MODEL, D_MODEL); add(pre + "_o_b", 1, D_MODEL)
        add(pre + "_ln2_g", 1, D_MODEL); add(pre + "_ln2_b", 1, D_MODEL)
        add(pre + "_cq_w", D_MODEL, D_MODEL); add(pre + "_cq_b", 1, D_MODEL)
        add(pre + "_ckv_w", D_MODEL, 2 * D_MODEL); add(pre + "_ckv_b", 1, 2 * D_MODEL)
        add(pre + "_co_w", D_MODEL, D_MODEL); add(pre + "_co_b", 1, D_MODEL)
        add(pre + "_ln3_g", 1, D_MODEL); add(pre + "_ln3_b", 1, D_MODEL)
        add(pre + "_fc1_w", D_MODEL, FFN); add(pre + "_fc1_b", 1, FFN)
        add(pre + "_fc2_w", FFN, D_MODEL); add(pre + "_fc2_b", 1, D_MODEL)
    add("dec_ln_g", 1, D_MODEL); add("dec_ln_b", 1, D_MODEL)
    add("lm_head", D_MODEL, VOCAB)           # tied embedding, pre-transposed
    add("proj_w", VOCAB, PROJ)               # proj_out: Linear(vocab, proj, bias=False)

    slots, row = {}, 0
    for name, nrows, ncols in entries:
        slots[name] = (row, nrows, ncols)
        row += ((nrows + 7) // 8) * 8        # 8-row (sublane-tile) aligned slots
    return slots, row


_SLOTS, _SLAB_ROWS = _build_layout()


# ------------------------------ in-kernel helpers ---------------------------------
def _gelu(x):
    # TODO(synk): HF Whisper uses exact erf GELU; tanh approximation kept for
    #             guaranteed Mosaic lowering (small systematic numeric drift).
    return jax.nn.gelu(x, approximate=True)


# ------------------------------ the fused kernel ----------------------------------
def _fused_whisper_kernel(feat_ref, tok_ref, slab_ref, out_ref):
    f32 = jnp.float32

    def P(name):
        r, n, c = _SLOTS[name]
        return slab_ref[pl.ds(r, n), pl.ds(0, c)]

    def layernorm(x, prefix):
        mu = jnp.mean(x, axis=-1, keepdims=True)
        var = jnp.mean(jnp.square(x - mu), axis=-1, keepdims=True)
        return (x - mu) * jax.lax.rsqrt(var + 1e-5) * P(prefix + "_g") + P(prefix + "_b")

    def softmax(s):
        s = s - jnp.max(s, axis=-1, keepdims=True)
        p = jnp.exp(s)
        # EUP reciprocal (otherwise-idle slot); ~1e-3 rel. error vs exact divide.
        return p * pl.reciprocal(jnp.sum(p, axis=-1, keepdims=True), approx=True)

    # Per-head lane masks, hoisted once (broadcast_in_dim is not CSE'd by JAX).
    lane_d = jax.lax.broadcasted_iota(jnp.int32, (1, D_MODEL), 1)
    head_masks = [
        jnp.logical_and(lane_d >= h * HEAD_DIM, lane_d < (h + 1) * HEAD_DIM).astype(f32)
        for h in range(N_HEADS)
    ]

    def attend_heads(q, k, v, mask):
        # q,k,v: (Tq,D),(Tk,D),(Tk,D).  Per-head math via lane masks:
        #   (q*mask_h) . k  contracts only head-h dims; p @ (v*mask_h) writes the
        #   head-h output into its own lane block, so summing over heads gives the
        #   concatenated multi-head output with zero lane slicing / concatenation.
        out = jnp.zeros((q.shape[0], D_MODEL), f32)
        for h in range(N_HEADS):
            s = jax.lax.dot_general(q * head_masks[h], k, (((1,), (1,)), ((), ())),
                                    preferred_element_type=f32)
            if mask is not None:
                s = s + mask
            out = out + jnp.dot(softmax(s), v * head_masks[h],
                                preferred_element_type=f32)
        return out

    def self_attn(x, prefix, mask):
        qkv = (jnp.dot(x, P(prefix + "_qkv_w"), preferred_element_type=f32)
               + P(prefix + "_qkv_b"))                       # (T, 3D); q pre-scaled
        o = attend_heads(qkv[:, 0:D_MODEL], qkv[:, D_MODEL:2 * D_MODEL],
                         qkv[:, 2 * D_MODEL:3 * D_MODEL], mask)
        return jnp.dot(o, P(prefix + "_o_w"), preferred_element_type=f32) + P(prefix + "_o_b")

    def cross_attn(x, kv_src, prefix):
        q = jnp.dot(x, P(prefix + "_cq_w"), preferred_element_type=f32) + P(prefix + "_cq_b")
        kv = (jnp.dot(kv_src, P(prefix + "_ckv_w"), preferred_element_type=f32)
              + P(prefix + "_ckv_b"))                        # (T_enc, 2D)
        o = attend_heads(q, kv[:, 0:D_MODEL], kv[:, D_MODEL:2 * D_MODEL], None)
        return jnp.dot(o, P(prefix + "_co_w"), preferred_element_type=f32) + P(prefix + "_co_b")

    def mlp(x, prefix):
        f = _gelu(jnp.dot(x, P(prefix + "_fc1_w"), preferred_element_type=f32)
                  + P(prefix + "_fc1_b"))
        return jnp.dot(f, P(prefix + "_fc2_w"), preferred_element_type=f32) + P(prefix + "_fc2_b")

    def conv(x, wname, bname, t_in, t_out, stride):
        # 2 MXU pushes: taps folded into one (t_in,3D) weight matmul, then one
        # (t_out, 3*t_in) constant selection matmul (zero padding is implicit:
        # out-of-range taps simply match no column).
        g = jnp.dot(x, P(wname), preferred_element_type=f32)             # (t_in, 3D)
        gs = jnp.concatenate(
            [g[:, k * D_MODEL:(k + 1) * D_MODEL] for k in range(3)], axis=0)  # (3*t_in, D)
        rr = jax.lax.broadcasted_iota(jnp.int32, (t_out, 3 * t_in), 0)
        cc = jax.lax.broadcasted_iota(jnp.int32, (t_out, 3 * t_in), 1)
        sel = jnp.zeros((t_out, 3 * t_in), jnp.bool_)
        for k in range(3):
            sel = jnp.logical_or(sel, cc == k * t_in + stride * rr + (k - 1))
        return _gelu(jnp.dot(sel.astype(f32), gs, preferred_element_type=f32) + P(bname))

    # ---------------- conv stem ----------------
    x_audio = feat_ref[0]                                    # (T_AUDIO, NUM_MEL)
    h = conv(x_audio, "conv1_w", "conv1_b", T_AUDIO, T_AUDIO, 1)
    h = conv(h, "conv2_w", "conv2_b", T_AUDIO, T_ENC, 2) + P("enc_pos")

    # ---------------- encoder (pre-LN) ----------------
    for i in range(N_ENC_LAYERS):
        pre = f"enc{i}"
        h = h + self_attn(layernorm(h, pre + "_ln1"), pre, None)
        h = h + mlp(layernorm(h, pre + "_ln2"), pre)
    enc_out = layernorm(h, "enc_ln")

    # ---------------- decoder (pre-LN, causal self-attn + cross-attn) -------------
    tok = tok_ref[0]                                         # (T_DEC, 2) int32
    ids = tok[:, 0:1]
    lbl = tok[:, 1:2]
    vcols = jax.lax.broadcasted_iota(jnp.int32, (T_DEC, VOCAB), 1)
    x = jnp.dot((vcols == ids).astype(f32), P("embed"),      # embedding via one-hot matmul
                preferred_element_type=f32) + P("dec_pos")
    ci = jax.lax.broadcasted_iota(jnp.int32, (T_DEC, T_DEC), 0)
    cj = jax.lax.broadcasted_iota(jnp.int32, (T_DEC, T_DEC), 1)
    causal = jnp.where(cj <= ci, 0.0, -1e9).astype(f32)
    for i in range(N_DEC_LAYERS):
        pre = f"dec{i}"
        x = x + self_attn(layernorm(x, pre + "_ln1"), pre, causal)
        x = x + cross_attn(layernorm(x, pre + "_ln2"), enc_out, pre)
        x = x + mlp(layernorm(x, pre + "_ln3"), pre)
    x = layernorm(x, "dec_ln")

    # -------- tied lm_head -> proj_out -> CE (ignore_index=-100) -> argmax --------
    vocab_logits = jnp.dot(x, P("lm_head"), preferred_element_type=f32)        # (T_DEC, VOCAB)
    lm_logits = jnp.dot(vocab_logits, P("proj_w"), preferred_element_type=f32) # (T_DEC, PROJ)

    pcols = jax.lax.broadcasted_iota(jnp.int32, (T_DEC, PROJ), 1)
    mx = jnp.max(lm_logits, axis=-1, keepdims=True)
    argmax_f = jnp.min(jnp.where(lm_logits == mx, pcols, PROJ),  # first-max == torch.argmax
                       axis=-1, keepdims=True).astype(f32)

    valid = (lbl >= 0).astype(f32)                           # ignore_index = -100
    lbl_safe = jnp.where(lbl >= 0, lbl, 0)
    lse = jnp.log(jnp.sum(jnp.exp(lm_logits - mx), axis=-1, keepdims=True)) + mx
    picked = jnp.sum(jnp.where(pcols == lbl_safe, lm_logits, 0.0),
                     axis=-1, keepdims=True)
    nll = (lse - picked) * valid

    # Lane-dense packed output: lanes [0:PROJ]=logits, PROJ=argmax, PROJ+1=nll,
    # PROJ+2=valid-count.  One unmasked 128-lane store.
    prow = jax.lax.broadcasted_iota(jnp.int32, (PROJ, OUT_LANES), 0)
    plane = jax.lax.broadcasted_iota(jnp.int32, (PROJ, OUT_LANES), 1)
    place = (plane == prow).astype(f32)                      # (PROJ, 128) placement
    lane1 = jax.lax.broadcasted_iota(jnp.int32, (1, OUT_LANES), 1)
    packed = (jnp.dot(lm_logits, place, preferred_element_type=f32)
              + argmax_f * (lane1 == PROJ).astype(f32)
              + nll * (lane1 == PROJ + 1).astype(f32)
              + valid * (lane1 == PROJ + 2).astype(f32))
    out_ref[0] = packed


# ------------------------------ pallas_call wrapper -------------------------------
def _pallas_forward(slab, feats, tok):
    return pl.pallas_call(
        _fused_whisper_kernel,
        grid=(B,),
        in_specs=[
            pl.BlockSpec((1, T_AUDIO, NUM_MEL), lambda b: (b, 0, 0)),
            pl.BlockSpec((1, T_DEC, 2), lambda b: (b, 0, 0)),
            # Constant index_map: the slab is fetched once, not per grid step.
            pl.BlockSpec((_SLAB_ROWS, OUT_LANES), lambda b: (0, 0)),
        ],
        out_specs=pl.BlockSpec((1, T_DEC, OUT_LANES), lambda b: (b, 0, 0)),
        out_shape=jax.ShapeDtypeStruct((B, T_DEC, OUT_LANES), jnp.float32),
        compiler_params=pltpu.CompilerParams(dimension_semantics=("parallel",)),
    )(feats, tok, slab)


@jax.jit
def _forward_core(slab, input_features, decoder_input_ids, labels):
    feats = jnp.transpose(input_features, (0, 2, 1)).astype(jnp.float32)   # (B, T, mel)
    tok = jnp.stack([decoder_input_ids.astype(jnp.int32),
                     labels.astype(jnp.int32)], axis=-1)                   # (B, T_DEC, 2)
    packed = _pallas_forward(slab, feats, tok)
    logits = packed[:, :, :PROJ]
    output_ids = packed[:, :, PROJ].astype(jnp.int32)
    lsum = jnp.sum(packed[:, :, PROJ + 1])
    lcnt = jnp.sum(packed[:, :, PROJ + 2])
    loss = lsum / jnp.maximum(lcnt, 1.0)     # mean over non-ignored tokens
    return logits, output_ids, loss


def forward(param_slab, input_features, decoder_input_ids, labels=None,
            return_output_ids=False):
    if labels is None:
        lbl = jnp.full((input_features.shape[0], T_DEC), -100, jnp.int32)
    else:
        lbl = labels
    logits, output_ids, loss = _forward_core(param_slab, input_features,
                                             decoder_input_ids, lbl)
    return {
        "loss": loss if labels is not None else None,
        "logits": logits,
        "output_ids": output_ids if return_output_ids else None,
    }


# ------------------------------ parameter packing ----------------------------------
def pack_params(p):
    """Pack all parameters ONCE into a single lane-dense (rows, 128) f32 slab.

    QKV weights are fused along the output axis with the q-scale baked in; the
    conv taps are stacked along columns; the tied lm_head is stored pre-transposed.
    """
    f32 = jnp.float32
    scale = HEAD_DIM ** -0.5
    slab = jnp.zeros((_SLAB_ROWS, OUT_LANES), f32)

    def put(s, name, val):
        r, n, c = _SLOTS[name]
        return s.at[r:r + n, 0:c].set(jnp.asarray(val, f32).reshape(n, c))

    def conv_cat(w):            # torch (D_out, C_in, K) -> (C_in, K*D_out)
        w = jnp.asarray(w, f32)
        return jnp.transpose(w, (1, 2, 0)).reshape(w.shape[1], 3 * w.shape[0])

    def put_ln(s, name, g, b):
        s = put(s, name + "_g", g)
        return put(s, name + "_b", b)

    def put_self_attn(s, pre, a):
        k_b = jnp.zeros((D_MODEL,), f32)                     # Whisper k_proj has no bias
        wqkv = jnp.concatenate([a["q_w"] * scale, a["k_w"], a["v_w"]], axis=1)
        bqkv = jnp.concatenate([a["q_b"] * scale, k_b, a["v_b"]], axis=0)
        s = put(s, pre + "_qkv_w", wqkv)
        s = put(s, pre + "_qkv_b", bqkv)
        s = put(s, pre + "_o_w", a["o_w"])
        return put(s, pre + "_o_b", a["o_b"])

    def put_cross_attn(s, pre, a):
        k_b = jnp.zeros((D_MODEL,), f32)
        s = put(s, pre + "_cq_w", a["q_w"] * scale)
        s = put(s, pre + "_cq_b", a["q_b"] * scale)
        s = put(s, pre + "_ckv_w", jnp.concatenate([a["k_w"], a["v_w"]], axis=1))
        s = put(s, pre + "_ckv_b", jnp.concatenate([k_b, a["v_b"]], axis=0))
        s = put(s, pre + "_co_w", a["o_w"])
        return put(s, pre + "_co_b", a["o_b"])

    def put_mlp(s, pre, lp):
        s = put(s, pre + "_fc1_w", lp["fc1_w"]); s = put(s, pre + "_fc1_b", lp["fc1_b"])
        s = put(s, pre + "_fc2_w", lp["fc2_w"]); return put(s, pre + "_fc2_b", lp["fc2_b"])

    slab = put(slab, "conv1_w", conv_cat(p["conv1_w"]))
    slab = put(slab, "conv1_b", p["conv1_b"])
    slab = put(slab, "conv2_w", conv_cat(p["conv2_w"]))
    slab = put(slab, "conv2_b", p["conv2_b"])
    slab = put(slab, "enc_pos", p["enc_pos"])

    for i, lp in enumerate(p["enc_layers"]):
        pre = f"enc{i}"
        slab = put_ln(slab, pre + "_ln1", lp["ln1_g"], lp["ln1_b"])
        slab = put_self_attn(slab, pre, lp["sa"])
        slab = put_ln(slab, pre + "_ln2", lp["ln2_g"], lp["ln2_b"])
        slab = put_mlp(slab, pre, lp)

    slab = put_ln(slab, "enc_ln", p["enc_ln_g"], p["enc_ln_b"])
    slab = put(slab, "embed", p["embed"])
    slab = put(slab, "dec_pos", p["dec_pos"])

    for i, lp in enumerate(p["dec_layers"]):
        pre = f"dec{i}"
        slab = put_ln(slab, pre + "_ln1", lp["ln1_g"], lp["ln1_b"])
        slab = put_self_attn(slab, pre, lp["sa"])
        slab = put_ln(slab, pre + "_ln2", lp["ln2_g"], lp["ln2_b"])
        slab = put_cross_attn(slab, pre, lp["ca"])
        slab = put_ln(slab, pre + "_ln3", lp["ln3_g"], lp["ln3_b"])
        slab = put_mlp(slab, pre, lp)

    slab = put_ln(slab, "dec_ln", p["dec_ln_g"], p["dec_ln_b"])
    slab = put(slab, "lm_head", jnp.asarray(p["embed"], f32).T)
    slab = put(slab, "proj_w", p["proj_w"])
    return slab


# ------------------------------ parameter init ------------------------------------
def init_params(key):
    keys = iter(jax.random.split(key, 128))

    def nrm(shape, scale=0.02):
        return (scale * jax.random.normal(next(keys), shape)).astype(jnp.float32)

    def attn_params():
        return dict(
            q_w=nrm((D_MODEL, D_MODEL)), q_b=jnp.zeros((D_MODEL,), jnp.float32),
            k_w=nrm((D_MODEL, D_MODEL)),                    # Whisper k_proj has no bias
            v_w=nrm((D_MODEL, D_MODEL)), v_b=jnp.zeros((D_MODEL,), jnp.float32),
            o_w=nrm((D_MODEL, D_MODEL)), o_b=jnp.zeros((D_MODEL,), jnp.float32),
        )

    def enc_layer_params():
        return dict(
            sa=attn_params(),
            ln1_g=jnp.ones((D_MODEL,), jnp.float32), ln1_b=jnp.zeros((D_MODEL,), jnp.float32),
            fc1_w=nrm((D_MODEL, FFN)), fc1_b=jnp.zeros((FFN,), jnp.float32),
            fc2_w=nrm((FFN, D_MODEL)), fc2_b=jnp.zeros((D_MODEL,), jnp.float32),
            ln2_g=jnp.ones((D_MODEL,), jnp.float32), ln2_b=jnp.zeros((D_MODEL,), jnp.float32),
        )

    def dec_layer_params():
        return dict(
            sa=attn_params(), ca=attn_params(),
            ln1_g=jnp.ones((D_MODEL,), jnp.float32), ln1_b=jnp.zeros((D_MODEL,), jnp.float32),
            ln2_g=jnp.ones((D_MODEL,), jnp.float32), ln2_b=jnp.zeros((D_MODEL,), jnp.float32),
            fc1_w=nrm((D_MODEL, FFN)), fc1_b=jnp.zeros((FFN,), jnp.float32),
            fc2_w=nrm((FFN, D_MODEL)), fc2_b=jnp.zeros((D_MODEL,), jnp.float32),
            ln3_g=jnp.ones((D_MODEL,), jnp.float32), ln3_b=jnp.zeros((D_MODEL,), jnp.float32),
        )

    return dict(
        conv1_w=nrm((D_MODEL, NUM_MEL, 3)), conv1_b=jnp.zeros((D_MODEL,), jnp.float32),
        conv2_w=nrm((D_MODEL, D_MODEL, 3)), conv2_b=jnp.zeros((D_MODEL,), jnp.float32),
        enc_pos=nrm((T_ENC, D_MODEL)),
        enc_layers=[enc_layer_params() for _ in range(N_ENC_LAYERS)],
        enc_ln_g=jnp.ones((D_MODEL,), jnp.float32), enc_ln_b=jnp.zeros((D_MODEL,), jnp.float32),
        embed=nrm((VOCAB, D_MODEL)),
        dec_pos=nrm((T_DEC, D_MODEL)),
        dec_layers=[dec_layer_params() for _ in range(N_DEC_LAYERS)],
        dec_ln_g=jnp.ones((D_MODEL,), jnp.float32), dec_ln_b=jnp.zeros((D_MODEL,), jnp.float32),
        proj_w=nrm((VOCAB, PROJ)),      # proj_out: Linear(vocab_size, proj_size, bias=False)
    )


# --------------------------------- main --------------------------------------------
if __name__ == "__main__":
    key = jax.random.PRNGKey(0)
    kp, kf, kd, kl = jax.random.split(key, 4)

    params = init_params(kp)
    param_slab = pack_params(params)             # pack once into one lane-dense slab

    input_features = jax.random.normal(kf, (B, NUM_MEL, T_AUDIO), jnp.float32)
    decoder_input_ids = jax.random.randint(kd, (B, T_DEC), 0, VOCAB)
    labels = jax.random.randint(kl, (B, T_DEC), 0, PROJ)

    out = forward(param_slab, input_features, decoder_input_ids, labels=labels,
                  return_output_ids=True)
    out = jax.block_until_ready(out)

    assert out["logits"].shape == (B, T_DEC, PROJ)
    assert out["output_ids"].shape == (B, T_DEC)
    assert bool(jnp.isfinite(out["loss"]))
    print("KERNEL_OK")
</pallas_src>

<mosaic_0001>
module attributes {stable_mosaic.version = 11 : i64} {
  func.func @_fused_whisper_kernel(%arg0: i32, %arg1: memref<1x16x16xf32, #tpu.memory_space<vmem>>, %arg2: memref<1x8x2xi32, #tpu.memory_space<vmem>>, %arg3: memref<856x128xf32, #tpu.memory_space<vmem>>, %arg4: memref<1x8x128xf32, #tpu.memory_space<vmem>>) attributes {dimension_semantics = [#tpu.dimension_semantics<parallel>], iteration_bounds = array<i64: 2>, scalar_prefetch = 0 : i64, scratch_operands = 0 : i64, tpu.core_type = #tpu.core_type<tc>, window_params = [{transform_indices = @transform_0, window_bounds = array<i64: 1, 16, 16>}, {transform_indices = @transform_1, window_bounds = array<i64: 1, 8, 2>}, {pipeline_mode = #tpu.pipeline_mode<synchronous>, transform_indices = @transform_2, window_bounds = array<i64: 856, 128>}, {transform_indices = @transform_3, window_bounds = array<i64: 1, 8, 128>}]} {
    %0 = tpu.iota {dimensions = array<i32: 1>} : vector<1x32xi32>
    %c0_i32 = arith.constant 0 : i32
    %1 = vector.broadcast %c0_i32 : i32 to vector<1x32xi32>
    %2 = arith.cmpi sge, %0, %1 : vector<1x32xi32>
    %c8_i32 = arith.constant 8 : i32
    %3 = vector.broadcast %c8_i32 : i32 to vector<1x32xi32>
    %4 = arith.cmpi slt, %0, %3 : vector<1x32xi32>
    %5 = arith.andi %2, %4 : vector<1x32xi1>
    %6 = arith.extui %5 : vector<1x32xi1> to vector<1x32xi32>
    %7 = arith.sitofp %6 : vector<1x32xi32> to vector<1x32xf32>
    %c8_i32_0 = arith.constant 8 : i32
    %8 = vector.broadcast %c8_i32_0 : i32 to vector<1x32xi32>
    %9 = arith.cmpi sge, %0, %8 : vector<1x32xi32>
    %c16_i32 = arith.constant 16 : i32
    %10 = vector.broadcast %c16_i32 : i32 to vector<1x32xi32>
    %11 = arith.cmpi slt, %0, %10 : vector<1x32xi32>
    %12 = arith.andi %9, %11 : vector<1x32xi1>
    %13 = arith.extui %12 : vector<1x32xi1> to vector<1x32xi32>
    %14 = arith.sitofp %13 : vector<1x32xi32> to vector<1x32xf32>
    %c16_i32_1 = arith.constant 16 : i32
    %15 = vector.broadcast %c16_i32_1 : i32 to vector<1x32xi32>
    %16 = arith.cmpi sge, %0, %15 : vector<1x32xi32>
    %c24_i32 = arith.constant 24 : i32
    %17 = vector.broadcast %c24_i32 : i32 to vector<1x32xi32>
    %18 = arith.cmpi slt, %0, %17 : vector<1x32xi32>
    %19 = arith.andi %16, %18 : vector<1x32xi1>
    %20 = arith.extui %19 : vector<1x32xi1> to vector<1x32xi32>
    %21 = arith.sitofp %20 : vector<1x32xi32> to vector<1x32xf32>
    %c24_i32_2 = arith.constant 24 : i32
    %22 = vector.broadcast %c24_i32_2 : i32 to vector<1x32xi32>
    %23 = arith.cmpi sge, %0, %22 : vector<1x32xi32>
    %c32_i32 = arith.constant 32 : i32
    %24 = vector.broadcast %c32_i32 : i32 to vector<1x32xi32>
    %25 = arith.cmpi slt, %0, %24 : vector<1x32xi32>
    %26 = arith.andi %23, %25 : vector<1x32xi1>
    %27 = arith.extui %26 : vector<1x32xi1> to vector<1x32xi32>
    %28 = arith.sitofp %27 : vector<1x32xi32> to vector<1x32xf32>
    %c0 = arith.constant 0 : index
    %c0_3 = arith.constant 0 : index
    %c0_4 = arith.constant 0 : index
    %29 = vector.load %arg1[%c0, %c0_3, %c0_4] : memref<1x16x16xf32, #tpu.memory_space<vmem>>, vector<1x16x16xf32>
    %30 = vector.shape_cast %29 : vector<1x16x16xf32> to vector<16x16xf32>
    %c0_5 = arith.constant 0 : index
    %c0_6 = arith.constant 0 : index
    %31 = vector.load %arg3[%c0_5, %c0_6] : memref<856x128xf32, #tpu.memory_space<vmem>>, vector<16x96xf32>
    %cst = arith.constant dense<0.000000e+00> : vector<16x96xf32>
    %32 = tpu.matmul %30, %31, %cst {dimension_numbers = #tpu.dot_dimension_numbers<[1], [0], [0], [1], [0, 0, 1, 1], [], []>} : vector<16x16xf32>, vector<16x96xf32>, vector<16x96xf32> -> vector<16x96xf32>
    %33 = vector.extract_strided_slice %32 {offsets = [0, 0], sizes = [16, 32], strides = [1, 1]} : vector<16x96xf32> to vector<16x32xf32>
    %34 = vector.extract_strided_slice %32 {offsets = [0, 32], sizes = [16, 32], strides = [1, 1]} : vector<16x96xf32> to vector<16x32xf32>
    %35 = vector.extract_strided_slice %32 {offsets = [0, 64], sizes = [16, 32], strides = [1, 1]} : vector<16x96xf32> to vector<16x32xf32>
    %36 = tpu.concatenate %33, %34, %35 in 0 : vector<16x32xf32>, vector<16x32xf32>, vector<16x32xf32> -> vector<48x32xf32>
    %37 = tpu.iota {dimensions = array<i32: 0>} : vector<16x48xi32>
    %38 = tpu.iota {dimensions = array<i32: 1>} : vector<16x48xi32>
    %false = arith.constant false
    %39 = vector.broadcast %false : i1 to vector<16x48xi1>
    %c1_i32 = arith.constant 1 : i32
    %40 = vector.broadcast %c1_i32 : i32 to vector<16x48xi32>
    %41 = arith.muli %40, %37 : vector<16x48xi32>
    %c0_i32_7 = arith.constant 0 : i32
    %42 = vector.broadcast %c0_i32_7 : i32 to vector<16x48xi32>
    %43 = arith.addi %42, %41 : vector<16x48xi32>
    %c-1_i32 = arith.constant -1 : i32
    %44 = vector.broadcast %c-1_i32 : i32 to vector<16x48xi32>
    %45 = arith.addi %43, %44 : vector<16x48xi32>
    %46 = arith.cmpi eq, %38, %45 : vector<16x48xi32>
    %47 = arith.ori %39, %46 : vector<16x48xi1>
    %c1_i32_8 = arith.constant 1 : i32
    %48 = vector.broadcast %c1_i32_8 : i32 to vector<16x48xi32>
    %49 = arith.muli %48, %37 : vector<16x48xi32>
    %c16_i32_9 = arith.constant 16 : i32
    %50 = vector.broadcast %c16_i32_9 : i32 to vector<16x48xi32>
    %51 = arith.addi %50, %49 : vector<16x48xi32>
    %c0_i32_10 = arith.constant 0 : i32
    %52 = vector.broadcast %c0_i32_10 : i32 to vector<16x48xi32>
    %53 = arith.addi %51, %52 : vector<16x48xi32>
    %54 = arith.cmpi eq, %38, %53 : vector<16x48xi32>
    %55 = arith.ori %47, %54 : vector<16x48xi1>
    %c1_i32_11 = arith.constant 1 : i32
    %56 = vector.broadcast %c1_i32_11 : i32 to vector<16x48xi32>
    %57 = arith.muli %56, %37 : vector<16x48xi32>
    %c32_i32_12 = arith.constant 32 : i32
    %58 = vector.broadcast %c32_i32_12 : i32 to vector<16x48xi32>
    %59 = arith.addi %58, %57 : vector<16x48xi32>
    %c1_i32_13 = arith.constant 1 : i32
    %60 = vector.broadcast %c1_i32_13 : i32 to vector<16x48xi32>
    %61 = arith.addi %59, %60 : vector<16x48xi32>
    %62 = arith.cmpi eq, %38, %61 : vector<16x48xi32>
    %63 = arith.ori %55, %62 : vector<16x48xi1>
    %64 = arith.extui %63 : vector<16x48xi1> to vector<16x48xi32>
    %65 = arith.sitofp %64 : vector<16x48xi32> to vector<16x48xf32>
    %cst_14 = arith.constant dense<0.000000e+00> : vector<16x32xf32>
    %66 = tpu.matmul %65, %36, %cst_14 {dimension_numbers = #tpu.dot_dimension_numbers<[1], [0], [0], [1], [0, 0, 1, 1], [], []>} : vector<16x48xf32>, vector<48x32xf32>, vector<16x32xf32> -> vector<16x32xf32>
    %c16 = arith.constant 16 : index
    %c0_15 = arith.constant 0 : index
    %67 = vector.load %arg3[%c16, %c0_15] : memref<856x128xf32, #tpu.memory_space<vmem>>, vector<1x32xf32>
    %68 = vector.broadcast %67 : vector<1x32xf32> to vector<16x32xf32>
    %69 = arith.addf %66, %68 : vector<16x32xf32>
    %70 = arith.mulf %69, %69 : vector<16x32xf32>
    %71 = arith.mulf %69, %70 : vector<16x32xf32>
    %cst_16 = arith.constant 4.471500e-02 : f32
    %72 = vector.broadcast %cst_16 : f32 to vector<16x32xf32>
    %73 = arith.mulf %72, %71 : vector<16x32xf32>
    %74 = arith.addf %69, %73 : vector<16x32xf32>
    %cst_17 = arith.constant 0.797884583 : f32
    %75 = vector.broadcast %cst_17 : f32 to vector<16x32xf32>
    %76 = arith.mulf %75, %74 : vector<16x32xf32>
    %77 = math.tanh %76 : vector<16x32xf32>
    %cst_18 = arith.constant 1.000000e+00 : f32
    %78 = vector.broadcast %cst_18 : f32 to vector<16x32xf32>
    %79 = arith.addf %78, %77 : vector<16x32xf32>
    %cst_19 = arith.constant 5.000000e-01 : f32
    %80 = vector.broadcast %cst_19 : f32 to vector<16x32xf32>
    %81 = arith.mulf %80, %79 : vector<16x32xf32>
    %82 = arith.mulf %69, %81 : vector<16x32xf32>
    %c24 = arith.constant 24 : index
    %c0_20 = arith.constant 0 : index
    %83 = vector.load %arg3[%c24, %c0_20] : memref<856x128xf32, #tpu.memory_space<vmem>>, vector<32x96xf32>
    %cst_21 = arith.constant dense<0.000000e+00> : vector<16x96xf32>
    %84 = tpu.matmul %82, %83, %cst_21 {dimension_numbers = #tpu.dot_dimension_numbers<[1], [0], [0], [1], [0, 0, 1, 1], [], []>} : vector<16x32xf32>, vector<32x96xf32>, vector<16x96xf32> -> vector<16x96xf32>
    %85 = vector.extract_strided_slice %84 {offsets = [0, 0], sizes = [16, 32], strides = [1, 1]} : vector<16x96xf32> to vector<16x32xf32>
    %86 = vector.extract_strided_slice %84 {offsets = [0, 32], sizes = [16, 32], strides = [1, 1]} : vector<16x96xf32> to vector<16x32xf32>
    %87 = vector.extract_strided_slice %84 {offsets = [0, 64], sizes = [16, 32], strides = [1, 1]} : vector<16x96xf32> to vector<16x32xf32>
    %88 = tpu.concatenate %85, %86, %87 in 0 : vector<16x32xf32>, vector<16x32xf32>, vector<16x32xf32> -> vector<48x32xf32>
    %89 = tpu.iota {dimensions = array<i32: 0>} : vector<8x48xi32>
    %90 = tpu.iota {dimensions = array<i32: 1>} : vector<8x48xi32>
    %false_22 = arith.constant false
    %91 = vector.broadcast %false_22 : i1 to vector<8x48xi1>
    %c2_i32 = arith.constant 2 : i32
    %92 = vector.broadcast %c2_i32 : i32 to vector<8x48xi32>
    %93 = arith.muli %92, %89 : vector<8x48xi32>
    %c0_i32_23 = arith.constant 0 : i32
    %94 = vector.broadcast %c0_i32_23 : i32 to vector<8x48xi32>
    %95 = arith.addi %94, %93 : vector<8x48xi32>
    %c-1_i32_24 = arith.constant -1 : i32
    %96 = vector.broadcast %c-1_i32_24 : i32 to vector<8x48xi32>
    %97 = arith.addi %95, %96 : vector<8x48xi32>
    %98 = arith.cmpi eq, %90, %97 : vector<8x48xi32>
    %99 = arith.ori %91, %98 : vector<8x48xi1>
    %c2_i32_25 = arith.constant 2 : i32
    %100 = vector.broadcast %c2_i32_25 : i32 to vector<8x48xi32>
    %101 = arith.muli %100, %89 : vector<8x48xi32>
    %c16_i32_26 = arith.constant 16 : i32
    %102 = vector.broadcast %c16_i32_26 : i32 to vector<8x48xi32>
    %103 = arith.addi %102, %101 : vector<8x48xi32>
    %c0_i32_27 = arith.constant 0 : i32
    %104 = vector.broadcast %c0_i32_27 : i32 to vector<8x48xi32>
    %105 = arith.addi %103, %104 : vector<8x48xi32>
    %106 = arith.cmpi eq, %90, %105 : vector<8x48xi32>
    %107 = arith.ori %99, %106 : vector<8x48xi1>
    %c2_i32_28 = arith.constant 2 : i32
    %108 = vector.broadcast %c2_i32_28 : i32 to vector<8x48xi32>
    %109 = arith.muli %108, %89 : vector<8x48xi32>
    %c32_i32_29 = arith.constant 32 : i32
    %110 = vector.broadcast %c32_i32_29 : i32 to vector<8x48xi32>
    %111 = arith.addi %110, %109 : vector<8x48xi32>
    %c1_i32_30 = arith.constant 1 : i32
    %112 = vector.broadcast %c1_i32_30 : i32 to vector<8x48xi32>
    %113 = arith.addi %111, %112 : vector<8x48xi32>
    %114 = arith.cmpi eq, %90, %113 : vector<8x48xi32>
    %115 = arith.ori %107, %114 : vector<8x48xi1>
    %116 = arith.extui %115 : vector<8x48xi1> to vector<8x48xi32>
    %117 = arith.sitofp %116 : vector<8x48xi32> to vector<8x48xf32>
    %cst_31 = arith.constant dense<0.000000e+00> : vector<8x32xf32>
    %118 = tpu.matmul %117, %88, %cst_31 {dimension_numbers = #tpu.dot_dimension_numbers<[1], [0], [0], [1], [0, 0, 1, 1], [], []>} : vector<8x48xf32>, vector<48x32xf32>, vector<8x32xf32> -> vector<8x32xf32>
    %c56 = arith.constant 56 : index
    %c0_32 = arith.constant 0 : index
    %119 = vector.load %arg3[%c56, %c0_32] : memref<856x128xf32, #tpu.memory_space<vmem>>, vector<1x32xf32>
    %120 = vector.broadcast %119 : vector<1x32xf32> to vector<8x32xf32>
    %121 = arith.addf %118, %120 : vector<8x32xf32>
    %122 = arith.mulf %121, %121 : vector<8x32xf32>
    %123 = arith.mulf %121, %122 : vector<8x32xf32>
    %cst_33 = arith.constant 4.471500e-02 : f32
    %124 = vector.broadcast %cst_33 : f32 to vector<8x32xf32>
    %125 = arith.mulf %124, %123 : vector<8x32xf32>
    %126 = arith.addf %121, %125 : vector<8x32xf32>
    %cst_34 = arith.constant 0.797884583 : f32
    %127 = vector.broadcast %cst_34 : f32 to vector<8x32xf32>
    %128 = arith.mulf %127, %126 : vector<8x32xf32>
    %129 = math.tanh %128 : vector<8x32xf32>
    %cst_35 = arith.constant 1.000000e+00 : f32
    %130 = vector.broadcast %cst_35 : f32 to vector<8x32xf32>
    %131 = arith.addf %130, %129 : vector<8x32xf32>
    %cst_36 = arith.constant 5.000000e-01 : f32
    %132 = vector.broadcast %cst_36 : f32 to vector<8x32xf32>
    %133 = arith.mulf %132, %131 : vector<8x32xf32>
    %134 = arith.mulf %121, %133 : vector<8x32xf32>
    %c64 = arith.constant 64 : index
    %c0_37 = arith.constant 0 : index
    %135 = vector.load %arg3[%c64, %c0_37] : memref<856x128xf32, #tpu.memory_space<vmem>>, vector<8x32xf32>
    %136 = arith.addf %134, %135 : vector<8x32xf32>
    %cst_38 = arith.constant dense<0.000000e+00> : vector<8xf32>
    %137 = vector.multi_reduction <add>, %136, %cst_38 [1] : vector<8x32xf32> to vector<8xf32>
    %138 = vector.shape_cast %137 : vector<8xf32> to vector<8x1xf32>
    %cst_39 = arith.constant 3.200000e+01 : f32
    %139 = vector.broadcast %cst_39 : f32 to vector<8x1xf32>
    %140 = arith.divf %138, %139 : vector<8x1xf32>
    %141 = vector.broadcast %140 : vector<8x1xf32> to vector<8x32xf32>
    %142 = arith.subf %136, %141 : vector<8x32xf32>
    %143 = arith.mulf %142, %142 : vector<8x32xf32>
    %cst_40 = arith.constant dense<0.000000e+00> : vector<8xf32>
    %144 = vector.multi_reduction <add>, %143, %cst_40 [1] : vector<8x32xf32> to vector<8xf32>
    %145 = vector.shape_cast %144 : vector<8xf32> to vector<8x1xf32>
    %cst_41 = arith.constant 3.200000e+01 : f32
    %146 = vector.broadcast %cst_41 : f32 to vector<8x1xf32>
    %147 = arith.divf %145, %146 : vector<8x1xf32>
    %148 = vector.broadcast %140 : vector<8x1xf32> to vector<8x32xf32>
    %149 = arith.subf %136, %148 : vector<8x32xf32>
    %cst_42 = arith.constant 9.99999974E-6 : f32
    %150 = vector.broadcast %cst_42 : f32 to vector<8x1xf32>
    %151 = arith.addf %147, %150 : vector<8x1xf32>
    %152 = math.rsqrt %151 : vector<8x1xf32>
    %153 = vector.broadcast %152 : vector<8x1xf32> to vector<8x32xf32>
    %154 = arith.mulf %149, %153 : vector<8x32xf32>
    %c72 = arith.constant 72 : index
    %c0_43 = arith.constant 0 : index
    %155 = vector.load %arg3[%c72, %c0_43] : memref<856x128xf32, #tpu.memory_space<vmem>>, vector<1x32xf32>
    %156 = vector.broadcast %155 : vector<1x32xf32> to vector<8x32xf32>
    %157 = arith.mulf %154, %156 : vector<8x32xf32>
    %c80 = arith.constant 80 : index
    %c0_44 = arith.constant 0 : index
    %158 = vector.load %arg3[%c80, %c0_44] : memref<856x128xf32, #tpu.memory_space<vmem>>, vector<1x32xf32>
    %159 = vector.broadcast %158 : vector<1x32xf32> to vector<8x32xf32>
    %160 = arith.addf %157, %159 : vector<8x32xf32>
    %c88 = arith.constant 88 : index
    %c0_45 = arith.constant 0 : index
    %161 = vector.load %arg3[%c88, %c0_45] : memref<856x128xf32, #tpu.memory_space<vmem>>, vector<32x96xf32>
    %cst_46 = arith.constant dense<0.000000e+00> : vector<8x96xf32>
    %162 = tpu.matmul %160, %161, %cst_46 {dimension_numbers = #tpu.dot_dimension_numbers<[1], [0], [0], [1], [0, 0, 1, 1], [], []>} : vector<8x32xf32>, vector<32x96xf32>, vector<8x96xf32> -> vector<8x96xf32>
    %c120 = arith.constant 120 : index
    %c0_47 = arith.constant 0 : index
    %163 = vector.load %arg3[%c120, %c0_47] : memref<856x128xf32, #tpu.memory_space<vmem>>, vector<1x96xf32>
    %164 = vector.broadcast %163 : vector<1x96xf32> to vector<8x96xf32>
    %165 = arith.addf %162, %164 : vector<8x96xf32>
    %166 = vector.extract_strided_slice %165 {offsets = [0, 0], sizes = [8, 32], strides = [1, 1]} : vector<8x96xf32> to vector<8x32xf32>
    %167 = vector.extract_strided_slice %165 {offsets = [0, 32], sizes = [8, 32], strides = [1, 1]} : vector<8x96xf32> to vector<8x32xf32>
    %168 = vector.extract_strided_slice %165 {offsets = [0, 64], sizes = [8, 32], strides = [1, 1]} : vector<8x96xf32> to vector<8x32xf32>
    %cst_48 = arith.constant 0.000000e+00 : f32
    %169 = vector.broadcast %cst_48 : f32 to vector<8x32xf32>
    %170 = vector.broadcast %7 : vector<1x32xf32> to vector<8x32xf32>
    %171 = arith.mulf %166, %170 : vector<8x32xf32>
    %cst_49 = arith.constant dense<0.000000e+00> : vector<8x8xf32>
    %172 = tpu.matmul %171, %167, %cst_49 {dimension_numbers = #tpu.dot_dimension_numbers<[1], [1], [0], [0], [0, 0, 1, 0], [], []>} : vector<8x32xf32>, vector<8x32xf32>, vector<8x8xf32> -> vector<8x8xf32>
    %cst_50 = arith.constant dense<0xFF800000> : vector<8xf32>
    %173 = vector.multi_reduction <maximumf>, %172, %cst_50 [1] : vector<8x8xf32> to vector<8xf32>
    %174 = vector.shape_cast %173 : vector<8xf32> to vector<8x1xf32>
    %175 = vector.broadcast %174 : vector<8x1xf32> to vector<8x8xf32>
    %176 = arith.subf %172, %175 : vector<8x8xf32>
    %177 = math.exp %176 : vector<8x8xf32>
    %cst_51 = arith.constant dense<0.000000e+00> : vector<8xf32>
    %178 = vector.multi_reduction <add>, %177, %cst_51 [1] : vector<8x8xf32> to vector<8xf32>
    %179 = vector.shape_cast %178 : vector<8xf32> to vector<8x1xf32>
    %180 = tpu.reciprocal %179 {approx = true} : vector<8x1xf32> -> vector<8x1xf32>
    %181 = vector.broadcast %180 : vector<8x1xf32> to vector<8x8xf32>
    %182 = arith.mulf %177, %181 : vector<8x8xf32>
    %183 = vector.broadcast %7 : vector<1x32xf32> to vector<8x32xf32>
    %184 = arith.mulf %168, %183 : vector<8x32xf32>
    %cst_52 = arith.constant dense<0.000000e+00> : vector<8x32xf32>
    %185 = tpu.matmul %182, %184, %cst_52 {dimension_numbers = #tpu.dot_dimension_numbers<[1], [0], [0], [1], [0, 0, 1, 1], [], []>} : vector<8x8xf32>, vector<8x32xf32>, vector<8x32xf32> -> vector<8x32xf32>
    %186 = arith.addf %169, %185 : vector<8x32xf32>
    %187 = vector.broadcast %14 : vector<1x32xf32> to vector<8x32xf32>
    %188 = arith.mulf %166, %187 : vector<8x32xf32>
    %cst_53 = arith.constant dense<0.000000e+00> : vector<8x8xf32>
    %189 = tpu.matmul %188, %167, %cst_53 {dimension_numbers = #tpu.dot_dimension_numbers<[1], [1], [0], [0], [0, 0, 1, 0], [], []>} : vector<8x32xf32>, vector<8x32xf32>, vector<8x8xf32> -> vector<8x8xf32>
    %cst_54 = arith.constant dense<0xFF800000> : vector<8xf32>
    %190 = vector.multi_reduction <maximumf>, %189, %cst_54 [1] : vector<8x8xf32> to vector<8xf32>
    %191 = vector.shape_cast %190 : vector<8xf32> to vector<8x1xf32>
    %192 = vector.broadcast %191 : vector<8x1xf32> to vector<8x8xf32>
    %193 = arith.subf %189, %192 : vector<8x8xf32>
    %194 = math.exp %193 : vector<8x8xf32>
    %cst_55 = arith.constant dense<0.000000e+00> : vector<8xf32>
    %195 = vector.multi_reduction <add>, %194, %cst_55 [1] : vector<8x8xf32> to vector<8xf32>
    %196 = vector.shape_cast %195 : vector<8xf32> to vector<8x1xf32>
    %197 = tpu.reciprocal %196 {approx = true} : vector<8x1xf32> -> vector<8x1xf32>
    %198 = vector.broadcast %197 : vector<8x1xf32> to vector<8x8xf32>
    %199 = arith.mulf %194, %198 : vector<8x8xf32>
    %200 = vector.broadcast %14 : vector<1x32xf32> to vector<8x32xf32>
    %201 = arith.mulf %168, %200 : vector<8x32xf32>
    %cst_56 = arith.constant dense<0.000000e+00> : vector<8x32xf32>
    %202 = tpu.matmul %199, %201, %cst_56 {dimension_numbers = #tpu.dot_dimension_numbers<[1], [0], [0], [1], [0, 0, 1, 1], [], []>} : vector<8x8xf32>, vector<8x32xf32>, vector<8x32xf32> -> vector<8x32xf32>
    %203 = arith.addf %186, %202 : vector<8x32xf32>
    %204 = vector.broadcast %21 : vector<1x32xf32> to vector<8x32xf32>
    %205 = arith.mulf %166, %204 : vector<8x32xf32>
    %cst_57 = arith.constant dense<0.000000e+00> : vector<8x8xf32>
    %206 = tpu.matmul %205, %167, %cst_57 {dimension_numbers = #tpu.dot_dimension_numbers<[1], [1], [0], [0], [0, 0, 1, 0], [], []>} : vector<8x32xf32>, vector<8x32xf32>, vector<8x8xf32> -> vector<8x8xf32>
    %cst_58 = arith.constant dense<0xFF800000> : vector<8xf32>
    %207 = vector.multi_reduction <maximumf>, %206, %cst_58 [1] : vector<8x8xf32> to vector<8xf32>
    %208 = vector.shape_cast %207 : vector<8xf32> to vector<8x1xf32>
    %209 = vector.broadcast %208 : vector<8x1xf32> to vector<8x8xf32>
    %210 = arith.subf %206, %209 : vector<8x8xf32>
    %211 = math.exp %210 : vector<8x8xf32>
    %cst_59 = arith.constant dense<0.000000e+00> : vector<8xf32>
    %212 = vector.multi_reduction <add>, %211, %cst_59 [1] : vector<8x8xf32> to vector<8xf32>
    %213 = vector.shape_cast %212 : vector<8xf32> to vector<8x1xf32>
    %214 = tpu.reciprocal %213 {approx = true} : vector<8x1xf32> -> vector<8x1xf32>
    %215 = vector.broadcast %214 : vector<8x1xf32> to vector<8x8xf32>
    %216 = arith.mulf %211, %215 : vector<8x8xf32>
    %217 = vector.broadcast %21 : vector<1x32xf32> to vector<8x32xf32>
    %218 = arith.mulf %168, %217 : vector<8x32xf32>
    %cst_60 = arith.constant dense<0.000000e+00> : vector<8x32xf32>
    %219 = tpu.matmul %216, %218, %cst_60 {dimension_numbers = #tpu.dot_dimension_numbers<[1], [0], [0], [1], [0, 0, 1, 1], [], []>} : vector<8x8xf32>, vector<8x32xf32>, vector<8x32xf32> -> vector<8x32xf32>
    %220 = arith.addf %203, %219 : vector<8x32xf32>
    %221 = vector.broadcast %28 : vector<1x32xf32> to vector<8x32xf32>
    %222 = arith.mulf %166, %221 : vector<8x32xf32>
    %cst_61 = arith.constant dense<0.000000e+00> : vector<8x8xf32>
    %223 = tpu.matmul %222, %167, %cst_61 {dimension_numbers = #tpu.dot_dimension_numbers<[1], [1], [0], [0], [0, 0, 1, 0], [], []>} : vector<8x32xf32>, vector<8x32xf32>, vector<8x8xf32> -> vector<8x8xf32>
    %cst_62 = arith.constant dense<0xFF800000> : vector<8xf32>
    %224 = vector.multi_reduction <maximumf>, %223, %cst_62 [1] : vector<8x8xf32> to vector<8xf32>
    %225 = vector.shape_cast %224 : vector<8xf32> to vector<8x1xf32>
    %226 = vector.broadcast %225 : vector<8x1xf32> to vector<8x8xf32>
    %227 = arith.subf %223, %226 : vector<8x8xf32>
    %228 = math.exp %227 : vector<8x8xf32>
    %cst_63 = arith.constant dense<0.000000e+00> : vector<8xf32>
    %229 = vector.multi_reduction <add>, %228, %cst_63 [1] : vector<8x8xf32> to vector<8xf32>
    %230 = vector.shape_cast %229 : vector<8xf32> to vector<8x1xf32>
    %231 = tpu.reciprocal %230 {approx = true} : vector<8x1xf32> -> vector<8x1xf32>
    %232 = vector.broadcast %231 : vector<8x1xf32> to vector<8x8xf32>
    %233 = arith.mulf %228, %232 : vector<8x8xf32>
    %234 = vector.broadcast %28 : vector<1x32xf32> to vector<8x32xf32>
    %235 = arith.mulf %168, %234 : vector<8x32xf32>
    %cst_64 = arith.constant dense<0.000000e+00> : vector<8x32xf32>
    %236 = tpu.matmul %233, %235, %cst_64 {dimension_numbers = #tpu.dot_dimension_numbers<[1], [0], [0], [1], [0, 0, 1, 1], [], []>} : vector<8x8xf32>, vector<8x32xf32>, vector<8x32xf32> -> vector<8x32xf32>
    %237 = arith.addf %220, %236 : vector<8x32xf32>
    %c128 = arith.constant 128 : index
    %c0_65 = arith.constant 0 : index
    %238 = vector.load %arg3[%c128, %c0_65] : memref<856x128xf32, #tpu.memory_space<vmem>>, vector<32x32xf32>
    %cst_66 = arith.constant dense<0.000000e+00> : vector<8x32xf32>
    %239 = tpu.matmul %237, %238, %cst_66 {dimension_numbers = #tpu.dot_dimension_numbers<[1], [0], [0], [1], [0, 0, 1, 1], [], []>} : vector<8x32xf32>, vector<32x32xf32>, vector<8x32xf32> -> vector<8x32xf32>
    %c160 = arith.constant 160 : index
    %c0_67 = arith.constant 0 : index
    %240 = vector.load %arg3[%c160, %c0_67] : memref<856x128xf32, #tpu.memory_space<vmem>>, vector<1x32xf32>
    %241 = vector.broadcast %240 : vector<1x32xf32> to vector<8x32xf32>
    %242 = arith.addf %239, %241 : vector<8x32xf32>
    %243 = arith.addf %136, %242 : vector<8x32xf32>
    %cst_68 = arith.constant dense<0.000000e+00> : vector<8xf32>
    %244 = vector.multi_reduction <add>, %243, %cst_68 [1] : vector<8x32xf32> to vector<8xf32>
    %245 = vector.shape_cast %244 : vector<8xf32> to vector<8x1xf32>
    %cst_69 = arith.constant 3.200000e+01 : f32
    %246 = vector.broadcast %cst_69 : f32 to vector<8x1xf32>
    %247 = arith.divf %245, %246 : vector<8x1xf32>
    %248 = vector.broadcast %247 : vector<8x1xf32> to vector<8x32xf32>
    %249 = arith.subf %243, %248 : vector<8x32xf32>
    %250 = arith.mulf %249, %249 : vector<8x32xf32>
    %cst_70 = arith.constant dense<0.000000e+00> : vector<8xf32>
    %251 = vector.multi_reduction <add>, %250, %cst_70 [1] : vector<8x32xf32> to vector<8xf32>
    %252 = vector.shape_cast %251 : vector<8xf32> to vector<8x1xf32>
    %cst_71 = arith.constant 3.200000e+01 : f32
    %253 = vector.broadcast %cst_71 : f32 to vector<8x1xf32>
    %254 = arith.divf %252, %253 : vector<8x1xf32>
    %255 = vector.broadcast %247 : vector<8x1xf32> to vector<8x32xf32>
    %256 = arith.subf %243, %255 : vector<8x32xf32>
    %cst_72 = arith.constant 9.99999974E-6 : f32
    %257 = vector.broadcast %cst_72 : f32 to vector<8x1xf32>
    %258 = arith.addf %254, %257 : vector<8x1xf32>
    %259 = math.rsqrt %258 : vector<8x1xf32>
    %260 = vector.broadcast %259 : vector<8x1xf32> to vector<8x32xf32>
    %261 = arith.mulf %256, %260 : vector<8x32xf32>
    %c168 = arith.constant 168 : index
    %c0_73 = arith.constant 0 : index
    %262 = vector.load %arg3[%c168, %c0_73] : memref<856x128xf32, #tpu.memory_space<vmem>>, vector<1x32xf32>
    %263 = vector.broadcast %262 : vector<1x32xf32> to vector<8x32xf32>
    %264 = arith.mulf %261, %263 : vector<8x32xf32>
    %c176 = arith.constant 176 : index
    %c0_74 = arith.constant 0 : index
    %265 = vector.load %arg3[%c176, %c0_74] : memref<856x128xf32, #tpu.memory_space<vmem>>, vector<1x32xf32>
    %266 = vector.broadcast %265 : vector<1x32xf32> to vector<8x32xf32>
    %267 = arith.addf %264, %266 : vector<8x32xf32>
    %c184 = arith.constant 184 : index
    %c0_75 = arith.constant 0 : index
    %268 = vector.load %arg3[%c184, %c0_75] : memref<856x128xf32, #tpu.memory_space<vmem>>, vector<32x64xf32>
    %cst_76 = arith.constant dense<0.000000e+00> : vector<8x64xf32>
    %269 = tpu.matmul %267, %268, %cst_76 {dimension_numbers = #tpu.dot_dimension_numbers<[1], [0], [0], [1], [0, 0, 1, 1], [], []>} : vector<8x32xf32>, vector<32x64xf32>, vector<8x64xf32> -> vector<8x64xf32>
    %c216 = arith.constant 216 : index
    %c0_77 = arith.constant 0 : index
    %270 = vector.load %arg3[%c216, %c0_77] : memref<856x128xf32, #tpu.memory_space<vmem>>, vector<1x64xf32>
    %271 = vector.broadcast %270 : vector<1x64xf32> to vector<8x64xf32>
    %272 = arith.addf %269, %271 : vector<8x64xf32>
    %273 = arith.mulf %272, %272 : vector<8x64xf32>
    %274 = arith.mulf %272, %273 : vector<8x64xf32>
    %cst_78 = arith.constant 4.471500e-02 : f32
    %275 = vector.broadcast %cst_78 : f32 to vector<8x64xf32>
    %276 = arith.mulf %275, %274 : vector<8x64xf32>
    %277 = arith.addf %272, %276 : vector<8x64xf32>
    %cst_79 = arith.constant 0.797884583 : f32
    %278 = vector.broadcast %cst_79 : f32 to vector<8x64xf32>
    %279 = arith.mulf %278, %277 : vector<8x64xf32>
    %280 = math.tanh %279 : vector<8x64xf32>
    %cst_80 = arith.constant 1.000000e+00 : f32
    %281 = vector.broadcast %cst_80 : f32 to vector<8x64xf32>
    %282 = arith.addf %281, %280 : vector<8x64xf32>
    %cst_81 = arith.constant 5.000000e-01 : f32
    %283 = vector.broadcast %cst_81 : f32 to vector<8x64xf32>
    %284 = arith.mulf %283, %282 : vector<8x64xf32>
    %285 = arith.mulf %272, %284 : vector<8x64xf32>
    %c224 = arith.constant 224 : index
    %c0_82 = arith.constant 0 : index
    %286 = vector.load %arg3[%c224, %c0_82] : memref<856x128xf32, #tpu.memory_space<vmem>>, vector<64x32xf32>
    %cst_83 = arith.constant dense<0.000000e+00> : vector<8x32xf32>
    %287 = tpu.matmul %285, %286, %cst_83 {dimension_numbers = #tpu.dot_dimension_numbers<[1], [0], [0], [1], [0, 0, 1, 1], [], []>} : vector<8x64xf32>, vector<64x32xf32>, vector<8x32xf32> -> vector<8x32xf32>
    %c288 = arith.constant 288 : index
    %c0_84 = arith.constant 0 : index
    %288 = vector.load %arg3[%c288, %c0_84] : memref<856x128xf32, #tpu.memory_space<vmem>>, vector<1x32xf32>
    %289 = vector.broadcast %288 : vector<1x32xf32> to vector<8x32xf32>
    %290 = arith.addf %287, %289 : vector<8x32xf32>
    %291 = arith.addf %243, %290 : vector<8x32xf32>
    %cst_85 = arith.constant dense<0.000000e+00> : vector<8xf32>
    %292 = vector.multi_reduction <add>, %291, %cst_85 [1] : vector<8x32xf32> to vector<8xf32>
    %293 = vector.shape_cast %292 : vector<8xf32> to vector<8x1xf32>
    %cst_86 = arith.constant 3.200000e+01 : f32
    %294 = vector.broadcast %cst_86 : f32 to vector<8x1xf32>
    %295 = arith.divf %293, %294 : vector<8x1xf32>
    %296 = vector.broadcast %295 : vector<8x1xf32> to vector<8x32xf32>
    %297 = arith.subf %291, %296 : vector<8x32xf32>
    %298 = arith.mulf %297, %297 : vector<8x32xf32>
    %cst_87 = arith.constant dense<0.000000e+00> : vector<8xf32>
    %299 = vector.multi_reduction <add>, %298, %cst_87 [1] : vector<8x32xf32> to vector<8xf32>
    %300 = vector.shape_cast %299 : vector<8xf32> to vector<8x1xf32>
    %cst_88 = arith.constant 3.200000e+01 : f32
    %301 = vector.broadcast %cst_88 : f32 to vector<8x1xf32>
    %302 = arith.divf %300, %301 : vector<8x1xf32>
    %303 = vector.broadcast %295 : vector<8x1xf32> to vector<8x32xf32>
    %304 = arith.subf %291, %303 : vector<8x32xf32>
    %cst_89 = arith.constant 9.99999974E-6 : f32
    %305 = vector.broadcast %cst_89 : f32 to vector<8x1xf32>
    %306 = arith.addf %302, %305 : vector<8x1xf32>
    %307 = math.rsqrt %306 : vector<8x1xf32>
    %308 = vector.broadcast %307 : vector<8x1xf32> to vector<8x32xf32>
    %309 = arith.mulf %304, %308 : vector<8x32xf32>
    %c296 = arith.constant 296 : index
    %c0_90 = arith.constant 0 : index
    %310 = vector.load %arg3[%c296, %c0_90] : memref<856x128xf32, #tpu.memory_space<vmem>>, vector<1x32xf32>
    %311 = vector.broadcast %310 : vector<1x32xf32> to vector<8x32xf32>
    %312 = arith.mulf %309, %311 : vector<8x32xf32>
    %c304 = arith.constant 304 : index
    %c0_91 = arith.constant 0 : index
    %313 = vector.load %arg3[%c304, %c0_91] : memref<856x128xf32, #tpu.memory_space<vmem>>, vector<1x32xf32>
    %314 = vector.broadcast %313 : vector<1x32xf32> to vector<8x32xf32>
    %315 = arith.addf %312, %314 : vector<8x32xf32>
    %c0_92 = arith.constant 0 : index
    %c0_93 = arith.constant 0 : index
    %c0_94 = arith.constant 0 : index
    %316 = vector.load %arg2[%c0_92, %c0_93, %c0_94] : memref<1x8x2xi32, #tpu.memory_space<vmem>>, vector<1x8x2xi32>
    %317 = vector.shape_cast %316 : vector<1x8x2xi32> to vector<8x2xi32>
    %318 = vector.extract_strided_slice %317 {offsets = [0, 0], sizes = [8, 1], strides = [1, 1]} : vector<8x2xi32> to vector<8x1xi32>
    %319 = vector.extract_strided_slice %317 {offsets = [0, 1], sizes = [8, 1], strides = [1, 1]} : vector<8x2xi32> to vector<8x1xi32>
    %320 = tpu.iota {dimensions = array<i32: 1>} : vector<8x64xi32>
    %321 = vector.broadcast %318 : vector<8x1xi32> to vector<8x64xi32>
    %322 = arith.cmpi eq, %320, %321 : vector<8x64xi32>
    %323 = arith.extui %322 : vector<8x64xi1> to vector<8x64xi32>
    %324 = arith.sitofp %323 : vector<8x64xi32> to vector<8x64xf32>
    %c312 = arith.constant 312 : index
    %c0_95 = arith.constant 0 : index
    %325 = vector.load %arg3[%c312, %c0_95] : memref<856x128xf32, #tpu.memory_space<vmem>>, vector<64x32xf32>
    %cst_96 = arith.constant dense<0.000000e+00> : vector<8x32xf32>
    %326 = tpu.matmul %324, %325, %cst_96 {dimension_numbers = #tpu.dot_dimension_numbers<[1], [0], [0], [1], [0, 0, 1, 1], [], []>} : vector<8x64xf32>, vector<64x32xf32>, vector<8x32xf32> -> vector<8x32xf32>
    %c376 = arith.constant 376 : index
    %c0_97 = arith.constant 0 : index
    %327 = vector.load %arg3[%c376, %c0_97] : memref<856x128xf32, #tpu.memory_space<vmem>>, vector<8x32xf32>
    %328 = arith.addf %326, %327 : vector<8x32xf32>
    %329 = tpu.iota {dimensions = array<i32: 0>} : vector<8x8xi32>
    %330 = tpu.iota {dimensions = array<i32: 1>} : vector<8x8xi32>
    %331 = arith.cmpi sle, %330, %329 : vector<8x8xi32>
    %cst_98 = arith.constant 0.000000e+00 : f32
    %cst_99 = arith.constant -1.000000e+09 : f32
    %332 = vector.broadcast %cst_98 : f32 to vector<8x8xf32>
    %333 = vector.broadcast %cst_99 : f32 to vector<8x8xf32>
    %334 = arith.select %331, %332, %333 : vector<8x8xi1>, vector<8x8xf32>
    %cst_100 = arith.constant dense<0.000000e+00> : vector<8xf32>
    %335 = vector.multi_reduction <add>, %328, %cst_100 [1] : vector<8x32xf32> to vector<8xf32>
    %336 = vector.shape_cast %335 : vector<8xf32> to vector<8x1xf32>
    %cst_101 = arith.constant 3.200000e+01 : f32
    %337 = vector.broadcast %cst_101 : f32 to vector<8x1xf32>
    %338 = arith.divf %336, %337 : vector<8x1xf32>
    %339 = vector.broadcast %338 : vector<8x1xf32> to vector<8x32xf32>
    %340 = arith.subf %328, %339 : vector<8x32xf32>
    %341 = arith.mulf %340, %340 : vector<8x32xf32>
    %cst_102 = arith.constant dense<0.000000e+00> : vector<8xf32>
    %342 = vector.multi_reduction <add>, %341, %cst_102 [1] : vector<8x32xf32> to vector<8xf32>
    %343 = vector.shape_cast %342 : vector<8xf32> to vector<8x1xf32>
    %cst_103 = arith.constant 3.200000e+01 : f32
    %344 = vector.broadcast %cst_103 : f32 to vector<8x1xf32>
    %345 = arith.divf %343, %344 : vector<8x1xf32>
    %346 = vector.broadcast %338 : vector<8x1xf32> to vector<8x32xf32>
    %347 = arith.subf %328, %346 : vector<8x32xf32>
    %cst_104 = arith.constant 9.99999974E-6 : f32
    %348 = vector.broadcast %cst_104 : f32 to vector<8x1xf32>
    %349 = arith.addf %345, %348 : vector<8x1xf32>
    %350 = math.rsqrt %349 : vector<8x1xf32>
    %351 = vector.broadcast %350 : vector<8x1xf32> to vector<8x32xf32>
    %352 = arith.mulf %347, %351 : vector<8x32xf32>
    %c384 = arith.constant 384 : index
    %c0_105 = arith.constant 0 : index
    %353 = vector.load %arg3[%c384, %c0_105] : memref<856x128xf32, #tpu.memory_space<vmem>>, vector<1x32xf32>
    %354 = vector.broadcast %353 : vector<1x32xf32> to vector<8x32xf32>
    %355 = arith.mulf %352, %354 : vector<8x32xf32>
    %c392 = arith.constant 392 : index
    %c0_106 = arith.constant 0 : index
    %356 = vector.load %arg3[%c392, %c0_106] : memref<856x128xf32, #tpu.memory_space<vmem>>, vector<1x32xf32>
    %357 = vector.broadcast %356 : vector<1x32xf32> to vector<8x32xf32>
    %358 = arith.addf %355, %357 : vector<8x32xf32>
    %c400 = arith.constant 400 : index
    %c0_107 = arith.constant 0 : index
    %359 = vector.load %arg3[%c400, %c0_107] : memref<856x128xf32, #tpu.memory_space<vmem>>, vector<32x96xf32>
    %cst_108 = arith.constant dense<0.000000e+00> : vector<8x96xf32>
    %360 = tpu.matmul %358, %359, %cst_108 {dimension_numbers = #tpu.dot_dimension_numbers<[1], [0], [0], [1], [0, 0, 1, 1], [], []>} : vector<8x32xf32>, vector<32x96xf32>, vector<8x96xf32> -> vector<8x96xf32>
    %c432 = arith.constant 432 : index
    %c0_109 = arith.constant 0 : index
    %361 = vector.load %arg3[%c432, %c0_109] : memref<856x128xf32, #tpu.memory_space<vmem>>, vector<1x96xf32>
    %362 = vector.broadcast %361 : vector<1x96xf32> to vector<8x96xf32>
    %363 = arith.addf %360, %362 : vector<8x96xf32>
    %364 = vector.extract_strided_slice %363 {offsets = [0, 0], sizes = [8, 32], strides = [1, 1]} : vector<8x96xf32> to vector<8x32xf32>
    %365 = vector.extract_strided_slice %363 {offsets = [0, 32], sizes = [8, 32], strides = [1, 1]} : vector<8x96xf32> to vector<8x32xf32>
    %366 = vector.extract_strided_slice %363 {offsets = [0, 64], sizes = [8, 32], strides = [1, 1]} : vector<8x96xf32> to vector<8x32xf32>
    %cst_110 = arith.constant 0.000000e+00 : f32
    %367 = vector.broadcast %cst_110 : f32 to vector<8x32xf32>
    %368 = vector.broadcast %7 : vector<1x32xf32> to vector<8x32xf32>
    %369 = arith.mulf %364, %368 : vector<8x32xf32>
    %cst_111 = arith.constant dense<0.000000e+00> : vector<8x8xf32>
    %370 = tpu.matmul %369, %365, %cst_111 {dimension_numbers = #tpu.dot_dimension_numbers<[1], [1], [0], [0], [0, 0, 1, 0], [], []>} : vector<8x32xf32>, vector<8x32xf32>, vector<8x8xf32> -> vector<8x8xf32>
    %371 = arith.addf %370, %334 : vector<8x8xf32>
    %cst_112 = arith.constant dense<0xFF800000> : vector<8xf32>
    %372 = vector.multi_reduction <maximumf>, %371, %cst_112 [1] : vector<8x8xf32> to vector<8xf32>
    %373 = vector.shape_cast %372 : vector<8xf32> to vector<8x1xf32>
    %374 = vector.broadcast %373 : vector<8x1xf32> to vector<8x8xf32>
    %375 = arith.subf %371, %374 : vector<8x8xf32>
    %376 = math.exp %375 : vector<8x8xf32>
    %cst_113 = arith.constant dense<0.000000e+00> : vector<8xf32>
    %377 = vector.multi_reduction <add>, %376, %cst_113 [1] : vector<8x8xf32> to vector<8xf32>
    %378 = vector.shape_cast %377 : vector<8xf32> to vector<8x1xf32>
    %379 = tpu.reciprocal %378 {approx = true} : vector<8x1xf32> -> vector<8x1xf32>
    %380 = vector.broadcast %379 : vector<8x1xf32> to vector<8x8xf32>
    %381 = arith.mulf %376, %380 : vector<8x8xf32>
    %382 = vector.broadcast %7 : vector<1x32xf32> to vector<8x32xf32>
    %383 = arith.mulf %366, %382 : vector<8x32xf32>
    %cst_114 = arith.constant dense<0.000000e+00> : vector<8x32xf32>
    %384 = tpu.matmul %381, %383, %cst_114 {dimension_numbers = #tpu.dot_dimension_numbers<[1], [0], [0], [1], [0, 0, 1, 1], [], []>} : vector<8x8xf32>, vector<8x32xf32>, vector<8x32xf32> -> vector<8x32xf32>
    %385 = arith.addf %367, %384 : vector<8x32xf32>
    %386 = vector.broadcast %14 : vector<1x32xf32> to vector<8x32xf32>
    %387 = arith.mulf %364, %386 : vector<8x32xf32>
    %cst_115 = arith.constant dense<0.000000e+00> : vector<8x8xf32>
    %388 = tpu.matmul %387, %365, %cst_115 {dimension_numbers = #tpu.dot_dimension_numbers<[1], [1], [0], [0], [0, 0, 1, 0], [], []>} : vector<8x32xf32>, vector<8x32xf32>, vector<8x8xf32> -> vector<8x8xf32>
    %389 = arith.addf %388, %334 : vector<8x8xf32>
    %cst_116 = arith.constant dense<0xFF800000> : vector<8xf32>
    %390 = vector.multi_reduction <maximumf>, %389, %cst_116 [1] : vector<8x8xf32> to vector<8xf32>
    %391 = vector.shape_cast %390 : vector<8xf32> to vector<8x1xf32>
    %392 = vector.broadcast %391 : vector<8x1xf32> to vector<8x8xf32>
    %393 = arith.subf %389, %392 : vector<8x8xf32>
    %394 = math.exp %393 : vector<8x8xf32>
    %cst_117 = arith.constant dense<0.000000e+00> : vector<8xf32>
    %395 = vector.multi_reduction <add>, %394, %cst_117 [1] : vector<8x8xf32> to vector<8xf32>
    %396 = vector.shape_cast %395 : vector<8xf32> to vector<8x1xf32>
    %397 = tpu.reciprocal %396 {approx = true} : vector<8x1xf32> -> vector<8x1xf32>
    %398 = vector.broadcast %397 : vector<8x1xf32> to vector<8x8xf32>
    %399 = arith.mulf %394, %398 : vector<8x8xf32>
    %400 = vector.broadcast %14 : vector<1x32xf32> to vector<8x32xf32>
    %401 = arith.mulf %366, %400 : vector<8x32xf32>
    %cst_118 = arith.constant dense<0.000000e+00> : vector<8x32xf32>
    %402 = tpu.matmul %399, %401, %cst_118 {dimension_numbers = #tpu.dot_dimension_numbers<[1], [0], [0], [1], [0, 0, 1, 1], [], []>} : vector<8x8xf32>, vector<8x32xf32>, vector<8x32xf32> -> vector<8x32xf32>
    %403 = arith.addf %385, %402 : vector<8x32xf32>
    %404 = vector.broadcast %21 : vector<1x32xf32> to vector<8x32xf32>
    %405 = arith.mulf %364, %404 : vector<8x32xf32>
    %cst_119 = arith.constant dense<0.000000e+00> : vector<8x8xf32>
    %406 = tpu.matmul %405, %365, %cst_119 {dimension_numbers = #tpu.dot_dimension_numbers<[1], [1], [0], [0], [0, 0, 1, 0], [], []>} : vector<8x32xf32>, vector<8x32xf32>, vector<8x8xf32> -> vector<8x8xf32>
    %407 = arith.addf %406, %334 : vector<8x8xf32>
    %cst_120 = arith.constant dense<0xFF800000> : vector<8xf32>
    %408 = vector.multi_reduction <maximumf>, %407, %cst_120 [1] : vector<8x8xf32> to vector<8xf32>
    %409 = vector.shape_cast %408 : vector<8xf32> to vector<8x1xf32>
    %410 = vector.broadcast %409 : vector<8x1xf32> to vector<8x8xf32>
    %411 = arith.subf %407, %410 : vector<8x8xf32>
    %412 = math.exp %411 : vector<8x8xf32>
    %cst_121 = arith.constant dense<0.000000e+00> : vector<8xf32>
    %413 = vector.multi_reduction <add>, %412, %cst_121 [1] : vector<8x8xf32> to vector<8xf32>
    %414 = vector.shape_cast %413 : vector<8xf32> to vector<8x1xf32>
    %415 = tpu.reciprocal %414 {approx = true} : vector<8x1xf32> -> vector<8x1xf32>
    %416 = vector.broadcast %415 : vector<8x1xf32> to vector<8x8xf32>
    %417 = arith.mulf %412, %416 : vector<8x8xf32>
    %418 = vector.broadcast %21 : vector<1x32xf32> to vector<8x32xf32>
    %419 = arith.mulf %366, %418 : vector<8x32xf32>
    %cst_122 = arith.constant dense<0.000000e+00> : vector<8x32xf32>
    %420 = tpu.matmul %417, %419, %cst_122 {dimension_numbers = #tpu.dot_dimension_numbers<[1], [0], [0], [1], [0, 0, 1, 1], [], []>} : vector<8x8xf32>, vector<8x32xf32>, vector<8x32xf32> -> vector<8x32xf32>
    %421 = arith.addf %403, %420 : vector<8x32xf32>
    %422 = vector.broadcast %28 : vector<1x32xf32> to vector<8x32xf32>
    %423 = arith.mulf %364, %422 : vector<8x32xf32>
    %cst_123 = arith.constant dense<0.000000e+00> : vector<8x8xf32>
    %424 = tpu.matmul %423, %365, %cst_123 {dimension_numbers = #tpu.dot_dimension_numbers<[1], [1], [0], [0], [0, 0, 1, 0], [], []>} : vector<8x32xf32>, vector<8x32xf32>, vector<8x8xf32> -> vector<8x8xf32>
    %425 = arith.addf %424, %334 : vector<8x8xf32>
    %cst_124 = arith.constant dense<0xFF800000> : vector<8xf32>
    %426 = vector.multi_reduction <maximumf>, %425, %cst_124 [1] : vector<8x8xf32> to vector<8xf32>
    %427 = vector.shape_cast %426 : vector<8xf32> to vector<8x1xf32>
    %428 = vector.broadcast %427 : vector<8x1xf32> to vector<8x8xf32>
    %429 = arith.subf %425, %428 : vector<8x8xf32>
    %430 = math.exp %429 : vector<8x8xf32>
    %cst_125 = arith.constant dense<0.000000e+00> : vector<8xf32>
    %431 = vector.multi_reduction <add>, %430, %cst_125 [1] : vector<8x8xf32> to vector<8xf32>
    %432 = vector.shape_cast %431 : vector<8xf32> to vector<8x1xf32>
    %433 = tpu.reciprocal %432 {approx = true} : vector<8x1xf32> -> vector<8x1xf32>
    %434 = vector.broadcast %433 : vector<8x1xf32> to vector<8x8xf32>
    %435 = arith.mulf %430, %434 : vector<8x8xf32>
    %436 = vector.broadcast %28 : vector<1x32xf32> to vector<8x32xf32>
    %437 = arith.mulf %366, %436 : vector<8x32xf32>
    %cst_126 = arith.constant dense<0.000000e+00> : vector<8x32xf32>
    %438 = tpu.matmul %435, %437, %cst_126 {dimension_numbers = #tpu.dot_dimension_numbers<[1], [0], [0], [1], [0, 0, 1, 1], [], []>} : vector<8x8xf32>, vector<8x32xf32>, vector<8x32xf32> -> vector<8x32xf32>
    %439 = arith.addf %421, %438 : vector<8x32xf32>
    %c440 = arith.constant 440 : index
    %c0_127 = arith.constant 0 : index
    %440 = vector.load %arg3[%c440, %c0_127] : memref<856x128xf32, #tpu.memory_space<vmem>>, vector<32x32xf32>
    %cst_128 = arith.constant dense<0.000000e+00> : vector<8x32xf32>
    %441 = tpu.matmul %439, %440, %cst_128 {dimension_numbers = #tpu.dot_dimension_numbers<[1], [0], [0], [1], [0, 0, 1, 1], [], []>} : vector<8x32xf32>, vector<32x32xf32>, vector<8x32xf32> -> vector<8x32xf32>
    %c472 = arith.constant 472 : index
    %c0_129 = arith.constant 0 : index
    %442 = vector.load %arg3[%c472, %c0_129] : memref<856x128xf32, #tpu.memory_space<vmem>>, vector<1x32xf32>
    %443 = vector.broadcast %442 : vector<1x32xf32> to vector<8x32xf32>
    %444 = arith.addf %441, %443 : vector<8x32xf32>
    %445 = arith.addf %328, %444 : vector<8x32xf32>
    %cst_130 = arith.constant dense<0.000000e+00> : vector<8xf32>
    %446 = vector.multi_reduction <add>, %445, %cst_130 [1] : vector<8x32xf32> to vector<8xf32>
    %447 = vector.shape_cast %446 : vector<8xf32> to vector<8x1xf32>
    %cst_131 = arith.constant 3.200000e+01 : f32
    %448 = vector.broadcast %cst_131 : f32 to vector<8x1xf32>
    %449 = arith.divf %447, %448 : vector<8x1xf32>
    %450 = vector.broadcast %449 : vector<8x1xf32> to vector<8x32xf32>
    %451 = arith.subf %445, %450 : vector<8x32xf32>
    %452 = arith.mulf %451, %451 : vector<8x32xf32>
    %cst_132 = arith.constant dense<0.000000e+00> : vector<8xf32>
    %453 = vector.multi_reduction <add>, %452, %cst_132 [1] : vector<8x32xf32> to vector<8xf32>
    %454 = vector.shape_cast %453 : vector<8xf32> to vector<8x1xf32>
    %cst_133 = arith.constant 3.200000e+01 : f32
    %455 = vector.broadcast %cst_133 : f32 to vector<8x1xf32>
    %456 = arith.divf %454, %455 : vector<8x1xf32>
    %457 = vector.broadcast %449 : vector<8x1xf32> to vector<8x32xf32>
    %458 = arith.subf %445, %457 : vector<8x32xf32>
    %cst_134 = arith.constant 9.99999974E-6 : f32
    %459 = vector.broadcast %cst_134 : f32 to vector<8x1xf32>
    %460 = arith.addf %456, %459 : vector<8x1xf32>
    %461 = math.rsqrt %460 : vector<8x1xf32>
    %462 = vector.broadcast %461 : vector<8x1xf32> to vector<8x32xf32>
    %463 = arith.mulf %458, %462 : vector<8x32xf32>
    %c480 = arith.constant 480 : index
    %c0_135 = arith.constant 0 : index
    %464 = vector.load %arg3[%c480, %c0_135] : memref<856x128xf32, #tpu.memory_space<vmem>>, vector<1x32xf32>
    %465 = vector.broadcast %464 : vector<1x32xf32> to vector<8x32xf32>
    %466 = arith.mulf %463, %465 : vector<8x32xf32>
    %c488 = arith.constant 488 : index
    %c0_136 = arith.constant 0 : index
    %467 = vector.load %arg3[%c488, %c0_136] : memref<856x128xf32, #tpu.memory_space<vmem>>, vector<1x32xf32>
    %468 = vector.broadcast %467 : vector<1x32xf32> to vector<8x32xf32>
    %469 = arith.addf %466, %468 : vector<8x32xf32>
    %c496 = arith.constant 496 : index
    %c0_137 = arith.constant 0 : index
    %470 = vector.load %arg3[%c496, %c0_137] : memref<856x128xf32, #tpu.memory_space<vmem>>, vector<32x32xf32>
    %cst_138 = arith.constant dense<0.000000e+00> : vector<8x32xf32>
    %471 = tpu.matmul %469, %470, %cst_138 {dimension_numbers = #tpu.dot_dimension_numbers<[1], [0], [0], [1], [0, 0, 1, 1], [], []>} : vector<8x32xf32>, vector<32x32xf32>, vector<8x32xf32> -> vector<8x32xf32>
    %c528 = arith.constant 528 : index
    %c0_139 = arith.constant 0 : index
    %472 = vector.load %arg3[%c528, %c0_139] : memref<856x128xf32, #tpu.memory_space<vmem>>, vector<1x32xf32>
    %473 = vector.broadcast %472 : vector<1x32xf32> to vector<8x32xf32>
    %474 = arith.addf %471, %473 : vector<8x32xf32>
    %c536 = arith.constant 536 : index
    %c0_140 = arith.constant 0 : index
    %475 = vector.load %arg3[%c536, %c0_140] : memref<856x128xf32, #tpu.memory_space<vmem>>, vector<32x64xf32>
    %cst_141 = arith.constant dense<0.000000e+00> : vector<8x64xf32>
    %476 = tpu.matmul %315, %475, %cst_141 {dimension_numbers = #tpu.dot_dimension_numbers<[1], [0], [0], [1], [0, 0, 1, 1], [], []>} : vector<8x32xf32>, vector<32x64xf32>, vector<8x64xf32> -> vector<8x64xf32>
    %c568 = arith.constant 568 : index
    %c0_142 = arith.constant 0 : index
    %477 = vector.load %arg3[%c568, %c0_142] : memref<856x128xf32, #tpu.memory_space<vmem>>, vector<1x64xf32>
    %478 = vector.broadcast %477 : vector<1x64xf32> to vector<8x64xf32>
    %479 = arith.addf %476, %478 : vector<8x64xf32>
    %480 = vector.extract_strided_slice %479 {offsets = [0, 0], sizes = [8, 32], strides = [1, 1]} : vector<8x64xf32> to vector<8x32xf32>
    %481 = vector.extract_strided_slice %479 {offsets = [0, 32], sizes = [8, 32], strides = [1, 1]} : vector<8x64xf32> to vector<8x32xf32>
    %cst_143 = arith.constant 0.000000e+00 : f32
    %482 = vector.broadcast %cst_143 : f32 to vector<8x32xf32>
    %483 = vector.broadcast %7 : vector<1x32xf32> to vector<8x32xf32>
    %484 = arith.mulf %474, %483 : vector<8x32xf32>
    %cst_144 = arith.constant dense<0.000000e+00> : vector<8x8xf32>
    %485 = tpu.matmul %484, %480, %cst_144 {dimension_numbers = #tpu.dot_dimension_numbers<[1], [1], [0], [0], [0, 0, 1, 0], [], []>} : vector<8x32xf32>, vector<8x32xf32>, vector<8x8xf32> -> vector<8x8xf32>
    %cst_145 = arith.constant dense<0xFF800000> : vector<8xf32>
    %486 = vector.multi_reduction <maximumf>, %485, %cst_145 [1] : vector<8x8xf32> to vector<8xf32>
    %487 = vector.shape_cast %486 : vector<8xf32> to vector<8x1xf32>
    %488 = vector.broadcast %487 : vector<8x1xf32> to vector<8x8xf32>
    %489 = arith.subf %485, %488 : vector<8x8xf32>
    %490 = math.exp %489 : vector<8x8xf32>
    %cst_146 = arith.constant dense<0.000000e+00> : vector<8xf32>
    %491 = vector.multi_reduction <add>, %490, %cst_146 [1] : vector<8x8xf32> to vector<8xf32>
    %492 = vector.shape_cast %491 : vector<8xf32> to vector<8x1xf32>
    %493 = tpu.reciprocal %492 {approx = true} : vector<8x1xf32> -> vector<8x1xf32>
    %494 = vector.broadcast %493 : vector<8x1xf32> to vector<8x8xf32>
    %495 = arith.mulf %490, %494 : vector<8x8xf32>
    %496 = vector.broadcast %7 : vector<1x32xf32> to vector<8x32xf32>
    %497 = arith.mulf %481, %496 : vector<8x32xf32>
    %cst_147 = arith.constant dense<0.000000e+00> : vector<8x32xf32>
    %498 = tpu.matmul %495, %497, %cst_147 {dimension_numbers = #tpu.dot_dimension_numbers<[1], [0], [0], [1], [0, 0, 1, 1], [], []>} : vector<8x8xf32>, vector<8x32xf32>, vector<8x32xf32> -> vector<8x32xf32>
    %499 = arith.addf %482, %498 : vector<8x32xf32>
    %500 = vector.broadcast %14 : vector<1x32xf32> to vector<8x32xf32>
    %501 = arith.mulf %474, %500 : vector<8x32xf32>
    %cst_148 = arith.constant dense<0.000000e+00> : vector<8x8xf32>
    %502 = tpu.matmul %501, %480, %cst_148 {dimension_numbers = #tpu.dot_dimension_numbers<[1], [1], [0], [0], [0, 0, 1, 0], [], []>} : vector<8x32xf32>, vector<8x32xf32>, vector<8x8xf32> -> vector<8x8xf32>
    %cst_149 = arith.constant dense<0xFF800000> : vector<8xf32>
    %503 = vector.multi_reduction <maximumf>, %502, %cst_149 [1] : vector<8x8xf32> to vector<8xf32>
    %504 = vector.shape_cast %503 : vector<8xf32> to vector<8x1xf32>
    %505 = vector.broadcast %504 : vector<8x1xf32> to vector<8x8xf32>
    %506 = arith.subf %502, %505 : vector<8x8xf32>
    %507 = math.exp %506 : vector<8x8xf32>
    %cst_150 = arith.constant dense<0.000000e+00> : vector<8xf32>
    %508 = vector.multi_reduction <add>, %507, %cst_150 [1] : vector<8x8xf32> to vector<8xf32>
    %509 = vector.shape_cast %508 : vector<8xf32> to vector<8x1xf32>
    %510 = tpu.reciprocal %509 {approx = true} : vector<8x1xf32> -> vector<8x1xf32>
    %511 = vector.broadcast %510 : vector<8x1xf32> to vector<8x8xf32>
    %512 = arith.mulf %507, %511 : vector<8x8xf32>
    %513 = vector.broadcast %14 : vector<1x32xf32> to vector<8x32xf32>
    %514 = arith.mulf %481, %513 : vector<8x32xf32>
    %cst_151 = arith.constant dense<0.000000e+00> : vector<8x32xf32>
    %515 = tpu.matmul %512, %514, %cst_151 {dimension_numbers = #tpu.dot_dimension_numbers<[1], [0], [0], [1], [0, 0, 1, 1], [], []>} : vector<8x8xf32>, vector<8x32xf32>, vector<8x32xf32> -> vector<8x32xf32>
    %516 = arith.addf %499, %515 : vector<8x32xf32>
    %517 = vector.broadcast %21 : vector<1x32xf32> to vector<8x32xf32>
    %518 = arith.mulf %474, %517 : vector<8x32xf32>
    %cst_152 = arith.constant dense<0.000000e+00> : vector<8x8xf32>
    %519 = tpu.matmul %518, %480, %cst_152 {dimension_numbers = #tpu.dot_dimension_numbers<[1], [1], [0], [0], [0, 0, 1, 0], [], []>} : vector<8x32xf32>, vector<8x32xf32>, vector<8x8xf32> -> vector<8x8xf32>
    %cst_153 = arith.constant dense<0xFF800000> : vector<8xf32>
    %520 = vector.multi_reduction <maximumf>, %519, %cst_153 [1] : vector<8x8xf32> to vector<8xf32>
    %521 = vector.shape_cast %520 : vector<8xf32> to vector<8x1xf32>
    %522 = vector.broadcast %521 : vector<8x1xf32> to vector<8x8xf32>
    %523 = arith.subf %519, %522 : vector<8x8xf32>
    %524 = math.exp %523 : vector<8x8xf32>
    %cst_154 = arith.constant dense<0.000000e+00> : vector<8xf32>
    %525 = vector.multi_reduction <add>, %524, %cst_154 [1] : vector<8x8xf32> to vector<8xf32>
    %526 = vector.shape_cast %525 : vector<8xf32> to vector<8x1xf32>
    %527 = tpu.reciprocal %526 {approx = true} : vector<8x1xf32> -> vector<8x1xf32>
    %528 = vector.broadcast %527 : vector<8x1xf32> to vector<8x8xf32>
    %529 = arith.mulf %524, %528 : vector<8x8xf32>
    %530 = vector.broadcast %21 : vector<1x32xf32> to vector<8x32xf32>
    %531 = arith.mulf %481, %530 : vector<8x32xf32>
    %cst_155 = arith.constant dense<0.000000e+00> : vector<8x32xf32>
    %532 = tpu.matmul %529, %531, %cst_155 {dimension_numbers = #tpu.dot_dimension_numbers<[1], [0], [0], [1], [0, 0, 1, 1], [], []>} : vector<8x8xf32>, vector<8x32xf32>, vector<8x32xf32> -> vector<8x32xf32>
    %533 = arith.addf %516, %532 : vector<8x32xf32>
    %534 = vector.broadcast %28 : vector<1x32xf32> to vector<8x32xf32>
    %535 = arith.mulf %474, %534 : vector<8x32xf32>
    %cst_156 = arith.constant dense<0.000000e+00> : vector<8x8xf32>
    %536 = tpu.matmul %535, %480, %cst_156 {dimension_numbers = #tpu.dot_dimension_numbers<[1], [1], [0], [0], [0, 0, 1, 0], [], []>} : vector<8x32xf32>, vector<8x32xf32>, vector<8x8xf32> -> vector<8x8xf32>
    %cst_157 = arith.constant dense<0xFF800000> : vector<8xf32>
    %537 = vector.multi_reduction <maximumf>, %536, %cst_157 [1] : vector<8x8xf32> to vector<8xf32>
    %538 = vector.shape_cast %537 : vector<8xf32> to vector<8x1xf32>
    %539 = vector.broadcast %538 : vector<8x1xf32> to vector<8x8xf32>
    %540 = arith.subf %536, %539 : vector<8x8xf32>
    %541 = math.exp %540 : vector<8x8xf32>
    %cst_158 = arith.constant dense<0.000000e+00> : vector<8xf32>
    %542 = vector.multi_reduction <add>, %541, %cst_158 [1] : vector<8x8xf32> to vector<8xf32>
    %543 = vector.shape_cast %542 : vector<8xf32> to vector<8x1xf32>
    %544 = tpu.reciprocal %543 {approx = true} : vector<8x1xf32> -> vector<8x1xf32>
    %545 = vector.broadcast %544 : vector<8x1xf32> to vector<8x8xf32>
    %546 = arith.mulf %541, %545 : vector<8x8xf32>
    %547 = vector.broadcast %28 : vector<1x32xf32> to vector<8x32xf32>
    %548 = arith.mulf %481, %547 : vector<8x32xf32>
    %cst_159 = arith.constant dense<0.000000e+00> : vector<8x32xf32>
    %549 = tpu.matmul %546, %548, %cst_159 {dimension_numbers = #tpu.dot_dimension_numbers<[1], [0], [0], [1], [0, 0, 1, 1], [], []>} : vector<8x8xf32>, vector<8x32xf32>, vector<8x32xf32> -> vector<8x32xf32>
    %550 = arith.addf %533, %549 : vector<8x32xf32>
    %c576 = arith.constant 576 : index
    %c0_160 = arith.constant 0 : index
    %551 = vector.load %arg3[%c576, %c0_160] : memref<856x128xf32, #tpu.memory_space<vmem>>, vector<32x32xf32>
    %cst_161 = arith.constant dense<0.000000e+00> : vector<8x32xf32>
    %552 = tpu.matmul %550, %551, %cst_161 {dimension_numbers = #tpu.dot_dimension_numbers<[1], [0], [0], [1], [0, 0, 1, 1], [], []>} : vector<8x32xf32>, vector<32x32xf32>, vector<8x32xf32> -> vector<8x32xf32>
    %c608 = arith.constant 608 : index
    %c0_162 = arith.constant 0 : index
    %553 = vector.load %arg3[%c608, %c0_162] : memref<856x128xf32, #tpu.memory_space<vmem>>, vector<1x32xf32>
    %554 = vector.broadcast %553 : vector<1x32xf32> to vector<8x32xf32>
    %555 = arith.addf %552, %554 : vector<8x32xf32>
    %556 = arith.addf %445, %555 : vector<8x32xf32>
    %cst_163 = arith.constant dense<0.000000e+00> : vector<8xf32>
    %557 = vector.multi_reduction <add>, %556, %cst_163 [1] : vector<8x32xf32> to vector<8xf32>
    %558 = vector.shape_cast %557 : vector<8xf32> to vector<8x1xf32>
    %cst_164 = arith.constant 3.200000e+01 : f32
    %559 = vector.broadcast %cst_164 : f32 to vector<8x1xf32>
    %560 = arith.divf %558, %559 : vector<8x1xf32>
    %561 = vector.broadcast %560 : vector<8x1xf32> to vector<8x32xf32>
    %562 = arith.subf %556, %561 : vector<8x32xf32>
    %563 = arith.mulf %562, %562 : vector<8x32xf32>
    %cst_165 = arith.constant dense<0.000000e+00> : vector<8xf32>
    %564 = vector.multi_reduction <add>, %563, %cst_165 [1] : vector<8x32xf32> to vector<8xf32>
    %565 = vector.shape_cast %564 : vector<8xf32> to vector<8x1xf32>
    %cst_166 = arith.constant 3.200000e+01 : f32
    %566 = vector.broadcast %cst_166 : f32 to vector<8x1xf32>
    %567 = arith.divf %565, %566 : vector<8x1xf32>
    %568 = vector.broadcast %560 : vector<8x1xf32> to vector<8x32xf32>
    %569 = arith.subf %556, %568 : vector<8x32xf32>
    %cst_167 = arith.constant 9.99999974E-6 : f32
    %570 = vector.broadcast %cst_167 : f32 to vector<8x1xf32>
    %571 = arith.addf %567, %570 : vector<8x1xf32>
    %572 = math.rsqrt %571 : vector<8x1xf32>
    %573 = vector.broadcast %572 : vector<8x1xf32> to vector<8x32xf32>
    %574 = arith.mulf %569, %573 : vector<8x32xf32>
    %c616 = arith.constant 616 : index
    %c0_168 = arith.constant 0 : index
    %575 = vector.load %arg3[%c616, %c0_168] : memref<856x128xf32, #tpu.memory_space<vmem>>, vector<1x32xf32>
    %576 = vector.broadcast %575 : vector<1x32xf32> to vector<8x32xf32>
    %577 = arith.mulf %574, %576 : vector<8x32xf32>
    %c624 = arith.constant 624 : index
    %c0_169 = arith.constant 0 : index
    %578 = vector.load %arg3[%c624, %c0_169] : memref<856x128xf32, #tpu.memory_space<vmem>>, vector<1x32xf32>
    %579 = vector.broadcast %578 : vector<1x32xf32> to vector<8x32xf32>
    %580 = arith.addf %577, %579 : vector<8x32xf32>
    %c632 = arith.constant 632 : index
    %c0_170 = arith.constant 0 : index
    %581 = vector.load %arg3[%c632, %c0_170] : memref<856x128xf32, #tpu.memory_space<vmem>>, vector<32x64xf32>
    %cst_171 = arith.constant dense<0.000000e+00> : vector<8x64xf32>
    %582 = tpu.matmul %580, %581, %cst_171 {dimension_numbers = #tpu.dot_dimension_numbers<[1], [0], [0], [1], [0, 0, 1, 1], [], []>} : vector<8x32xf32>, vector<32x64xf32>, vector<8x64xf32> -> vector<8x64xf32>
    %c664 = arith.constant 664 : index
    %c0_172 = arith.constant 0 : index
    %583 = vector.load %arg3[%c664, %c0_172] : memref<856x128xf32, #tpu.memory_space<vmem>>, vector<1x64xf32>
    %584 = vector.broadcast %583 : vector<1x64xf32> to vector<8x64xf32>
    %585 = arith.addf %582, %584 : vector<8x64xf32>
    %586 = arith.mulf %585, %585 : vector<8x64xf32>
    %587 = arith.mulf %585, %586 : vector<8x64xf32>
    %cst_173 = arith.constant 4.471500e-02 : f32
    %588 = vector.broadcast %cst_173 : f32 to vector<8x64xf32>
    %589 = arith.mulf %588, %587 : vector<8x64xf32>
    %590 = arith.addf %585, %589 : vector<8x64xf32>
    %cst_174 = arith.constant 0.797884583 : f32
    %591 = vector.broadcast %cst_174 : f32 to vector<8x64xf32>
    %592 = arith.mulf %591, %590 : vector<8x64xf32>
    %593 = math.tanh %592 : vector<8x64xf32>
    %cst_175 = arith.constant 1.000000e+00 : f32
    %594 = vector.broadcast %cst_175 : f32 to vector<8x64xf32>
    %595 = arith.addf %594, %593 : vector<8x64xf32>
    %cst_176 = arith.constant 5.000000e-01 : f32
    %596 = vector.broadcast %cst_176 : f32 to vector<8x64xf32>
    %597 = arith.mulf %596, %595 : vector<8x64xf32>
    %598 = arith.mulf %585, %597 : vector<8x64xf32>
    %c672 = arith.constant 672 : index
    %c0_177 = arith.constant 0 : index
    %599 = vector.load %arg3[%c672, %c0_177] : memref<856x128xf32, #tpu.memory_space<vmem>>, vector<64x32xf32>
    %cst_178 = arith.constant dense<0.000000e+00> : vector<8x32xf32>
    %600 = tpu.matmul %598, %599, %cst_178 {dimension_numbers = #tpu.dot_dimension_numbers<[1], [0], [0], [1], [0, 0, 1, 1], [], []>} : vector<8x64xf32>, vector<64x32xf32>, vector<8x32xf32> -> vector<8x32xf32>
    %c736 = arith.constant 736 : index
    %c0_179 = arith.constant 0 : index
    %601 = vector.load %arg3[%c736, %c0_179] : memref<856x128xf32, #tpu.memory_space<vmem>>, vector<1x32xf32>
    %602 = vector.broadcast %601 : vector<1x32xf32> to vector<8x32xf32>
    %603 = arith.addf %600, %602 : vector<8x32xf32>
    %604 = arith.addf %556, %603 : vector<8x32xf32>
    %cst_180 = arith.constant dense<0.000000e+00> : vector<8xf32>
    %605 = vector.multi_reduction <add>, %604, %cst_180 [1] : vector<8x32xf32> to vector<8xf32>
    %606 = vector.shape_cast %605 : vector<8xf32> to vector<8x1xf32>
    %cst_181 = arith.constant 3.200000e+01 : f32
    %607 = vector.broadcast %cst_181 : f32 to vector<8x1xf32>
    %608 = arith.divf %606, %607 : vector<8x1xf32>
    %609 = vector.broadcast %608 : vector<8x1xf32> to vector<8x32xf32>
    %610 = arith.subf %604, %609 : vector<8x32xf32>
    %611 = arith.mulf %610, %610 : vector<8x32xf32>
    %cst_182 = arith.constant dense<0.000000e+00> : vector<8xf32>
    %612 = vector.multi_reduction <add>, %611, %cst_182 [1] : vector<8x32xf32> to vector<8xf32>
    %613 = vector.shape_cast %612 : vector<8xf32> to vector<8x1xf32>
    %cst_183 = arith.constant 3.200000e+01 : f32
    %614 = vector.broadcast %cst_183 : f32 to vector<8x1xf32>
    %615 = arith.divf %613, %614 : vector<8x1xf32>
    %616 = vector.broadcast %608 : vector<8x1xf32> to vector<8x32xf32>
    %617 = arith.subf %604, %616 : vector<8x32xf32>
    %cst_184 = arith.constant 9.99999974E-6 : f32
    %618 = vector.broadcast %cst_184 : f32 to vector<8x1xf32>
    %619 = arith.addf %615, %618 : vector<8x1xf32>
    %620 = math.rsqrt %619 : vector<8x1xf32>
    %621 = vector.broadcast %620 : vector<8x1xf32> to vector<8x32xf32>
    %622 = arith.mulf %617, %621 : vector<8x32xf32>
    %c744 = arith.constant 744 : index
    %c0_185 = arith.constant 0 : index
    %623 = vector.load %arg3[%c744, %c0_185] : memref<856x128xf32, #tpu.memory_space<vmem>>, vector<1x32xf32>
    %624 = vector.broadcast %623 : vector<1x32xf32> to vector<8x32xf32>
    %625 = arith.mulf %622, %624 : vector<8x32xf32>
    %c752 = arith.constant 752 : index
    %c0_186 = arith.constant 0 : index
    %626 = vector.load %arg3[%c752, %c0_186] : memref<856x128xf32, #tpu.memory_space<vmem>>, vector<1x32xf32>
    %627 = vector.broadcast %626 : vector<1x32xf32> to vector<8x32xf32>
    %628 = arith.addf %625, %627 : vector<8x32xf32>
    %c760 = arith.constant 760 : index
    %c0_187 = arith.constant 0 : index
    %629 = vector.load %arg3[%c760, %c0_187] : memref<856x128xf32, #tpu.memory_space<vmem>>, vector<32x64xf32>
    %cst_188 = arith.constant dense<0.000000e+00> : vector<8x64xf32>
    %630 = tpu.matmul %628, %629, %cst_188 {dimension_numbers = #tpu.dot_dimension_numbers<[1], [0], [0], [1], [0, 0, 1, 1], [], []>} : vector<8x32xf32>, vector<32x64xf32>, vector<8x64xf32> -> vector<8x64xf32>
    %c792 = arith.constant 792 : index
    %c0_189 = arith.constant 0 : index
    %631 = vector.load %arg3[%c792, %c0_189] : memref<856x128xf32, #tpu.memory_space<vmem>>, vector<64x16xf32>
    %cst_190 = arith.constant dense<0.000000e+00> : vector<8x16xf32>
    %632 = tpu.matmul %630, %631, %cst_190 {dimension_numbers = #tpu.dot_dimension_numbers<[1], [0], [0], [1], [0, 0, 1, 1], [], []>} : vector<8x64xf32>, vector<64x16xf32>, vector<8x16xf32> -> vector<8x16xf32>
    %633 = tpu.iota {dimensions = array<i32: 1>} : vector<8x16xi32>
    %cst_191 = arith.constant dense<0xFF800000> : vector<8xf32>
    %634 = vector.multi_reduction <maximumf>, %632, %cst_191 [1] : vector<8x16xf32> to vector<8xf32>
    %635 = vector.shape_cast %634 : vector<8xf32> to vector<8x1xf32>
    %636 = vector.broadcast %635 : vector<8x1xf32> to vector<8x16xf32>
    %637 = arith.cmpf oeq, %632, %636 : vector<8x16xf32>
    %c16_i32_192 = arith.constant 16 : i32
    %638 = vector.broadcast %c16_i32_192 : i32 to vector<8x16xi32>
    %639 = arith.select %637, %633, %638 : vector<8x16xi1>, vector<8x16xi32>
    %cst_193 = arith.constant dense<2147483647> : vector<8xi32>
    %640 = vector.multi_reduction <minsi>, %639, %cst_193 [1] : vector<8x16xi32> to vector<8xi32>
    %641 = vector.shape_cast %640 : vector<8xi32> to vector<8x1xi32>
    %642 = arith.sitofp %641 : vector<8x1xi32> to vector<8x1xf32>
    %c0_i32_194 = arith.constant 0 : i32
    %643 = vector.broadcast %c0_i32_194 : i32 to vector<8x1xi32>
    %644 = arith.cmpi sge, %319, %643 : vector<8x1xi32>
    %645 = arith.extui %644 : vector<8x1xi1> to vector<8x1xi32>
    %646 = arith.sitofp %645 : vector<8x1xi32> to vector<8x1xf32>
    %c0_i32_195 = arith.constant 0 : i32
    %647 = vector.broadcast %c0_i32_195 : i32 to vector<8x1xi32>
    %648 = arith.cmpi sge, %319, %647 : vector<8x1xi32>
    %c0_i32_196 = arith.constant 0 : i32
    %649 = vector.broadcast %c0_i32_196 : i32 to vector<8x1xi32>
    %650 = arith.select %648, %319, %649 : vector<8x1xi1>, vector<8x1xi32>
    %651 = vector.broadcast %635 : vector<8x1xf32> to vector<8x16xf32>
    %652 = arith.subf %632, %651 : vector<8x16xf32>
    %653 = math.exp %652 : vector<8x16xf32>
    %cst_197 = arith.constant dense<0.000000e+00> : vector<8xf32>
    %654 = vector.multi_reduction <add>, %653, %cst_197 [1] : vector<8x16xf32> to vector<8xf32>
    %655 = vector.shape_cast %654 : vector<8xf32> to vector<8x1xf32>
    %656 = math.log %655 : vector<8x1xf32>
    %657 = arith.addf %656, %635 : vector<8x1xf32>
    %658 = vector.broadcast %650 : vector<8x1xi32> to vector<8x16xi32>
    %659 = arith.cmpi eq, %633, %658 : vector<8x16xi32>
    %cst_198 = arith.constant 0.000000e+00 : f32
    %660 = vector.broadcast %cst_198 : f32 to vector<8x16xf32>
    %661 = arith.select %659, %632, %660 : vector<8x16xi1>, vector<8x16xf32>
    %cst_199 = arith.constant dense<0.000000e+00> : vector<8xf32>
    %662 = vector.multi_reduction <add>, %661, %cst_199 [1] : vector<8x16xf32> to vector<8xf32>
    %663 = vector.shape_cast %662 : vector<8xf32> to vector<8x1xf32>
    %664 = arith.subf %657, %663 : vector<8x1xf32>
    %665 = arith.mulf %664, %646 : vector<8x1xf32>
    %666 = tpu.iota {dimensions = array<i32: 0>} : vector<16x128xi32>
    %667 = tpu.iota {dimensions = array<i32: 1>} : vector<16x128xi32>
    %668 = arith.cmpi eq, %667, %666 : vector<16x128xi32>
    %669 = arith.extui %668 : vector<16x128xi1> to vector<16x128xi32>
    %670 = arith.sitofp %669 : vector<16x128xi32> to vector<16x128xf32>
    %671 = tpu.iota {dimensions = array<i32: 1>} : vector<1x128xi32>
    %cst_200 = arith.constant dense<0.000000e+00> : vector<8x128xf32>
    %672 = tpu.matmul %632, %670, %cst_200 {dimension_numbers = #tpu.dot_dimension_numbers<[1], [0], [0], [1], [0, 0, 1, 1], [], []>} : vector<8x16xf32>, vector<16x128xf32>, vector<8x128xf32> -> vector<8x128xf32>
    %c16_i32_201 = arith.constant 16 : i32
    %673 = vector.broadcast %c16_i32_201 : i32 to vector<1x128xi32>
    %674 = arith.cmpi eq, %671, %673 : vector<1x128xi32>
    %675 = arith.extui %674 : vector<1x128xi1> to vector<1x128xi32>
    %676 = arith.sitofp %675 : vector<1x128xi32> to vector<1x128xf32>
    %677 = vector.broadcast %642 : vector<8x1xf32> to vector<8x128xf32>
    %678 = vector.broadcast %676 : vector<1x128xf32> to vector<8x128xf32>
    %679 = arith.mulf %677, %678 : vector<8x128xf32>
    %680 = arith.addf %672, %679 : vector<8x128xf32>
    %c17_i32 = arith.constant 17 : i32
    %681 = vector.broadcast %c17_i32 : i32 to vector<1x128xi32>
    %682 = arith.cmpi eq, %671, %681 : vector<1x128xi32>
    %683 = arith.extui %682 : vector<1x128xi1> to vector<1x128xi32>
    %684 = arith.sitofp %683 : vector<1x128xi32> to vector<1x128xf32>
    %685 = vector.broadcast %665 : vector<8x1xf32> to vector<8x128xf32>
    %686 = vector.broadcast %684 : vector<1x128xf32> to vector<8x128xf32>
    %687 = arith.mulf %685, %686 : vector<8x128xf32>
    %688 = arith.addf %680, %687 : vector<8x128xf32>
    %c18_i32 = arith.constant 18 : i32
    %689 = vector.broadcast %c18_i32 : i32 to vector<1x128xi32>
    %690 = arith.cmpi eq, %671, %689 : vector<1x128xi32>
    %691 = arith.extui %690 : vector<1x128xi1> to vector<1x128xi32>
    %692 = arith.sitofp %691 : vector<1x128xi32> to vector<1x128xf32>
    %693 = vector.broadcast %646 : vector<8x1xf32> to vector<8x128xf32>
    %694 = vector.broadcast %692 : vector<1x128xf32> to vector<8x128xf32>
    %695 = arith.mulf %693, %694 : vector<8x128xf32>
    %696 = arith.addf %688, %695 : vector<8x128xf32>
    %c0_202 = arith.constant 0 : index
    %c0_203 = arith.constant 0 : index
    %c0_204 = arith.constant 0 : index
    %697 = vector.load %arg4[%c0_202, %c0_203, %c0_204] : memref<1x8x128xf32, #tpu.memory_space<vmem>>, vector<1x8x128xf32>
    %698 = vector.shape_cast %697 : vector<1x8x128xf32> to vector<8x128xf32>
    %699 = vector.shape_cast %696 : vector<8x128xf32> to vector<1x8x128xf32>
    tpu.vector_store %arg4[%c0_202, %c0_203, %c0_204], %699 {strides = array<i32>} : memref<1x8x128xf32, #tpu.memory_space<vmem>>, vector<1x8x128xf32>,
    return
  }
  func.func @transform_0(%arg0: i32) -> (i32, i32, i32) {
    %c0_i32 = arith.constant 0 : i32
    %c0_i32_0 = arith.constant 0 : i32
    %c0_i32_1 = arith.constant 0 : i32
    return %arg0, %c0_i32, %c0_i32_0 : i32, i32, i32
  }
  func.func @transform_1(%arg0: i32) -> (i32, i32, i32) {
    %c0_i32 = arith.constant 0 : i32
    %c0_i32_0 = arith.constant 0 : i32
    %c0_i32_1 = arith.constant 0 : i32
    return %arg0, %c0_i32, %c0_i32_0 : i32, i32, i32
  }
  func.func @transform_2(%arg0: i32) -> (i32, i32) {
    %c0_i32 = arith.constant 0 : i32
    %c0_i32_0 = arith.constant 0 : i32
    %c0_i32_1 = arith.constant 0 : i32
    return %c0_i32, %c0_i32_0 : i32, i32
  }
  func.func @transform_3(%arg0: i32) -> (i32, i32, i32) {
    %c0_i32 = arith.constant 0 : i32
    %c0_i32_0 = arith.constant 0 : i32
    %c0_i32_1 = arith.constant 0 : i32
    return %arg0, %c0_i32, %c0_i32_0 : i32, i32, i32
  }
}

</mosaic_0001>

<llo_original>
// kernel: _forward_core.1
$region0: #{_forward_core.1}
  #allocation0 [shape = 'u32[]', space=smem, size = 0x4, offset = 0x4, fixed_abs, tag = 'smem constant byte address 0x4 - core index']
  #allocation1 [shape = 'u32[144,128]{1,0:T(1,128)}', space=vmem, size = 0x12000, scoped, tag = 'internal scratch']
  %s0 = inlined_call_operand.vmem [shape: f32[2,16,16], index: 0, kind: input, shape index: {}]
  %s1 = inlined_call_operand.vmem [shape: s32[2,8,2], index: 1, kind: input, shape index: {}]
  %s2 = inlined_call_operand.hbm [shape: f32[856,128], index: 2, kind: input, shape index: {}]
  %s3 = inlined_call_operand.vmem [shape: f32[2,8,128], index: 3, kind: output, shape index: {}]
  %s4 = sld [smem:[#allocation0]]
  $region49: #{_forward_core.1} parent=0
    _
  %s6 = ssub.s32 1, %s4
  %s7 = scalar_select 0, %s6, %s4
  $region1: #{_forward_core.1} parent=0
    #allocation2 [shape = 'u8[438272]{0}', space=vmem, size = 0x6b000, scoped, tag = 'input window, operand 2, single buffered']
    #allocation3 [shape = 's32[2]{0}', space=sflag, size = 0x8, scoped, tag = 'scoped memory for _forward_core.1']
    %8 = vsyncpa [#allocation3], 0
    loop: start=0, step=1, limit=4
    $region2: #{_forward_core.1} parent=1 // loop_pre_header
      _
    $region3: #{_forward_core.1} parent=1 // loop_header
      %s10 = sphi 0, %s14
      %p11 = scmp.ge.s32.totalorder %s10, 4
      %s20 = sphi 0, %s22
      %s23 = sphi 0, %s20
      %s24 = sphi 0, %s23
      %s40 = sphi 0, %s24
      %s46 = sphi 0, %s48
      %s49 = sphi 0, %s46
      %s50 = sphi 0, %s49
      %s66 = sphi 0, %s50
      %s70 = sphi 0, %s70
      %s72 = sphi 0, %s70
      %s73 = sphi 0, %s72
      %s87 = sphi 0, %s73
      %s93 = sphi 0, %s95
      %s96 = sphi 0, %s93
      %s97 = sphi 0, %s96
      %s113 = sphi 0, %s97
    $region4: #{_forward_core.1} parent=1 // loop_header_branch
      %13 = sbr.rel (%p11) target = $region8
    $region5: #{_forward_core.1} parent=1 // loop_body
      %s15 = ssub.s32 %s10, 1
      %s16 = ssub.s32 %s10, 2
      %s17 = sadd.s32 %s10, 1
      %s18 = ssub.s32 %s10, %s17
      %p19 = scmp.eq.s32.totalorder %s18, 0
      %s21 = sadd.s32 %s20, 1
      %s22 = scalar_select %p19, %s20, %s21
      %p25 = pneg %p19
      %p26 = scmp.eq.s32.totalorder %s10, 1
      %p27 = por %p25, %p26
      %p28 = scmp.ne.s32.totalorder %s20, %s23
      %p29 = scmp.eq.s32.totalorder %s10, 0
      %p30 = por %p28, %p29
      %p31 = scmp.ne.s32.totalorder %s20, %s23
      %p32 = scmp.eq.s32.totalorder %s15, 1
      %p33 = por %p31, %p32
      %p34 = scmp.ne.s32.totalorder %s23, %s24
      %p35 = scmp.eq.s32.totalorder %s15, 0
      %p36 = por %p34, %p35
      %p37 = scmp.ne.s32.totalorder %s23, %s24
      %p38 = scmp.eq.s32.totalorder %s16, 1
      %p39 = por %p37, %p38
      %p41 = scmp.ne.s32.totalorder %s24, %s40
      %p42 = scmp.eq.s32.totalorder %s16, 0
      %p43 = por %p41, %p42
      %s44 = ssub.s32 %s10, %s17
      %p45 = scmp.eq.s32.totalorder %s44, 0
      %s47 = sadd.s32 %s46, 1
      %s48 = scalar_select %p45, %s46, %s47
      %p51 = pneg %p45
      %p52 = scmp.eq.s32.totalorder %s10, 1
      %p53 = por %p51, %p52
      %p54 = scmp.ne.s32.totalorder %s46, %s49
      %p55 = scmp.eq.s32.totalorder %s10, 0
      %p56 = por %p54, %p55
      %p57 = scmp.ne.s32.totalorder %s46, %s49
      %p58 = scmp.eq.s32.totalorder %s15, 1
      %p59 = por %p57, %p58
      %p60 = scmp.ne.s32.totalorder %s49, %s50
      %p61 = scmp.eq.s32.totalorder %s15, 0
      %p62 = por %p60, %p61
      %p63 = scmp.ne.s32.totalorder %s49, %s50
      %p64 = scmp.eq.s32.totalorder %s16, 1
      %p65 = por %p63, %p64
      %p67 = scmp.ne.s32.totalorder %s50, %s66
      %p68 = scmp.eq.s32.totalorder %s16, 0
      %p69 = por %p67, %p68
      %s71 = sadd.s32 %s70, 1
      %p74 = scmp.eq.s32.totalorder %s10, 1
      %p75 = scmp.ne.s32.totalorder %s70, %s72
      %p76 = scmp.eq.s32.totalorder %s10, 0
      %p77 = por %p75, %p76
      %p78 = scmp.ne.s32.totalorder %s70, %s72
      %p79 = scmp.eq.s32.totalorder %s15, 1
      %p80 = por %p78, %p79
      %p81 = scmp.ne.s32.totalorder %s72, %s73
      %p82 = scmp.eq.s32.totalorder %s15, 0
      %p83 = por %p81, %p82
      %p84 = scmp.ne.s32.totalorder %s72, %s73
      %p85 = scmp.eq.s32.totalorder %s16, 1
      %p86 = por %p84, %p85
      %p88 = scmp.ne.s32.totalorder %s73, %s87
      %p89 = scmp.eq.s32.totalorder %s16, 0
      %p90 = por %p88, %p89
      %s91 = ssub.s32 %s10, %s17
      %p92 = scmp.eq.s32.totalorder %s91, 0
      %s94 = sadd.s32 %s93, 1
      %s95 = scalar_select %p92, %s93, %s94
      %p98 = pneg %p92
      %p99 = scmp.eq.s32.totalorder %s10, 1
      %p100 = por %p98, %p99
      %p101 = scmp.ne.s32.totalorder %s93, %s96
      %p102 = scmp.eq.s32.totalorder %s10, 0
      %p103 = por %p101, %p102
      %p104 = scmp.ne.s32.totalorder %s93, %s96
      %p105 = scmp.eq.s32.totalorder %s15, 1
      %p106 = por %p104, %p105
      %p107 = scmp.ne.s32.totalorder %s96, %s97
      %p108 = scmp.eq.s32.totalorder %s15, 0
      %p109 = por %p107, %p108
      %p110 = scmp.ne.s32.totalorder %s96, %s97
      %p111 = scmp.eq.s32.totalorder %s16, 1
      %p112 = por %p110, %p111
      %p114 = scmp.ne.s32.totalorder %s97, %s113
      %p115 = scmp.eq.s32.totalorder %s16, 0
      %p116 = por %p114, %p115
      %p117 = scmp.le.s32.totalorder 1, %s10
      %p118 = scmp.lt.s32.totalorder %s10, 3
      %p119 = pnand %p117, %p118
      %p120 = pneg %p119
      // Predicated region
      $region9: #{_forward_core.1} parent=5 // pred_check
        _
      $region10: #{_forward_core.1} parent=5 // pred_check_branch
        %122 = sbr.rel (%p119) target = $region12
      $region11: #{_forward_core.1} parent=5 // pred_region
        %s123 = ssub.s32 %s10, 1
        // Predicated region
        $region13: #{_forward_core.1} parent=11 // pred_check
          %p124 = pneg %p83
        $region14: #{_forward_core.1} parent=11 // pred_check_branch
          %126 = sbr.rel (%p124) target = $region16
        $region15: #{_forward_core.1} parent=11 // pred_region
          %s128 = ssub.s32 13696, 13696
          %129 = vsyncadd [#allocation3], %s128
          %s130 = sshll.u32 [#allocation2], 4
          %s131 = int_to_ptr.vmem [resolvable:$true] %s130
          %136 = dma.hbm_to_vmem [thread:$0]  %s2, 13696, %s131, [#allocation3], 128, 128, 8
        $region16: #{_forward_core.1} parent=11 // pred_fallthru
          _
      $region12: #{_forward_core.1} parent=5 // pred_fallthru
        _
      %p137 = scmp.lt.s32.totalorder %s10, 2
      // Predicated region
      $region17: #{_forward_core.1} parent=5 // pred_check
        %p138 = pneg %p137
      $region18: #{_forward_core.1} parent=5 // pred_check_branch
        %140 = sbr.rel (%p138) target = $region20
      $region19: #{_forward_core.1} parent=5 // pred_region
        // Predicated region
        $region21: #{_forward_core.1} parent=19 // pred_check
          %p141 = pneg %p30
        $region22: #{_forward_core.1} parent=19 // pred_check_branch
          %143 = sbr.rel (%p141) target = $region24
        $region23: #{_forward_core.1} parent=19 // pred_region
          %p144 = scmp.lt.s32.totalorder %s10, 1
          %s145 = scalar_select %p144, %s10, 1
          %s146 = smul.addr %s145, 2
          %s147 = smul.addr %s146, 8
          %s148 = scalar_lea.vmem %s0, %s147
        $region24: #{_forward_core.1} parent=19 // pred_fallthru
          _
        // Predicated region
        $region25: #{_forward_core.1} parent=19 // pred_check
          %p149 = pneg %p56
        $region26: #{_forward_core.1} parent=19 // pred_check_branch
          %151 = sbr.rel (%p149) target = $region28
        $region27: #{_forward_core.1} parent=19 // pred_region
          %p152 = scmp.lt.s32.totalorder %s10, 1
          %s153 = scalar_select %p152, %s10, 1
          %s154 = smul.addr %s153, 8
          %s155 = scalar_lea.vmem %s1, %s154
        $region28: #{_forward_core.1} parent=19 // pred_fallthru
          _
      $region20: #{_forward_core.1} parent=5 // pred_fallthru
        _
      %p156 = scmp.le.s32.totalorder 1, %s10
      %p157 = scmp.lt.s32.totalorder %s10, 3
      %p158 = pnand %p156, %p157
      %p159 = pneg %p158
      // Predicated region
      $region29: #{_forward_core.1} parent=5 // pred_check
        _
      $region30: #{_forward_core.1} parent=5 // pred_check_branch
        %161 = sbr.rel (%p158) target = $region32
      $region31: #{_forward_core.1} parent=5 // pred_region
        %s162 = ssub.s32 %s10, 1
        // Predicated region
        $region33: #{_forward_core.1} parent=31 // pred_check
          %p163 = pneg %p83
        $region34: #{_forward_core.1} parent=31 // pred_check_branch
          %165 = sbr.rel (%p163) target = $region36
        $region35: #{_forward_core.1} parent=31 // pred_region
          %166 = dma.done [#allocation3], 13696
        $region36: #{_forward_core.1} parent=31 // pred_fallthru
          _
        %p167 = scmp.lt.s32.totalorder %s15, 1
        %s168 = scalar_select %p167, %s15, 1
        %s169 = smul.addr %s168, 2
        %s170 = smul.addr %s169, 8
        %s171 = scalar_lea.vmem %s0, %s170
        %p172 = pneg %p36
        %p173 = pneg %p33
        %p174 = scmp.lt.s32.totalorder %s15, 1
        %s175 = scalar_select %p174, %s15, 1
        %s176 = smul.addr %s175, 8
        %s177 = scalar_lea.vmem %s1, %s176
        %p178 = pneg %p62
        %p179 = pneg %p59
        %p180 = pneg %p83
        %p181 = pneg %p80
        %p182 = pneg %p109
        %p183 = pneg %p106
        %p184 = scmp.lt.s32.totalorder %s15, 1
        %s185 = scalar_select %p184, %s15, 1
        %s186 = smul.addr %s185, 8
        %s187 = scalar_lea.vmem %s3, %s186
        %p188 = scmp.lt.s32.totalorder %s15, 1
        %s189 = scalar_select %p188, %s15, 1
        %s190 = smul.addr %s189, 2
        %s191 = smul.addr %s190, 8
        %s192 = scalar_lea.vmem %s0, %s191
        %p193 = scmp.lt.s32.totalorder %s15, 1
        %s194 = scalar_select %p193, %s15, 1
        %s195 = smul.addr %s194, 8
        %s196 = scalar_lea.vmem %s1, %s195
        %p197 = scmp.lt.s32.totalorder %s15, 1
        %s198 = scalar_select %p197, %s15, 1
        %s199 = smul.addr %s198, 8
        %s200 = scalar_lea.vmem %s3, %s199
        %v201 = vlaneseq
        %v202 = vand.u32 %v201, 127
        %vm203 = vcmp.ge.s32.totalorder %v202, 0
        %vm204 = vcmp.lt.s32.totalorder %v202, 8
        %vm205 = vmand %vm203, %vm204
        %v206 = vsel %vm205, 1, 0
        %v207 = vcvt.s32.f32 %v206
        %vm208 = vcmp.ge.s32.totalorder %v202, 8
        %vm209 = vcmp.lt.s32.totalorder %v202, 16
        %vm210 = vmand %vm208, %vm209
        %v211 = vsel %vm210, 1, 0
        %v212 = vcvt.s32.f32 %v211
        %vm213 = vcmp.ge.s32.totalorder %v202, 16
        %vm214 = vcmp.lt.s32.totalorder %v202, 24
        %vm215 = vmand %vm213, %vm214
        %v216 = vsel %vm215, 1, 0
        %v217 = vcvt.s32.f32 %v216
        %vm218 = vcmp.ge.s32.totalorder %v202, 24
        %vm219 = vcmp.lt.s32.totalorder %v202, 32
        %vm220 = vmand %vm218, %vm219
        %v221 = vsel %vm220, 1, 0
        %v222 = vcvt.s32.f32 %v221
        %v223 = vld [vmem:[%s192] sm:$0xff]
        %v224 = vld [vmem:[%s192 + $0x8] sm:$0xff]
        %v225 = vld [vmem:[#allocation2] sm:$0xff]
        %v226 = vld [vmem:[#allocation2 + $0x8] sm:$0xff]
        %vm227 = vcmask 130048
        %v229 = vsel %vm227, %v223, 0
        %v232 = vsel %vm227, %v224, 0
        %234 = vmatprep.subr.mxu0 0.0
        %235 = vmatpush1.msra.mxu0 %v225
        %236 = vmatprep.subr.mxu0 0.0
        %237 = vmatpush1.msra.mxu0 %v226
        %238 = vmatprep.subr.mxu0 0.0
        %239 = vmatpush1.msra.mxu0 0.0
        %240 = vmatprep.subr.mxu0 0.0
        %241 = vmatpush1.msra.mxu0 0.0
        %242 = vmatprep.subr.mxu0 0.0
        %243 = vmatpush1.msra.mxu0 0.0
        %244 = vmatprep.subr.mxu0 0.0
        %245 = vmatpush1.msra.mxu0 0.0
        %246 = vmatprep.subr.mxu0 0.0
        %247 = vmatpush1.msra.mxu0 0.0
        %248 = vmatprep.subr.mxu0 0.0
        %249 = vmatpush1.msra.mxu0 0.0
        %250 = vmatprep.subr.mxu0 0.0
        %251 = vmatpush1.msra.mxu0 0.0
        %252 = vmatprep.subr.mxu0 0.0
        %253 = vmatpush1.msra.mxu0 0.0
        %254 = vmatprep.subr.mxu0 0.0
        %255 = vmatpush1.msra.mxu0 0.0
        %256 = vmatprep.subr.mxu0 0.0
        %257 = vmatpush1.msra.mxu0 0.0
        %258 = vmatprep.subr.mxu0 0.0
        %259 = vmatpush1.msra.mxu0 0.0
        %260 = vmatprep.subr.mxu0 0.0
        %261 = vmatpush1.msra.mxu0 0.0
        %262 = vmatprep.subr.mxu0 0.0
        %263 = vmatpush1.msra.mxu0 0.0
        %264 = vmatprep.subr.mxu0 0.0
        %265 = vmatpush1.msra.mxu0 0.0
        %266 = vmatprep.subr.mxu0 0.0
        %267 = vmatpush1.msra.mxu0 0.0
        %268 = vmatprep.subr.mxu0 0.0
        %269 = vmatpush1.msra.mxu0 0.0
        %270 = vmatprep.subr.mxu0 0.0
        %271 = vmatpush1.msra.mxu0 0.0
        %272 = vmatprep.subr.mxu0 0.0
        %273 = vmatpush1.msra.mxu0 0.0
        %274 = vmatprep.subr.mxu0 0.0
        %275 = vmatpush1.msra.mxu0 0.0
        %276 = vmatprep.subr.mxu0 0.0
        %277 = vmatpush1.msra.mxu0 0.0
        %278 = vmatprep.subr.mxu0 0.0
        %279 = vmatpush1.msra.mxu0 0.0
        %280 = vmatprep.subr.mxu0 0.0
        %281 = vmatpush1.msra.mxu0 0.0
        %282 = vmatprep.subr.mxu0 0.0
        %283 = vmatpush1.msra.mxu0 0.0
        %284 = vmatprep.subr.mxu0 0.0
        %285 = vmatpush1.msra.mxu0 0.0
        %286 = vmatprep.subr.mxu0 0.0
        %287 = vmatpush1.msra.mxu0 0.0
        %288 = vmatprep.subr.mxu0 0.0
        %289 = vmatpush1.msra.mxu0 0.0
        %290 = vmatprep.subr.mxu0 0.0
        %291 = vmatpush1.msra.mxu0 0.0
        %292 = vmatprep.subr.mxu0 0.0
        %293 = vmatpush1.msra.mxu0 0.0
        %294 = vmatprep.subr.mxu0 0.0
        %295 = vmatpush1.msra.mxu0 0.0
        %296 = vmatprep.subr.mxu0 0.0
        %297 = vmatpush1.msra.mxu0 0.0
        %298 = vmatprep.mubr.f32.mxu0 0.0
        %299 = vmatmul.mubr.f32.gmra.mrb[0].mxu0 %v229
        %v300 = vpop.f32.mrb[0].mxu0
        %v301 = vadd.f32 0.0, %v300
        %v302 = vpop.f32.mrb[0].mxu0
        %303 = vmatprep.mubr.f32.mxu0 0.0
        %304 = vmatmul.mubr.f32.gmra.mrb[0].mxu0 %v232
        %v305 = vpop.f32.mrb[0].mxu0
        %v306 = vadd.f32 0.0, %v305
        %v307 = vpop.f32.mrb[0].mxu0
        %308 = vdwg.mxu0
        %311 = vrot.lane.b32.xlu0 %v301, 96
        %v312 = vpop.permute.xlu0 %311
        %313 = vrot.lane.b32.xlu0 %v306, 96
        %v314 = vpop.permute.xlu0 %313
        %317 = vrot.lane.b32.xlu0 %v301, 64
        %v318 = vpop.permute.xlu0 %317
        %319 = vrot.lane.b32.xlu0 %v306, 64
        %v320 = vpop.permute.xlu0 %319
        %v323 = vlaneseq
        %v324 = vshrl.u32 %v323, 7
        %v325 = vadd.s32 %v324, 8
        %v326 = vadd.s32 %v324, 4294967295
        %v327 = vadd.s32 %v325, 4294967295
        %vm328 = vcmp.eq.s32.totalorder %v202, %v326
        %vm329 = vcmp.eq.s32.totalorder %v202, %v327
        %v330 = vadd.s32 %v324, 16
        %v331 = vadd.s32 %v325, 16
        %vm332 = vcmp.eq.s32.totalorder %v202, %v330
        %vm333 = vcmp.eq.s32.totalorder %v202, %v331
        %vm334 = vmor %vm328, %vm332
        %vm335 = vmor %vm329, %vm333
        %v336 = vadd.s32 %v324, 32
        %v337 = vadd.s32 %v325, 32
        %v338 = vadd.s32 %v336, 1
        %v339 = vadd.s32 %v337, 1
        %vm340 = vcmp.eq.s32.totalorder %v202, %v338
        %vm341 = vcmp.eq.s32.totalorder %v202, %v339
        %vm342 = vmor %vm334, %vm340
        %vm343 = vmor %vm335, %vm341
        %v344 = vsel %vm342, 1, 0
        %v345 = vsel %vm343, 1, 0
        %v346 = vcvt.s32.f32 %v344
        %v347 = vcvt.s32.f32 %v345
        %v348 = vld [vmem:[#allocation2 + $0x10] sm:$0x1]
        %v349 = vlaneseq
        %v350 = vshrl.u32 %v349, 7
        %v351 = vsub.s32 0, %v350
        %v352 = vrot.slane %v348, %v351
        %vm353 = vcmask 392192
        %v355 = vsel %vm353, %v346, 0
        %v358 = vsel %vm353, %v347, 0
        %360 = vmatprep.subr.mxu0 0.0
        %361 = vmatpush1.msra.mxu0 %v301
        %362 = vmatprep.subr.mxu0 0.0
        %363 = vmatpush1.msra.mxu0 %v306
        %364 = vmatprep.subr.mxu0 0.0
        %365 = vmatpush1.msra.mxu0 %v312
        %366 = vmatprep.subr.mxu0 0.0
        %367 = vmatpush1.msra.mxu0 %v314
        %368 = vmatprep.subr.mxu0 0.0
        %369 = vmatpush1.msra.mxu0 %v318
        %370 = vmatprep.subr.mxu0 0.0
        %371 = vmatpush1.msra.mxu0 %v320
        %372 = vmatprep.subr.mxu0 0.0
        %373 = vmatpush1.msra.mxu0 0.0
        %374 = vmatprep.subr.mxu0 0.0
        %375 = vmatpush1.msra.mxu0 0.0
        %376 = vmatprep.subr.mxu0 0.0
        %377 = vmatpush1.msra.mxu0 0.0
        %378 = vmatprep.subr.mxu0 0.0
        %379 = vmatpush1.msra.mxu0 0.0
        %380 = vmatprep.subr.mxu0 0.0
        %381 = vmatpush1.msra.mxu0 0.0
        %382 = vmatprep.subr.mxu0 0.0
        %383 = vmatpush1.msra.mxu0 0.0
        %384 = vmatprep.subr.mxu0 0.0
        %385 = vmatpush1.msra.mxu0 0.0
        %386 = vmatprep.subr.mxu0 0.0
        %387 = vmatpush1.msra.mxu0 0.0
        %388 = vmatprep.subr.mxu0 0.0
        %389 = vmatpush1.msra.mxu0 0.0
        %390 = vmatprep.subr.mxu0 0.0
        %391 = vmatpush1.msra.mxu0 0.0
        %392 = vmatprep.subr.mxu0 0.0
        %393 = vmatpush1.msra.mxu0 0.0
        %394 = vmatprep.subr.mxu0 0.0
        %395 = vmatpush1.msra.mxu0 0.0
        %396 = vmatprep.subr.mxu0 0.0
        %397 = vmatpush1.msra.mxu0 0.0
        %398 = vmatprep.subr.mxu0 0.0
        %399 = vmatpush1.msra.mxu0 0.0
        %400 = vmatprep.subr.mxu0 0.0
        %401 = vmatpush1.msra.mxu0 0.0
        %402 = vmatprep.subr.mxu0 0.0
        %403 = vmatpush1.msra.mxu0 0.0
        %404 = vmatprep.subr.mxu0 0.0
        %405 = vmatpush1.msra.mxu0 0.0
        %406 = vmatprep.subr.mxu0 0.0
        %407 = vmatpush1.msra.mxu0 0.0
        %408 = vmatprep.subr.mxu0 0.0
        %409 = vmatpush1.msra.mxu0 0.0
        %410 = vmatprep.subr.mxu0 0.0
        %411 = vmatpush1.msra.mxu0 0.0
        %412 = vmatprep.subr.mxu0 0.0
        %413 = vmatpush1.msra.mxu0 0.0
        %414 = vmatprep.subr.mxu0 0.0
        %415 = vmatpush1.msra.mxu0 0.0
        %416 = vmatprep.subr.mxu0 0.0
        %417 = vmatpush1.msra.mxu0 0.0
        %418 = vmatprep.subr.mxu0 0.0
        %419 = vmatpush1.msra.mxu0 0.0
        %420 = vmatprep.subr.mxu0 0.0
        %421 = vmatpush1.msra.mxu0 0.0
        %422 = vmatprep.subr.mxu0 0.0
        %423 = vmatpush1.msra.mxu0 0.0
        %424 = vmatprep.mubr.f32.mxu0 0.0
        %425 = vmatmul.mubr.f32.gmra.mrb[0].mxu0 %v355
        %v426 = vpop.f32.mrb[0].mxu0
        %v427 = vadd.f32 %v352, %v426
        %v428 = vpop.f32.mrb[0].mxu0
        %429 = vmatprep.mubr.f32.mxu0 0.0
        %430 = vmatmul.mubr.f32.gmra.mrb[0].mxu0 %v358
        %v431 = vpop.f32.mrb[0].mxu0
        %v432 = vadd.f32 %v352, %v431
        %v433 = vpop.f32.mrb[0].mxu0
        %434 = vdwg.mxu0
        %v435 = vmul.f32 %v427, %v427
        %v436 = vmul.f32 %v432, %v432
        %v437 = vmul.f32 %v427, %v435
        %v438 = vmul.f32 %v432, %v436
        %v439 = vmul.f32 %v437, 0.044715
        %v440 = vmul.f32 %v438, 0.044715
        %v441 = vadd.f32 %v427, %v439
        %v442 = vadd.f32 %v432, %v440
        %v443 = vmul.f32 %v441, 0.7978846
        %v444 = vmul.f32 %v442, 0.7978846
        %v445 = vtanh.pop %v443
        %v446 = vtanh.pop %v444
        %v447 = vadd.f32 %v445, 1.0
        %v448 = vadd.f32 %v446, 1.0
        %v449 = vmul.f32 %v447, 0.5
        %v450 = vmul.f32 %v448, 0.5
        %v451 = vmul.f32 %v427, %v449
        %v452 = vmul.f32 %v432, %v450
        %v453 = vld [vmem:[#allocation2 + $0x18] sm:$0xff]
        %v454 = vld [vmem:[#allocation2 + $0x20] sm:$0xff]
        %v455 = vld [vmem:[#allocation2 + $0x28] sm:$0xff]
        %v456 = vld [vmem:[#allocation2 + $0x30] sm:$0xff]
        %vm457 = vcmask 261120
        %v459 = vsel %vm457, %v451, 0
        %v462 = vsel %vm457, %v452, 0
        %464 = vmatprep.subr.mxu0 0.0
        %465 = vmatpush1.msra.mxu0 %v453
        %466 = vmatprep.subr.mxu0 0.0
        %467 = vmatpush1.msra.mxu0 %v454
        %468 = vmatprep.subr.mxu0 0.0
        %469 = vmatpush1.msra.mxu0 %v455
        %470 = vmatprep.subr.mxu0 0.0
        %471 = vmatpush1.msra.mxu0 %v456
        %472 = vmatprep.subr.mxu0 0.0
        %473 = vmatpush1.msra.mxu0 0.0
        %474 = vmatprep.subr.mxu0 0.0
        %475 = vmatpush1.msra.mxu0 0.0
        %476 = vmatprep.subr.mxu0 0.0
        %477 = vmatpush1.msra.mxu0 0.0
        %478 = vmatprep.subr.mxu0 0.0
        %479 = vmatpush1.msra.mxu0 0.0
        %480 = vmatprep.subr.mxu0 0.0
        %481 = vmatpush1.msra.mxu0 0.0
        %482 = vmatprep.subr.mxu0 0.0
        %483 = vmatpush1.msra.mxu0 0.0
        %484 = vmatprep.subr.mxu0 0.0
        %485 = vmatpush1.msra.mxu0 0.0
        %486 = vmatprep.subr.mxu0 0.0
        %487 = vmatpush1.msra.mxu0 0.0
        %488 = vmatprep.subr.mxu0 0.0
        %489 = vmatpush1.msra.mxu0 0.0
        %490 = vmatprep.subr.mxu0 0.0
        %491 = vmatpush1.msra.mxu0 0.0
        %492 = vmatprep.subr.mxu0 0.0
        %493 = vmatpush1.msra.mxu0 0.0
        %494 = vmatprep.subr.mxu0 0.0
        %495 = vmatpush1.msra.mxu0 0.0
        %496 = vmatprep.subr.mxu0 0.0
        %497 = vmatpush1.msra.mxu0 0.0
        %498 = vmatprep.subr.mxu0 0.0
        %499 = vmatpush1.msra.mxu0 0.0
        %500 = vmatprep.subr.mxu0 0.0
        %501 = vmatpush1.msra.mxu0 0.0
        %502 = vmatprep.subr.mxu0 0.0
        %503 = vmatpush1.msra.mxu0 0.0
        %504 = vmatprep.subr.mxu0 0.0
        %505 = vmatpush1.msra.mxu0 0.0
        %506 = vmatprep.subr.mxu0 0.0
        %507 = vmatpush1.msra.mxu0 0.0
        %508 = vmatprep.subr.mxu0 0.0
        %509 = vmatpush1.msra.mxu0 0.0
        %510 = vmatprep.subr.mxu0 0.0
        %511 = vmatpush1.msra.mxu0 0.0
        %512 = vmatprep.subr.mxu0 0.0
        %513 = vmatpush1.msra.mxu0 0.0
        %514 = vmatprep.subr.mxu0 0.0
        %515 = vmatpush1.msra.mxu0 0.0
        %516 = vmatprep.subr.mxu0 0.0
        %517 = vmatpush1.msra.mxu0 0.0
        %518 = vmatprep.subr.mxu0 0.0
        %519 = vmatpush1.msra.mxu0 0.0
        %520 = vmatprep.subr.mxu0 0.0
        %521 = vmatpush1.msra.mxu0 0.0
        %522 = vmatprep.subr.mxu0 0.0
        %523 = vmatpush1.msra.mxu0 0.0
        %524 = vmatprep.subr.mxu0 0.0
        %525 = vmatpush1.msra.mxu0 0.0
        %526 = vmatprep.subr.mxu0 0.0
        %527 = vmatpush1.msra.mxu0 0.0
        %528 = vmatprep.mubr.f32.mxu0 0.0
        %529 = vmatmul.mubr.f32.gmra.mrb[0].mxu0 %v459
        %v530 = vpop.f32.mrb[0].mxu0
        %v531 = vadd.f32 0.0, %v530
        %v532 = vpop.f32.mrb[0].mxu0
        %533 = vmatprep.mubr.f32.mxu0 0.0
        %534 = vmatmul.mubr.f32.gmra.mrb[0].mxu0 %v462
        %v535 = vpop.f32.mrb[0].mxu0
        %v536 = vadd.f32 0.0, %v535
        %v537 = vpop.f32.mrb[0].mxu0
        %538 = vdwg.mxu0
        %541 = vrot.lane.b32.xlu0 %v531, 96
        %v542 = vpop.permute.xlu0 %541
        %543 = vrot.lane.b32.xlu0 %v536, 96
        %v544 = vpop.permute.xlu0 %543
        %547 = vrot.lane.b32.xlu0 %v531, 64
        %v548 = vpop.permute.xlu0 %547
        %549 = vrot.lane.b32.xlu0 %v536, 64
        %v550 = vpop.permute.xlu0 %549
        %v553 = vmul.u32 %v324, 2
        %v554 = vadd.s32 %v553, 4294967295
        %vm555 = vcmp.eq.s32.totalorder %v202, %v554
        %v556 = vadd.s32 %v553, 16
        %vm557 = vcmp.eq.s32.totalorder %v202, %v556
        %vm558 = vmor %vm555, %vm557
        %v559 = vadd.s32 %v553, 32
        %v560 = vadd.s32 %v559, 1
        %vm561 = vcmp.eq.s32.totalorder %v202, %v560
        %vm562 = vmor %vm558, %vm561
        %v563 = vsel %vm562, 1, 0
        %v564 = vcvt.s32.f32 %v563
        %v565 = vld [vmem:[#allocation2 + $0x38] sm:$0x1]
        %v566 = vlaneseq
        %v567 = vshrl.u32 %v566, 7
        %v568 = vsub.s32 0, %v567
        %v569 = vrot.slane %v565, %v568
        %v571 = vsel %vm353, %v564, 0
        %573 = vmatprep.subr.mxu0 0.0
        %574 = vmatpush1.msra.mxu0 %v531
        %575 = vmatprep.subr.mxu0 0.0
        %576 = vmatpush1.msra.mxu0 %v536
        %577 = vmatprep.subr.mxu0 0.0
        %578 = vmatpush1.msra.mxu0 %v542
        %579 = vmatprep.subr.mxu0 0.0
        %580 = vmatpush1.msra.mxu0 %v544
        %581 = vmatprep.subr.mxu0 0.0
        %582 = vmatpush1.msra.mxu0 %v548
        %583 = vmatprep.subr.mxu0 0.0
        %584 = vmatpush1.msra.mxu0 %v550
        %585 = vmatprep.subr.mxu0 0.0
        %586 = vmatpush1.msra.mxu0 0.0
        %587 = vmatprep.subr.mxu0 0.0
        %588 = vmatpush1.msra.mxu0 0.0
        %589 = vmatprep.subr.mxu0 0.0
        %590 = vmatpush1.msra.mxu0 0.0
        %591 = vmatprep.subr.mxu0 0.0
        %592 = vmatpush1.msra.mxu0 0.0
        %593 = vmatprep.subr.mxu0 0.0
        %594 = vmatpush1.msra.mxu0 0.0
        %595 = vmatprep.subr.mxu0 0.0
        %596 = vmatpush1.msra.mxu0 0.0
        %597 = vmatprep.subr.mxu0 0.0
        %598 = vmatpush1.msra.mxu0 0.0
        %599 = vmatprep.subr.mxu0 0.0
        %600 = vmatpush1.msra.mxu0 0.0
        %601 = vmatprep.subr.mxu0 0.0
        %602 = vmatpush1.msra.mxu0 0.0
        %603 = vmatprep.subr.mxu0 0.0
        %604 = vmatpush1.msra.mxu0 0.0
        %605 = vmatprep.subr.mxu0 0.0
        %606 = vmatpush1.msra.mxu0 0.0
        %607 = vmatprep.subr.mxu0 0.0
        %608 = vmatpush1.msra.mxu0 0.0
        %609 = vmatprep.subr.mxu0 0.0
        %610 = vmatpush1.msra.mxu0 0.0
        %611 = vmatprep.subr.mxu0 0.0
        %612 = vmatpush1.msra.mxu0 0.0
        %613 = vmatprep.subr.mxu0 0.0
        %614 = vmatpush1.msra.mxu0 0.0
        %615 = vmatprep.subr.mxu0 0.0
        %616 = vmatpush1.msra.mxu0 0.0
        %617 = vmatprep.subr.mxu0 0.0
        %618 = vmatpush1.msra.mxu0 0.0
        %619 = vmatprep.subr.mxu0 0.0
        %620 = vmatpush1.msra.mxu0 0.0
        %621 = vmatprep.subr.mxu0 0.0
        %622 = vmatpush1.msra.mxu0 0.0
        %623 = vmatprep.subr.mxu0 0.0
        %624 = vmatpush1.msra.mxu0 0.0
        %625 = vmatprep.subr.mxu0 0.0
        %626 = vmatpush1.msra.mxu0 0.0
        %627 = vmatprep.subr.mxu0 0.0
        %628 = vmatpush1.msra.mxu0 0.0
        %629 = vmatprep.subr.mxu0 0.0
        %630 = vmatpush1.msra.mxu0 0.0
        %631 = vmatprep.subr.mxu0 0.0
        %632 = vmatpush1.msra.mxu0 0.0
        %633 = vmatprep.subr.mxu0 0.0
        %634 = vmatpush1.msra.mxu0 0.0
        %635 = vmatprep.subr.mxu0 0.0
        %636 = vmatpush1.msra.mxu0 0.0
        %637 = vmatprep.mubr.f32.mxu0 0.0
        %638 = vmatmul.mubr.f32.gmra.mrb[0].mxu0 %v571
        %v639 = vpop.f32.mrb[0].mxu0
        %v640 = vadd.f32 %v569, %v639
        %v641 = vpop.f32.mrb[0].mxu0
        %642 = vdwg.mxu0
        %v643 = vmul.f32 %v640, %v640
        %v644 = vmul.f32 %v640, %v643
        %v645 = vmul.f32 %v644, 0.044715
        %v646 = vadd.f32 %v640, %v645
        %v647 = vmul.f32 %v646, 0.7978846
        %v648 = vtanh.pop %v647
        %v649 = vadd.f32 %v648, 1.0
        %v650 = vmul.f32 %v649, 0.5
        %v651 = vmul.f32 %v640, %v650
        %v652 = vld [vmem:[#allocation2 + $0x40] sm:$0xff]
        %v653 = vadd.f32 %v651, %v652
        %v654 = vsel %vm457, %v653, 0.0
        %655 = vadd.xlane.f32.xlu0 %v654
        %v656 = vpop.xlane.xlu0 %655
        %v657 = vrcp.pop 32.0
        %v658 = vmul.f32 %v656, %v657
        %v659 = vsub.f32 %v653, %v658
        %v660 = vmul.f32 %v659, %v659
        %v661 = vsel %vm457, %v660, 0.0
        %662 = vadd.xlane.f32.xlu0 %v661
        %v663 = vpop.xlane.xlu0 %662
        %v664 = vmul.f32 %v663, %v657
        %v665 = vadd.f32 %v664, 1e-05
        %v666 = vrsqrt.pop %v665
        %v667 = vmul.f32 %v659, %v666
        %v668 = vld [vmem:[#allocation2 + $0x48] sm:$0x1]
        %v669 = vlaneseq
        %v670 = vshrl.u32 %v669, 7
        %v671 = vsub.s32 0, %v670
        %v672 = vrot.slane %v668, %v671
        %v673 = vmul.f32 %v667, %v672
        %v674 = vld [vmem:[#allocation2 + $0x50] sm:$0x1]
        %v675 = vlaneseq
        %v676 = vshrl.u32 %v675, 7
        %v677 = vsub.s32 0, %v676
        %v678 = vrot.slane %v674, %v677
        %v679 = vadd.f32 %v673, %v678
        %v680 = vld [vmem:[#allocation2 + $0x58] sm:$0xff]
        %v681 = vld [vmem:[#allocation2 + $0x60] sm:$0xff]
        %v682 = vld [vmem:[#allocation2 + $0x68] sm:$0xff]
        %v683 = vld [vmem:[#allocation2 + $0x70] sm:$0xff]
        %v684 = vld [vmem:[#allocation2 + $0x78] sm:$0x1]
        %v685 = vlaneseq
        %v686 = vshrl.u32 %v685, 7
        %v687 = vsub.s32 0, %v686
        %v688 = vrot.slane %v684, %v687
        %v690 = vsel %vm457, %v679, 0
        %692 = vmatprep.subr.mxu0 0.0
        %693 = vmatpush1.msra.mxu0 %v680
        %694 = vmatprep.subr.mxu0 0.0
        %695 = vmatpush1.msra.mxu0 %v681
        %696 = vmatprep.subr.mxu0 0.0
        %697 = vmatpush1.msra.mxu0 %v682
        %698 = vmatprep.subr.mxu0 0.0
        %699 = vmatpush1.msra.mxu0 %v683
        %700 = vmatprep.subr.mxu0 0.0
        %701 = vmatpush1.msra.mxu0 0.0
        %702 = vmatprep.subr.mxu0 0.0
        %703 = vmatpush1.msra.mxu0 0.0
        %704 = vmatprep.subr.mxu0 0.0
        %705 = vmatpush1.msra.mxu0 0.0
        %706 = vmatprep.subr.mxu0 0.0
        %707 = vmatpush1.msra.mxu0 0.0
        %708 = vmatprep.subr.mxu0 0.0
        %709 = vmatpush1.msra.mxu0 0.0
        %710 = vmatprep.subr.mxu0 0.0
        %711 = vmatpush1.msra.mxu0 0.0
        %712 = vmatprep.subr.mxu0 0.0
        %713 = vmatpush1.msra.mxu0 0.0
        %714 = vmatprep.subr.mxu0 0.0
        %715 = vmatpush1.msra.mxu0 0.0
        %716 = vmatprep.subr.mxu0 0.0
        %717 = vmatpush1.msra.mxu0 0.0
        %718 = vmatprep.subr.mxu0 0.0
        %719 = vmatpush1.msra.mxu0 0.0
        %720 = vmatprep.subr.mxu0 0.0
        %721 = vmatpush1.msra.mxu0 0.0
        %722 = vmatprep.subr.mxu0 0.0
        %723 = vmatpush1.msra.mxu0 0.0
        %724 = vmatprep.subr.mxu0 0.0
        %725 = vmatpush1.msra.mxu0 0.0
        %726 = vmatprep.subr.mxu0 0.0
        %727 = vmatpush1.msra.mxu0 0.0
        %728 = vmatprep.subr.mxu0 0.0
        %729 = vmatpush1.msra.mxu0 0.0
        %730 = vmatprep.subr.mxu0 0.0
        %731 = vmatpush1.msra.mxu0 0.0
        %732 = vmatprep.subr.mxu0 0.0
        %733 = vmatpush1.msra.mxu0 0.0
        %734 = vmatprep.subr.mxu0 0.0
        %735 = vmatpush1.msra.mxu0 0.0
        %736 = vmatprep.subr.mxu0 0.0
        %737 = vmatpush1.msra.mxu0 0.0
        %738 = vmatprep.subr.mxu0 0.0
        %739 = vmatpush1.msra.mxu0 0.0
        %740 = vmatprep.subr.mxu0 0.0
        %741 = vmatpush1.msra.mxu0 0.0
        %742 = vmatprep.subr.mxu0 0.0
        %743 = vmatpush1.msra.mxu0 0.0
        %744 = vmatprep.subr.mxu0 0.0
        %745 = vmatpush1.msra.mxu0 0.0
        %746 = vmatprep.subr.mxu0 0.0
        %747 = vmatpush1.msra.mxu0 0.0
        %748 = vmatprep.subr.mxu0 0.0
        %749 = vmatpush1.msra.mxu0 0.0
        %750 = vmatprep.subr.mxu0 0.0
        %751 = vmatpush1.msra.mxu0 0.0
        %752 = vmatprep.subr.mxu0 0.0
        %753 = vmatpush1.msra.mxu0 0.0
        %754 = vmatprep.subr.mxu0 0.0
        %755 = vmatpush1.msra.mxu0 0.0
        %756 = vmatprep.mubr.f32.mxu0 0.0
        %757 = vmatmul.mubr.f32.gmra.mrb[0].mxu0 %v690
        %v758 = vpop.f32.mrb[0].mxu0
        %v759 = vadd.f32 %v688, %v758
        %v760 = vpop.f32.mrb[0].mxu0
        %761 = vdwg.mxu0
        %v762 = vmul.f32 %v759, %v207
        %764 = vrot.lane.b32.xlu0 %v759, 96
        %v765 = vpop.permute.xlu0 %764
        %v767 = vsel %vm457, %v762, 0
        %v769 = vsel %vm457, %v765, 0
        %771 = vmatprep.subr.mxu0 0.0
        %772 = vmatpush1.xpose.msra.mxu0 %v769
        %773 = vmatprep.subr.mxu0 0.0
        %774 = vmatpush1.xpose.msra.mxu0 0.0
        %775 = vmatprep.subr.mxu0 0.0
        %776 = vmatpush1.xpose.msra.mxu0 0.0
        %777 = vmatprep.subr.mxu0 0.0
        %778 = vmatpush1.xpose.msra.mxu0 0.0
        %779 = vmatprep.subr.mxu0 0.0
        %780 = vmatpush1.xpose.msra.mxu0 0.0
        %781 = vmatprep.subr.mxu0 0.0
        %782 = vmatpush1.xpose.msra.mxu0 0.0
        %783 = vmatprep.subr.mxu0 0.0
        %784 = vmatpush1.xpose.msra.mxu0 0.0
        %785 = vmatprep.subr.mxu0 0.0
        %786 = vmatpush1.xpose.msra.mxu0 0.0
        %787 = vmatprep.subr.mxu0 0.0
        %788 = vmatpush1.xpose.msra.mxu0 0.0
        %789 = vmatprep.subr.mxu0 0.0
        %790 = vmatpush1.xpose.msra.mxu0 0.0
        %791 = vmatprep.subr.mxu0 0.0
        %792 = vmatpush1.xpose.msra.mxu0 0.0
        %793 = vmatprep.subr.mxu0 0.0
        %794 = vmatpush1.xpose.msra.mxu0 0.0
        %795 = vmatprep.subr.mxu0 0.0
        %796 = vmatpush1.xpose.msra.mxu0 0.0
        %797 = vmatprep.subr.mxu0 0.0
        %798 = vmatpush1.xpose.msra.mxu0 0.0
        %799 = vmatprep.subr.mxu0 0.0
        %800 = vmatpush1.xpose.msra.mxu0 0.0
        %801 = vmatprep.subr.mxu0 0.0
        %802 = vmatpush1.xpose.msra.mxu0 0.0
        %803 = vmatprep.subr.mxu0 0.0
        %804 = vmatpush1.xpose.msra.mxu0 0.0
        %805 = vmatprep.subr.mxu0 0.0
        %806 = vmatpush1.xpose.msra.mxu0 0.0
        %807 = vmatprep.subr.mxu0 0.0
        %808 = vmatpush1.xpose.msra.mxu0 0.0
        %809 = vmatprep.subr.mxu0 0.0
        %810 = vmatpush1.xpose.msra.mxu0 0.0
        %811 = vmatprep.subr.mxu0 0.0
        %812 = vmatpush1.xpose.msra.mxu0 0.0
        %813 = vmatprep.subr.mxu0 0.0
        %814 = vmatpush1.xpose.msra.mxu0 0.0
        %815 = vmatprep.subr.mxu0 0.0
        %816 = vmatpush1.xpose.msra.mxu0 0.0
        %817 = vmatprep.subr.mxu0 0.0
        %818 = vmatpush1.xpose.msra.mxu0 0.0
        %819 = vmatprep.subr.mxu0 0.0
        %820 = vmatpush1.xpose.msra.mxu0 0.0
        %821 = vmatprep.subr.mxu0 0.0
        %822 = vmatpush1.xpose.msra.mxu0 0.0
        %823 = vmatprep.subr.mxu0 0.0
        %824 = vmatpush1.xpose.msra.mxu0 0.0
        %825 = vmatprep.subr.mxu0 0.0
        %826 = vmatpush1.xpose.msra.mxu0 0.0
        %827 = vmatprep.subr.mxu0 0.0
        %828 = vmatpush1.xpose.msra.mxu0 0.0
        %829 = vmatprep.subr.mxu0 0.0
        %830 = vmatpush1.xpose.msra.mxu0 0.0
        %831 = vmatprep.subr.mxu0 0.0
        %832 = vmatpush1.xpose.msra.mxu0 0.0
        %833 = vmatprep.subr.mxu0 0.0
        %834 = vmatpush1.xpose.msra.mxu0 0.0
        %835 = vmatprep.mubr.f32.mxu0 0.0
        %836 = vmatmul.mubr.f32.gmra.mrb[0].mxu0 %v767
        %v837 = vpop.f32.mrb[0].mxu0
        %v838 = vadd.f32 0.0, %v837
        %v839 = vpop.f32.mrb[0].mxu0
        %840 = vdwg.mxu0
        %vm841 = vcmask 64512
        %v842 = vsel %vm841, %v838, -inf
        %843 = vmax.xlane.f32.xlu0 %v842
        %v844 = vpop.xlane.xlu0 %843
        %v845 = vsub.f32 %v838, %v844
        %v846 = vmul.f32 %v845, 1.442695
        %v847 = vpow.pop %v846
        %v848 = vsel %vm841, %v847, 0.0
        %849 = vadd.xlane.f32.xlu0 %v848
        %v850 = vpop.xlane.xlu0 %849
        %v851 = vrcp.pop %v850
        %v852 = vmul.f32 %v847, %v851
        %854 = vrot.lane.b32.xlu0 %v207, 64
        %v855 = vpop.permute.xlu0 %854
        %v857 = vmul.f32 %v759, %v855
        %v858 = vmul.f32 %v759, %v212
        %v860 = vsel %vm457, %v858, 0
        %862 = vmatprep.subr.mxu0 0.0
        %863 = vmatpush1.xpose.msra.mxu0 %v769
        %864 = vmatprep.subr.mxu0 0.0
        %865 = vmatpush1.xpose.msra.mxu0 0.0
        %866 = vmatprep.subr.mxu0 0.0
        %867 = vmatpush1.xpose.msra.mxu0 0.0
        %868 = vmatprep.subr.mxu0 0.0
        %869 = vmatpush1.xpose.msra.mxu0 0.0
        %870 = vmatprep.subr.mxu0 0.0
        %871 = vmatpush1.xpose.msra.mxu0 0.0
        %872 = vmatprep.subr.mxu0 0.0
        %873 = vmatpush1.xpose.msra.mxu0 0.0
        %874 = vmatprep.subr.mxu0 0.0
        %875 = vmatpush1.xpose.msra.mxu0 0.0
        %876 = vmatprep.subr.mxu0 0.0
        %877 = vmatpush1.xpose.msra.mxu0 0.0
        %878 = vmatprep.subr.mxu0 0.0
        %879 = vmatpush1.xpose.msra.mxu0 0.0
        %880 = vmatprep.subr.mxu0 0.0
        %881 = vmatpush1.xpose.msra.mxu0 0.0
        %882 = vmatprep.subr.mxu0 0.0
        %883 = vmatpush1.xpose.msra.mxu0 0.0
        %884 = vmatprep.subr.mxu0 0.0
        %885 = vmatpush1.xpose.msra.mxu0 0.0
        %886 = vmatprep.subr.mxu0 0.0
        %887 = vmatpush1.xpose.msra.mxu0 0.0
        %888 = vmatprep.subr.mxu0 0.0
        %889 = vmatpush1.xpose.msra.mxu0 0.0
        %890 = vmatprep.subr.mxu0 0.0
        %891 = vmatpush1.xpose.msra.mxu0 0.0
        %892 = vmatprep.subr.mxu0 0.0
        %893 = vmatpush1.xpose.msra.mxu0 0.0
        %894 = vmatprep.subr.mxu0 0.0
        %895 = vmatpush1.xpose.msra.mxu0 0.0
        %896 = vmatprep.subr.mxu0 0.0
        %897 = vmatpush1.xpose.msra.mxu0 0.0
        %898 = vmatprep.subr.mxu0 0.0
        %899 = vmatpush1.xpose.msra.mxu0 0.0
        %900 = vmatprep.subr.mxu0 0.0
        %901 = vmatpush1.xpose.msra.mxu0 0.0
        %902 = vmatprep.subr.mxu0 0.0
        %903 = vmatpush1.xpose.msra.mxu0 0.0
        %904 = vmatprep.subr.mxu0 0.0
        %905 = vmatpush1.xpose.msra.mxu0 0.0
        %906 = vmatprep.subr.mxu0 0.0
        %907 = vmatpush1.xpose.msra.mxu0 0.0
        %908 = vmatprep.subr.mxu0 0.0
        %909 = vmatpush1.xpose.msra.mxu0 0.0
        %910 = vmatprep.subr.mxu0 0.0
        %911 = vmatpush1.xpose.msra.mxu0 0.0
        %912 = vmatprep.subr.mxu0 0.0
        %913 = vmatpush1.xpose.msra.mxu0 0.0
        %914 = vmatprep.subr.mxu0 0.0
        %915 = vmatpush1.xpose.msra.mxu0 0.0
        %916 = vmatprep.subr.mxu0 0.0
        %917 = vmatpush1.xpose.msra.mxu0 0.0
        %918 = vmatprep.subr.mxu0 0.0
        %919 = vmatpush1.xpose.msra.mxu0 0.0
        %920 = vmatprep.subr.mxu0 0.0
        %921 = vmatpush1.xpose.msra.mxu0 0.0
        %922 = vmatprep.subr.mxu0 0.0
        %923 = vmatpush1.xpose.msra.mxu0 0.0
        %924 = vmatprep.subr.mxu0 0.0
        %925 = vmatpush1.xpose.msra.mxu0 0.0
        %926 = vmatprep.mubr.f32.mxu0 0.0
        %927 = vmatmul.mubr.f32.gmra.mrb[0].mxu0 %v860
        %v928 = vpop.f32.mrb[0].mxu0
        %v929 = vadd.f32 0.0, %v928
        %v930 = vpop.f32.mrb[0].mxu0
        %931 = vdwg.mxu0
        %v932 = vsel %vm841, %v929, -inf
        %933 = vmax.xlane.f32.xlu0 %v932
        %v934 = vpop.xlane.xlu0 %933
        %v935 = vsub.f32 %v929, %v934
        %v936 = vmul.f32 %v935, 1.442695
        %v937 = vpow.pop %v936
        %v938 = vsel %vm841, %v937, 0.0
        %939 = vadd.xlane.f32.xlu0 %v938
        %v940 = vpop.xlane.xlu0 %939
        %v941 = vrcp.pop %v940
        %v942 = vmul.f32 %v937, %v941
        %944 = vrot.lane.b32.xlu0 %v212, 64
        %v945 = vpop.permute.xlu0 %944
        %v947 = vmul.f32 %v759, %v945
        %949 = vrot.lane.b32.xlu0 %v947, 64
        %v950 = vpop.permute.xlu0 %949
        %v953 = vsel %vm841, %v942, 0
        %955 = vmatprep.subr.mxu0 0.0
        %956 = vmatpush1.msra.mxu0 %v950
        %957 = vmatprep.subr.mxu0 0.0
        %958 = vmatpush1.msra.mxu0 0.0
        %959 = vmatprep.subr.mxu0 0.0
        %960 = vmatpush1.msra.mxu0 0.0
        %961 = vmatprep.subr.mxu0 0.0
        %962 = vmatpush1.msra.mxu0 0.0
        %963 = vmatprep.subr.mxu0 0.0
        %964 = vmatpush1.msra.mxu0 0.0
        %965 = vmatprep.subr.mxu0 0.0
        %966 = vmatpush1.msra.mxu0 0.0
        %967 = vmatprep.subr.mxu0 0.0
        %968 = vmatpush1.msra.mxu0 0.0
        %969 = vmatprep.subr.mxu0 0.0
        %970 = vmatpush1.msra.mxu0 0.0
        %971 = vmatprep.subr.mxu0 0.0
        %972 = vmatpush1.msra.mxu0 0.0
        %973 = vmatprep.subr.mxu0 0.0
        %974 = vmatpush1.msra.mxu0 0.0
        %975 = vmatprep.subr.mxu0 0.0
        %976 = vmatpush1.msra.mxu0 0.0
        %977 = vmatprep.subr.mxu0 0.0
        %978 = vmatpush1.msra.mxu0 0.0
        %979 = vmatprep.subr.mxu0 0.0
        %980 = vmatpush1.msra.mxu0 0.0
        %981 = vmatprep.subr.mxu0 0.0
        %982 = vmatpush1.msra.mxu0 0.0
        %983 = vmatprep.subr.mxu0 0.0
        %984 = vmatpush1.msra.mxu0 0.0
        %985 = vmatprep.subr.mxu0 0.0
        %986 = vmatpush1.msra.mxu0 0.0
        %987 = vmatprep.subr.mxu0 0.0
        %988 = vmatpush1.msra.mxu0 0.0
        %989 = vmatprep.subr.mxu0 0.0
        %990 = vmatpush1.msra.mxu0 0.0
        %991 = vmatprep.subr.mxu0 0.0
        %992 = vmatpush1.msra.mxu0 0.0
        %993 = vmatprep.subr.mxu0 0.0
        %994 = vmatpush1.msra.mxu0 0.0
        %995 = vmatprep.subr.mxu0 0.0
        %996 = vmatpush1.msra.mxu0 0.0
        %997 = vmatprep.subr.mxu0 0.0
        %998 = vmatpush1.msra.mxu0 0.0
        %999 = vmatprep.subr.mxu0 0.0
        %1000 = vmatpush1.msra.mxu0 0.0
        %1001 = vmatprep.subr.mxu0 0.0
        %1002 = vmatpush1.msra.mxu0 0.0
        %1003 = vmatprep.subr.mxu0 0.0
        %1004 = vmatpush1.msra.mxu0 0.0
        %1005 = vmatprep.subr.mxu0 0.0
        %1006 = vmatpush1.msra.mxu0 0.0
        %1007 = vmatprep.subr.mxu0 0.0
        %1008 = vmatpush1.msra.mxu0 0.0
        %1009 = vmatprep.subr.mxu0 0.0
        %1010 = vmatpush1.msra.mxu0 0.0
        %1011 = vmatprep.subr.mxu0 0.0
        %1012 = vmatpush1.msra.mxu0 0.0
        %1013 = vmatprep.subr.mxu0 0.0
        %1014 = vmatpush1.msra.mxu0 0.0
        %1015 = vmatprep.subr.mxu0 0.0
        %1016 = vmatpush1.msra.mxu0 0.0
        %1017 = vmatprep.subr.mxu0 0.0
        %1018 = vmatpush1.msra.mxu0 0.0
        %1019 = vmatprep.mubr.f32.mxu0 0.0
        %1020 = vmatmul.mubr.f32.gmra.mrb[0].mxu0 %v953
        %v1021 = vpop.f32.mrb[0].mxu0
        %v1022 = vadd.f32 0.0, %v1021
        %v1023 = vpop.f32.mrb[0].mxu0
        %1024 = vdwg.mxu0
        %1026 = vrot.lane.b32.xlu0 %v857, 64
        %v1027 = vpop.permute.xlu0 %1026
        %v1030 = vsel %vm841, %v852, 0
        %1032 = vmatprep.subr.mxu0 0.0
        %1033 = vmatpush1.msra.mxu0 %v1027
        %1034 = vmatprep.subr.mxu0 0.0
        %1035 = vmatpush1.msra.mxu0 0.0
        %1036 = vmatprep.subr.mxu0 0.0
        %1037 = vmatpush1.msra.mxu0 0.0
        %1038 = vmatprep.subr.mxu0 0.0
        %1039 = vmatpush1.msra.mxu0 0.0
        %1040 = vmatprep.subr.mxu0 0.0
        %1041 = vmatpush1.msra.mxu0 0.0
        %1042 = vmatprep.subr.mxu0 0.0
        %1043 = vmatpush1.msra.mxu0 0.0
        %1044 = vmatprep.subr.mxu0 0.0
        %1045 = vmatpush1.msra.mxu0 0.0
        %1046 = vmatprep.subr.mxu0 0.0
        %1047 = vmatpush1.msra.mxu0 0.0
        %1048 = vmatprep.subr.mxu0 0.0
        %1049 = vmatpush1.msra.mxu0 0.0
        %1050 = vmatprep.subr.mxu0 0.0
        %1051 = vmatpush1.msra.mxu0 0.0
        %1052 = vmatprep.subr.mxu0 0.0
        %1053 = vmatpush1.msra.mxu0 0.0
        %1054 = vmatprep.subr.mxu0 0.0
        %1055 = vmatpush1.msra.mxu0 0.0
        %1056 = vmatprep.subr.mxu0 0.0
        %1057 = vmatpush1.msra.mxu0 0.0
        %1058 = vmatprep.subr.mxu0 0.0
        %1059 = vmatpush1.msra.mxu0 0.0
        %1060 = vmatprep.subr.mxu0 0.0
        %1061 = vmatpush1.msra.mxu0 0.0
        %1062 = vmatprep.subr.mxu0 0.0
        %1063 = vmatpush1.msra.mxu0 0.0
        %1064 = vmatprep.subr.mxu0 0.0
        %1065 = vmatpush1.msra.mxu0 0.0
        %1066 = vmatprep.subr.mxu0 0.0
        %1067 = vmatpush1.msra.mxu0 0.0
        %1068 = vmatprep.subr.mxu0 0.0
        %1069 = vmatpush1.msra.mxu0 0.0
        %1070 = vmatprep.subr.mxu0 0.0
        %1071 = vmatpush1.msra.mxu0 0.0
        %1072 = vmatprep.subr.mxu0 0.0
        %1073 = vmatpush1.msra.mxu0 0.0
        %1074 = vmatprep.subr.mxu0 0.0
        %1075 = vmatpush1.msra.mxu0 0.0
        %1076 = vmatprep.subr.mxu0 0.0
        %1077 = vmatpush1.msra.mxu0 0.0
        %1078 = vmatprep.subr.mxu0 0.0
        %1079 = vmatpush1.msra.mxu0 0.0
        %1080 = vmatprep.subr.mxu0 0.0
        %1081 = vmatpush1.msra.mxu0 0.0
        %1082 = vmatprep.subr.mxu0 0.0
        %1083 = vmatpush1.msra.mxu0 0.0
        %1084 = vmatprep.subr.mxu0 0.0
        %1085 = vmatpush1.msra.mxu0 0.0
        %1086 = vmatprep.subr.mxu0 0.0
        %1087 = vmatpush1.msra.mxu0 0.0
        %1088 = vmatprep.subr.mxu0 0.0
        %1089 = vmatpush1.msra.mxu0 0.0
        %1090 = vmatprep.subr.mxu0 0.0
        %1091 = vmatpush1.msra.mxu0 0.0
        %1092 = vmatprep.subr.mxu0 0.0
        %1093 = vmatpush1.msra.mxu0 0.0
        %1094 = vmatprep.subr.mxu0 0.0
        %1095 = vmatpush1.msra.mxu0 0.0
        %1096 = vmatprep.mubr.f32.mxu0 0.0
        %1097 = vmatmul.mubr.f32.gmra.mrb[0].mxu0 %v1030
        %v1098 = vpop.f32.mrb[0].mxu0
        %v1099 = vadd.f32 %v1022, %v1098
        %v1100 = vpop.f32.mrb[0].mxu0
        %1101 = vdwg.mxu0
        %v1102 = vmul.f32 %v759, %v217
        %v1104 = vsel %vm457, %v1102, 0
        %1106 = vmatprep.subr.mxu0 0.0
        %1107 = vmatpush1.xpose.msra.mxu0 %v769
        %1108 = vmatprep.subr.mxu0 0.0
        %1109 = vmatpush1.xpose.msra.mxu0 0.0
        %1110 = vmatprep.subr.mxu0 0.0
        %1111 = vmatpush1.xpose.msra.mxu0 0.0
        %1112 = vmatprep.subr.mxu0 0.0
        %1113 = vmatpush1.xpose.msra.mxu0 0.0
        %1114 = vmatprep.subr.mxu0 0.0
        %1115 = vmatpush1.xpose.msra.mxu0 0.0
        %1116 = vmatprep.subr.mxu0 0.0
        %1117 = vmatpush1.xpose.msra.mxu0 0.0
        %1118 = vmatprep.subr.mxu0 0.0
        %1119 = vmatpush1.xpose.msra.mxu0 0.0
        %1120 = vmatprep.subr.mxu0 0.0
        %1121 = vmatpush1.xpose.msra.mxu0 0.0
        %1122 = vmatprep.subr.mxu0 0.0
        %1123 = vmatpush1.xpose.msra.mxu0 0.0
        %1124 = vmatprep.subr.mxu0 0.0
        %1125 = vmatpush1.xpose.msra.mxu0 0.0
        %1126 = vmatprep.subr.mxu0 0.0
        %1127 = vmatpush1.xpose.msra.mxu0 0.0
        %1128 = vmatprep.subr.mxu0 0.0
        %1129 = vmatpush1.xpose.msra.mxu0 0.0
        %1130 = vmatprep.subr.mxu0 0.0
        %1131 = vmatpush1.xpose.msra.mxu0 0.0
        %1132 = vmatprep.subr.mxu0 0.0
        %1133 = vmatpush1.xpose.msra.mxu0 0.0
        %1134 = vmatprep.subr.mxu0 0.0
        %1135 = vmatpush1.xpose.msra.mxu0 0.0
        %1136 = vmatprep.subr.mxu0 0.0
        %1137 = vmatpush1.xpose.msra.mxu0 0.0
        %1138 = vmatprep.subr.mxu0 0.0
        %1139 = vmatpush1.xpose.msra.mxu0 0.0
        %1140 = vmatprep.subr.mxu0 0.0
        %1141 = vmatpush1.xpose.msra.mxu0 0.0
        %1142 = vmatprep.subr.mxu0 0.0
        %1143 = vmatpush1.xpose.msra.mxu0 0.0
        %1144 = vmatprep.subr.mxu0 0.0
        %1145 = vmatpush1.xpose.msra.mxu0 0.0
        %1146 = vmatprep.subr.mxu0 0.0
        %1147 = vmatpush1.xpose.msra.mxu0 0.0
        %1148 = vmatprep.subr.mxu0 0.0
        %1149 = vmatpush1.xpose.msra.mxu0 0.0
        %1150 = vmatprep.subr.mxu0 0.0
        %1151 = vmatpush1.xpose.msra.mxu0 0.0
        %1152 = vmatprep.subr.mxu0 0.0
        %1153 = vmatpush1.xpose.msra.mxu0 0.0
        %1154 = vmatprep.subr.mxu0 0.0
        %1155 = vmatpush1.xpose.msra.mxu0 0.0
        %1156 = vmatprep.subr.mxu0 0.0
        %1157 = vmatpush1.xpose.msra.mxu0 0.0
        %1158 = vmatprep.subr.mxu0 0.0
        %1159 = vmatpush1.xpose.msra.mxu0 0.0
        %1160 = vmatprep.subr.mxu0 0.0
        %1161 = vmatpush1.xpose.msra.mxu0 0.0
        %1162 = vmatprep.subr.mxu0 0.0
        %1163 = vmatpush1.xpose.msra.mxu0 0.0
        %1164 = vmatprep.subr.mxu0 0.0
        %1165 = vmatpush1.xpose.msra.mxu0 0.0
        %1166 = vmatprep.subr.mxu0 0.0
        %1167 = vmatpush1.xpose.msra.mxu0 0.0
        %1168 = vmatprep.subr.mxu0 0.0
        %1169 = vmatpush1.xpose.msra.mxu0 0.0
        %1170 = vmatprep.mubr.f32.mxu0 0.0
        %1171 = vmatmul.mubr.f32.gmra.mrb[0].mxu0 %v1104
        %v1172 = vpop.f32.mrb[0].mxu0
        %v1173 = vadd.f32 0.0, %v1172
        %v1174 = vpop.f32.mrb[0].mxu0
        %1175 = vdwg.mxu0
        %v1176 = vsel %vm841, %v1173, -inf
        %1177 = vmax.xlane.f32.xlu0 %v1176
        %v1178 = vpop.xlane.xlu0 %1177
        %v1179 = vsub.f32 %v1173, %v1178
        %v1180 = vmul.f32 %v1179, 1.442695
        %v1181 = vpow.pop %v1180
        %v1182 = vsel %vm841, %v1181, 0.0
        %1183 = vadd.xlane.f32.xlu0 %v1182
        %v1184 = vpop.xlane.xlu0 %1183
        %v1185 = vrcp.pop %v1184
        %v1186 = vmul.f32 %v1181, %v1185
        %1188 = vrot.lane.b32.xlu0 %v217, 64
        %v1189 = vpop.permute.xlu0 %1188
        %v1191 = vmul.f32 %v759, %v1189
        %1193 = vrot.lane.b32.xlu0 %v1191, 64
        %v1194 = vpop.permute.xlu0 %1193
        %v1197 = vsel %vm841, %v1186, 0
        %1199 = vmatprep.subr.mxu0 0.0
        %1200 = vmatpush1.msra.mxu0 %v1194
        %1201 = vmatprep.subr.mxu0 0.0
        %1202 = vmatpush1.msra.mxu0 0.0
        %1203 = vmatprep.subr.mxu0 0.0
        %1204 = vmatpush1.msra.mxu0 0.0
        %1205 = vmatprep.subr.mxu0 0.0
        %1206 = vmatpush1.msra.mxu0 0.0
        %1207 = vmatprep.subr.mxu0 0.0
        %1208 = vmatpush1.msra.mxu0 0.0
        %1209 = vmatprep.subr.mxu0 0.0
        %1210 = vmatpush1.msra.mxu0 0.0
        %1211 = vmatprep.subr.mxu0 0.0
        %1212 = vmatpush1.msra.mxu0 0.0
        %1213 = vmatprep.subr.mxu0 0.0
        %1214 = vmatpush1.msra.mxu0 0.0
        %1215 = vmatprep.subr.mxu0 0.0
        %1216 = vmatpush1.msra.mxu0 0.0
        %1217 = vmatprep.subr.mxu0 0.0
        %1218 = vmatpush1.msra.mxu0 0.0
        %1219 = vmatprep.subr.mxu0 0.0
        %1220 = vmatpush1.msra.mxu0 0.0
        %1221 = vmatprep.subr.mxu0 0.0
        %1222 = vmatpush1.msra.mxu0 0.0
        %1223 = vmatprep.subr.mxu0 0.0
        %1224 = vmatpush1.msra.mxu0 0.0
        %1225 = vmatprep.subr.mxu0 0.0
        %1226 = vmatpush1.msra.mxu0 0.0
        %1227 = vmatprep.subr.mxu0 0.0
        %1228 = vmatpush1.msra.mxu0 0.0
        %1229 = vmatprep.subr.mxu0 0.0
        %1230 = vmatpush1.msra.mxu0 0.0
        %1231 = vmatprep.subr.mxu0 0.0
        %1232 = vmatpush1.msra.mxu0 0.0
        %1233 = vmatprep.subr.mxu0 0.0
        %1234 = vmatpush1.msra.mxu0 0.0
        %1235 = vmatprep.subr.mxu0 0.0
        %1236 = vmatpush1.msra.mxu0 0.0
        %1237 = vmatprep.subr.mxu0 0.0
        %1238 = vmatpush1.msra.mxu0 0.0
        %1239 = vmatprep.subr.mxu0 0.0
        %1240 = vmatpush1.msra.mxu0 0.0
        %1241 = vmatprep.subr.mxu0 0.0
        %1242 = vmatpush1.msra.mxu0 0.0
        %1243 = vmatprep.subr.mxu0 0.0
        %1244 = vmatpush1.msra.mxu0 0.0
        %1245 = vmatprep.subr.mxu0 0.0
        %1246 = vmatpush1.msra.mxu0 0.0
        %1247 = vmatprep.subr.mxu0 0.0
        %1248 = vmatpush1.msra.mxu0 0.0
        %1249 = vmatprep.subr.mxu0 0.0
        %1250 = vmatpush1.msra.mxu0 0.0
        %1251 = vmatprep.subr.mxu0 0.0
        %1252 = vmatpush1.msra.mxu0 0.0
        %1253 = vmatprep.subr.mxu0 0.0
        %1254 = vmatpush1.msra.mxu0 0.0
        %1255 = vmatprep.subr.mxu0 0.0
        %1256 = vmatpush1.msra.mxu0 0.0
        %1257 = vmatprep.subr.mxu0 0.0
        %1258 = vmatpush1.msra.mxu0 0.0
        %1259 = vmatprep.subr.mxu0 0.0
        %1260 = vmatpush1.msra.mxu0 0.0
        %1261 = vmatprep.subr.mxu0 0.0
        %1262 = vmatpush1.msra.mxu0 0.0
        %1263 = vmatprep.mubr.f32.mxu0 0.0
        %1264 = vmatmul.mubr.f32.gmra.mrb[0].mxu0 %v1197
        %v1265 = vpop.f32.mrb[0].mxu0
        %v1266 = vadd.f32 0.0, %v1265
        %v1267 = vpop.f32.mrb[0].mxu0
        %1268 = vdwg.mxu0
        %v1269 = vadd.f32 %v1099, %v1266
        %v1270 = vmul.f32 %v759, %v222
        %v1272 = vsel %vm457, %v1270, 0
        %1274 = vmatprep.subr.mxu0 0.0
        %1275 = vmatpush1.xpose.msra.mxu0 %v769
        %1276 = vmatprep.subr.mxu0 0.0
        %1277 = vmatpush1.xpose.msra.mxu0 0.0
        %1278 = vmatprep.subr.mxu0 0.0
        %1279 = vmatpush1.xpose.msra.mxu0 0.0
        %1280 = vmatprep.subr.mxu0 0.0
        %1281 = vmatpush1.xpose.msra.mxu0 0.0
        %1282 = vmatprep.subr.mxu0 0.0
        %1283 = vmatpush1.xpose.msra.mxu0 0.0
        %1284 = vmatprep.subr.mxu0 0.0
        %1285 = vmatpush1.xpose.msra.mxu0 0.0
        %1286 = vmatprep.subr.mxu0 0.0
        %1287 = vmatpush1.xpose.msra.mxu0 0.0
        %1288 = vmatprep.subr.mxu0 0.0
        %1289 = vmatpush1.xpose.msra.mxu0 0.0
        %1290 = vmatprep.subr.mxu0 0.0
        %1291 = vmatpush1.xpose.msra.mxu0 0.0
        %1292 = vmatprep.subr.mxu0 0.0
        %1293 = vmatpush1.xpose.msra.mxu0 0.0
        %1294 = vmatprep.subr.mxu0 0.0
        %1295 = vmatpush1.xpose.msra.mxu0 0.0
        %1296 = vmatprep.subr.mxu0 0.0
        %1297 = vmatpush1.xpose.msra.mxu0 0.0
        %1298 = vmatprep.subr.mxu0 0.0
        %1299 = vmatpush1.xpose.msra.mxu0 0.0
        %1300 = vmatprep.subr.mxu0 0.0
        %1301 = vmatpush1.xpose.msra.mxu0 0.0
        %1302 = vmatprep.subr.mxu0 0.0
        %1303 = vmatpush1.xpose.msra.mxu0 0.0
        %1304 = vmatprep.subr.mxu0 0.0
        %1305 = vmatpush1.xpose.msra.mxu0 0.0
        %1306 = vmatprep.subr.mxu0 0.0
        %1307 = vmatpush1.xpose.msra.mxu0 0.0
        %1308 = vmatprep.subr.mxu0 0.0
        %1309 = vmatpush1.xpose.msra.mxu0 0.0
        %1310 = vmatprep.subr.mxu0 0.0
        %1311 = vmatpush1.xpose.msra.mxu0 0.0
        %1312 = vmatprep.subr.mxu0 0.0
        %1313 = vmatpush1.xpose.msra.mxu0 0.0
        %1314 = vmatprep.subr.mxu0 0.0
        %1315 = vmatpush1.xpose.msra.mxu0 0.0
        %1316 = vmatprep.subr.mxu0 0.0
        %1317 = vmatpush1.xpose.msra.mxu0 0.0
        %1318 = vmatprep.subr.mxu0 0.0
        %1319 = vmatpush1.xpose.msra.mxu0 0.0
        %1320 = vmatprep.subr.mxu0 0.0
        %1321 = vmatpush1.xpose.msra.mxu0 0.0
        %1322 = vmatprep.subr.mxu0 0.0
        %1323 = vmatpush1.xpose.msra.mxu0 0.0
        %1324 = vmatprep.subr.mxu0 0.0
        %1325 = vmatpush1.xpose.msra.mxu0 0.0
        %1326 = vmatprep.subr.mxu0 0.0
        %1327 = vmatpush1.xpose.msra.mxu0 0.0
        %1328 = vmatprep.subr.mxu0 0.0
        %1329 = vmatpush1.xpose.msra.mxu0 0.0
        %1330 = vmatprep.subr.mxu0 0.0
        %1331 = vmatpush1.xpose.msra.mxu0 0.0
        %1332 = vmatprep.subr.mxu0 0.0
        %1333 = vmatpush1.xpose.msra.mxu0 0.0
        %1334 = vmatprep.subr.mxu0 0.0
        %1335 = vmatpush1.xpose.msra.mxu0 0.0
        %1336 = vmatprep.subr.mxu0 0.0
        %1337 = vmatpush1.xpose.msra.mxu0 0.0
        %1338 = vmatprep.mubr.f32.mxu0 0.0
        %1339 = vmatmul.mubr.f32.gmra.mrb[0].mxu0 %v1272
        %v1340 = vpop.f32.mrb[0].mxu0
        %v1341 = vadd.f32 0.0, %v1340
        %v1342 = vpop.f32.mrb[0].mxu0
        %1343 = vdwg.mxu0
        %v1344 = vsel %vm841, %v1341, -inf
        %1345 = vmax.xlane.f32.xlu0 %v1344
        %v1346 = vpop.xlane.xlu0 %1345
        %v1347 = vsub.f32 %v1341, %v1346
        %v1348 = vmul.f32 %v1347, 1.442695
        %v1349 = vpow.pop %v1348
        %v1350 = vsel %vm841, %v1349, 0.0
        %1351 = vadd.xlane.f32.xlu0 %v1350
        %v1352 = vpop.xlane.xlu0 %1351
        %v1353 = vrcp.pop %v1352
        %v1354 = vmul.f32 %v1349, %v1353
        %1356 = vrot.lane.b32.xlu0 %v222, 64
        %v1357 = vpop.permute.xlu0 %1356
        %v1359 = vmul.f32 %v759, %v1357
        %1361 = vrot.lane.b32.xlu0 %v1359, 64
        %v1362 = vpop.permute.xlu0 %1361
        %v1365 = vsel %vm841, %v1354, 0
        %1367 = vmatprep.subr.mxu0 0.0
        %1368 = vmatpush1.msra.mxu0 %v1362
        %1369 = vmatprep.subr.mxu0 0.0
        %1370 = vmatpush1.msra.mxu0 0.0
        %1371 = vmatprep.subr.mxu0 0.0
        %1372 = vmatpush1.msra.mxu0 0.0
        %1373 = vmatprep.subr.mxu0 0.0
        %1374 = vmatpush1.msra.mxu0 0.0
        %1375 = vmatprep.subr.mxu0 0.0
        %1376 = vmatpush1.msra.mxu0 0.0
        %1377 = vmatprep.subr.mxu0 0.0
        %1378 = vmatpush1.msra.mxu0 0.0
        %1379 = vmatprep.subr.mxu0 0.0
        %1380 = vmatpush1.msra.mxu0 0.0
        %1381 = vmatprep.subr.mxu0 0.0
        %1382 = vmatpush1.msra.mxu0 0.0
        %1383 = vmatprep.subr.mxu0 0.0
        %1384 = vmatpush1.msra.mxu0 0.0
        %1385 = vmatprep.subr.mxu0 0.0
        %1386 = vmatpush1.msra.mxu0 0.0
        %1387 = vmatprep.subr.mxu0 0.0
        %1388 = vmatpush1.msra.mxu0 0.0
        %1389 = vmatprep.subr.mxu0 0.0
        %1390 = vmatpush1.msra.mxu0 0.0
        %1391 = vmatprep.subr.mxu0 0.0
        %1392 = vmatpush1.msra.mxu0 0.0
        %1393 = vmatprep.subr.mxu0 0.0
        %1394 = vmatpush1.msra.mxu0 0.0
        %1395 = vmatprep.subr.mxu0 0.0
        %1396 = vmatpush1.msra.mxu0 0.0
        %1397 = vmatprep.subr.mxu0 0.0
        %1398 = vmatpush1.msra.mxu0 0.0
        %1399 = vmatprep.subr.mxu0 0.0
        %1400 = vmatpush1.msra.mxu0 0.0
        %1401 = vmatprep.subr.mxu0 0.0
        %1402 = vmatpush1.msra.mxu0 0.0
        %1403 = vmatprep.subr.mxu0 0.0
        %1404 = vmatpush1.msra.mxu0 0.0
        %1405 = vmatprep.subr.mxu0 0.0
        %1406 = vmatpush1.msra.mxu0 0.0
        %1407 = vmatprep.subr.mxu0 0.0
        %1408 = vmatpush1.msra.mxu0 0.0
        %1409 = vmatprep.subr.mxu0 0.0
        %1410 = vmatpush1.msra.mxu0 0.0
        %1411 = vmatprep.subr.mxu0 0.0
        %1412 = vmatpush1.msra.mxu0 0.0
        %1413 = vmatprep.subr.mxu0 0.0
        %1414 = vmatpush1.msra.mxu0 0.0
        %1415 = vmatprep.subr.mxu0 0.0
        %1416 = vmatpush1.msra.mxu0 0.0
        %1417 = vmatprep.subr.mxu0 0.0
        %1418 = vmatpush1.msra.mxu0 0.0
        %1419 = vmatprep.subr.mxu0 0.0
        %1420 = vmatpush1.msra.mxu0 0.0
        %1421 = vmatprep.subr.mxu0 0.0
        %1422 = vmatpush1.msra.mxu0 0.0
        %1423 = vmatprep.subr.mxu0 0.0
        %1424 = vmatpush1.msra.mxu0 0.0
        %1425 = vmatprep.subr.mxu0 0.0
        %1426 = vmatpush1.msra.mxu0 0.0
        %1427 = vmatprep.subr.mxu0 0.0
        %1428 = vmatpush1.msra.mxu0 0.0
        %1429 = vmatprep.subr.mxu0 0.0
        %1430 = vmatpush1.msra.mxu0 0.0
        %1431 = vmatprep.mubr.f32.mxu0 0.0
        %1432 = vmatmul.mubr.f32.gmra.mrb[0].mxu0 %v1365
        %v1433 = vpop.f32.mrb[0].mxu0
        %v1434 = vadd.f32 0.0, %v1433
        %v1435 = vpop.f32.mrb[0].mxu0
        %1436 = vdwg.mxu0
        %v1437 = vadd.f32 %v1269, %v1434
        %v1438 = vld [vmem:[#allocation2 + $0x80] sm:$0xff]
        %v1439 = vld [vmem:[#allocation2 + $0x88] sm:$0xff]
        %v1440 = vld [vmem:[#allocation2 + $0x90] sm:$0xff]
        %v1441 = vld [vmem:[#allocation2 + $0x98] sm:$0xff]
        %v1442 = vld [vmem:[#allocation2 + $0xa0] sm:$0x1]
        %v1443 = vlaneseq
        %v1444 = vshrl.u32 %v1443, 7
        %v1445 = vsub.s32 0, %v1444
        %v1446 = vrot.slane %v1442, %v1445
        %v1448 = vsel %vm457, %v1437, 0
        %1450 = vmatprep.subr.mxu0 0.0
        %1451 = vmatpush1.msra.mxu0 %v1438
        %1452 = vmatprep.subr.mxu0 0.0
        %1453 = vmatpush1.msra.mxu0 %v1439
        %1454 = vmatprep.subr.mxu0 0.0
        %1455 = vmatpush1.msra.mxu0 %v1440
        %1456 = vmatprep.subr.mxu0 0.0
        %1457 = vmatpush1.msra.mxu0 %v1441
        %1458 = vmatprep.subr.mxu0 0.0
        %1459 = vmatpush1.msra.mxu0 0.0
        %1460 = vmatprep.subr.mxu0 0.0
        %1461 = vmatpush1.msra.mxu0 0.0
        %1462 = vmatprep.subr.mxu0 0.0
        %1463 = vmatpush1.msra.mxu0 0.0
        %1464 = vmatprep.subr.mxu0 0.0
        %1465 = vmatpush1.msra.mxu0 0.0
        %1466 = vmatprep.subr.mxu0 0.0
        %1467 = vmatpush1.msra.mxu0 0.0
        %1468 = vmatprep.subr.mxu0 0.0
        %1469 = vmatpush1.msra.mxu0 0.0
        %1470 = vmatprep.subr.mxu0 0.0
        %1471 = vmatpush1.msra.mxu0 0.0
        %1472 = vmatprep.subr.mxu0 0.0
        %1473 = vmatpush1.msra.mxu0 0.0
        %1474 = vmatprep.subr.mxu0 0.0
        %1475 = vmatpush1.msra.mxu0 0.0
        %1476 = vmatprep.subr.mxu0 0.0
        %1477 = vmatpush1.msra.mxu0 0.0
        %1478 = vmatprep.subr.mxu0 0.0
        %1479 = vmatpush1.msra.mxu0 0.0
        %1480 = vmatprep.subr.mxu0 0.0
        %1481 = vmatpush1.msra.mxu0 0.0
        %1482 = vmatprep.subr.mxu0 0.0
        %1483 = vmatpush1.msra.mxu0 0.0
        %1484 = vmatprep.subr.mxu0 0.0
        %1485 = vmatpush1.msra.mxu0 0.0
        %1486 = vmatprep.subr.mxu0 0.0
        %1487 = vmatpush1.msra.mxu0 0.0
        %1488 = vmatprep.subr.mxu0 0.0
        %1489 = vmatpush1.msra.mxu0 0.0
        %1490 = vmatprep.subr.mxu0 0.0
        %1491 = vmatpush1.msra.mxu0 0.0
        %1492 = vmatprep.subr.mxu0 0.0
        %1493 = vmatpush1.msra.mxu0 0.0
        %1494 = vmatprep.subr.mxu0 0.0
        %1495 = vmatpush1.msra.mxu0 0.0
        %1496 = vmatprep.subr.mxu0 0.0
        %1497 = vmatpush1.msra.mxu0 0.0
        %1498 = vmatprep.subr.mxu0 0.0
        %1499 = vmatpush1.msra.mxu0 0.0
        %1500 = vmatprep.subr.mxu0 0.0
        %1501 = vmatpush1.msra.mxu0 0.0
        %1502 = vmatprep.subr.mxu0 0.0
        %1503 = vmatpush1.msra.mxu0 0.0
        %1504 = vmatprep.subr.mxu0 0.0
        %1505 = vmatpush1.msra.mxu0 0.0
        %1506 = vmatprep.subr.mxu0 0.0
        %1507 = vmatpush1.msra.mxu0 0.0
        %1508 = vmatprep.subr.mxu0 0.0
        %1509 = vmatpush1.msra.mxu0 0.0
        %1510 = vmatprep.subr.mxu0 0.0
        %1511 = vmatpush1.msra.mxu0 0.0
        %1512 = vmatprep.subr.mxu0 0.0
        %1513 = vmatpush1.msra.mxu0 0.0
        %1514 = vmatprep.mubr.f32.mxu0 0.0
        %1515 = vmatmul.mubr.f32.gmra.mrb[0].mxu0 %v1448
        %v1516 = vpop.f32.mrb[0].mxu0
        %v1517 = vadd.f32 %v1446, %v1516
        %v1518 = vpop.f32.mrb[0].mxu0
        %1519 = vdwg.mxu0
        %v1520 = vadd.f32 %v653, %v1517
        %v1521 = vsel %vm457, %v1520, 0.0
        %1522 = vadd.xlane.f32.xlu0 %v1521
        %v1523 = vpop.xlane.xlu0 %1522
        %v1524 = vmul.f32 %v1523, %v657
        %v1525 = vsub.f32 %v1520, %v1524
        %v1526 = vmul.f32 %v1525, %v1525
        %v1527 = vsel %vm457, %v1526, 0.0
        %1528 = vadd.xlane.f32.xlu0 %v1527
        %v1529 = vpop.xlane.xlu0 %1528
        %v1530 = vmul.f32 %v1529, %v657
        %v1531 = vadd.f32 %v1530, 1e-05
        %v1532 = vrsqrt.pop %v1531
        %v1533 = vmul.f32 %v1525, %v1532
        %v1534 = vld [vmem:[#allocation2 + $0xa8] sm:$0x1]
        %v1535 = vlaneseq
        %v1536 = vshrl.u32 %v1535, 7
        %v1537 = vsub.s32 0, %v1536
        %v1538 = vrot.slane %v1534, %v1537
        %v1539 = vmul.f32 %v1533, %v1538
        %v1540 = vld [vmem:[#allocation2 + $0xb0] sm:$0x1]
        %v1541 = vlaneseq
        %v1542 = vshrl.u32 %v1541, 7
        %v1543 = vsub.s32 0, %v1542
        %v1544 = vrot.slane %v1540, %v1543
        %v1545 = vadd.f32 %v1539, %v1544
        %v1546 = vld [vmem:[#allocation2 + $0xb8] sm:$0xff]
        %v1547 = vld [vmem:[#allocation2 + $0xc0] sm:$0xff]
        %v1548 = vld [vmem:[#allocation2 + $0xc8] sm:$0xff]
        %v1549 = vld [vmem:[#allocation2 + $0xd0] sm:$0xff]
        %v1550 = vld [vmem:[#allocation2 + $0xd8] sm:$0x1]
        %v1551 = vlaneseq
        %v1552 = vshrl.u32 %v1551, 7
        %v1553 = vsub.s32 0, %v1552
        %v1554 = vrot.slane %v1550, %v1553
        %v1556 = vsel %vm457, %v1545, 0
        %1558 = vmatprep.subr.mxu0 0.0
        %1559 = vmatpush1.msra.mxu0 %v1546
        %1560 = vmatprep.subr.mxu0 0.0
        %1561 = vmatpush1.msra.mxu0 %v1547
        %1562 = vmatprep.subr.mxu0 0.0
        %1563 = vmatpush1.msra.mxu0 %v1548
        %1564 = vmatprep.subr.mxu0 0.0
        %1565 = vmatpush1.msra.mxu0 %v1549
        %1566 = vmatprep.subr.mxu0 0.0
        %1567 = vmatpush1.msra.mxu0 0.0
        %1568 = vmatprep.subr.mxu0 0.0
        %1569 = vmatpush1.msra.mxu0 0.0
        %1570 = vmatprep.subr.mxu0 0.0
        %1571 = vmatpush1.msra.mxu0 0.0
        %1572 = vmatprep.subr.mxu0 0.0
        %1573 = vmatpush1.msra.mxu0 0.0
        %1574 = vmatprep.subr.mxu0 0.0
        %1575 = vmatpush1.msra.mxu0 0.0
        %1576 = vmatprep.subr.mxu0 0.0
        %1577 = vmatpush1.msra.mxu0 0.0
        %1578 = vmatprep.subr.mxu0 0.0
        %1579 = vmatpush1.msra.mxu0 0.0
        %1580 = vmatprep.subr.mxu0 0.0
        %1581 = vmatpush1.msra.mxu0 0.0
        %1582 = vmatprep.subr.mxu0 0.0
        %1583 = vmatpush1.msra.mxu0 0.0
        %1584 = vmatprep.subr.mxu0 0.0
        %1585 = vmatpush1.msra.mxu0 0.0
        %1586 = vmatprep.subr.mxu0 0.0
        %1587 = vmatpush1.msra.mxu0 0.0
        %1588 = vmatprep.subr.mxu0 0.0
        %1589 = vmatpush1.msra.mxu0 0.0
        %1590 = vmatprep.subr.mxu0 0.0
        %1591 = vmatpush1.msra.mxu0 0.0
        %1592 = vmatprep.subr.mxu0 0.0
        %1593 = vmatpush1.msra.mxu0 0.0
        %1594 = vmatprep.subr.mxu0 0.0
        %1595 = vmatpush1.msra.mxu0 0.0
        %1596 = vmatprep.subr.mxu0 0.0
        %1597 = vmatpush1.msra.mxu0 0.0
        %1598 = vmatprep.subr.mxu0 0.0
        %1599 = vmatpush1.msra.mxu0 0.0
        %1600 = vmatprep.subr.mxu0 0.0
        %1601 = vmatpush1.msra.mxu0 0.0
        %1602 = vmatprep.subr.mxu0 0.0
        %1603 = vmatpush1.msra.mxu0 0.0
        %1604 = vmatprep.subr.mxu0 0.0
        %1605 = vmatpush1.msra.mxu0 0.0
        %1606 = vmatprep.subr.mxu0 0.0
        %1607 = vmatpush1.msra.mxu0 0.0
        %1608 = vmatprep.subr.mxu0 0.0
        %1609 = vmatpush1.msra.mxu0 0.0
        %1610 = vmatprep.subr.mxu0 0.0
        %1611 = vmatpush1.msra.mxu0 0.0
        %1612 = vmatprep.subr.mxu0 0.0
        %1613 = vmatpush1.msra.mxu0 0.0
        %1614 = vmatprep.subr.mxu0 0.0
        %1615 = vmatpush1.msra.mxu0 0.0
        %1616 = vmatprep.subr.mxu0 0.0
        %1617 = vmatpush1.msra.mxu0 0.0
        %1618 = vmatprep.subr.mxu0 0.0
        %1619 = vmatpush1.msra.mxu0 0.0
        %1620 = vmatprep.subr.mxu0 0.0
        %1621 = vmatpush1.msra.mxu0 0.0
        %1622 = vmatprep.mubr.f32.mxu0 0.0
        %1623 = vmatmul.mubr.f32.gmra.mrb[0].mxu0 %v1556
        %v1624 = vpop.f32.mrb[0].mxu0
        %v1625 = vadd.f32 %v1554, %v1624
        %v1626 = vpop.f32.mrb[0].mxu0
        %1627 = vdwg.mxu0
        %v1628 = vmul.f32 %v1625, %v1625
        %v1629 = vmul.f32 %v1625, %v1628
        %v1630 = vmul.f32 %v1629, 0.044715
        %v1631 = vadd.f32 %v1625, %v1630
        %v1632 = vmul.f32 %v1631, 0.7978846
        %v1633 = vtanh.pop %v1632
        %v1634 = vadd.f32 %v1633, 1.0
        %v1635 = vmul.f32 %v1634, 0.5
        %v1636 = vmul.f32 %v1625, %v1635
        %v1637 = vld [vmem:[#allocation2 + $0xe0] sm:$0xff]
        %v1638 = vld [vmem:[#allocation2 + $0xe8] sm:$0xff]
        %v1639 = vld [vmem:[#allocation2 + $0xf0] sm:$0xff]
        %v1640 = vld [vmem:[#allocation2 + $0xf8] sm:$0xff]
        %v1641 = vld [vmem:[#allocation2 + $0x100] sm:$0xff]
        %v1642 = vld [vmem:[#allocation2 + $0x108] sm:$0xff]
        %v1643 = vld [vmem:[#allocation2 + $0x110] sm:$0xff]
        %v1644 = vld [vmem:[#allocation2 + $0x118] sm:$0xff]
        %v1645 = vld [vmem:[#allocation2 + $0x120] sm:$0x1]
        %v1646 = vlaneseq
        %v1647 = vshrl.u32 %v1646, 7
        %v1648 = vsub.s32 0, %v1647
        %v1649 = vrot.slane %v1645, %v1648
        %vm1650 = vcmask 523264
        %v1652 = vsel %vm1650, %v1636, 0
        %1654 = vmatprep.subr.mxu0 0.0
        %1655 = vmatpush1.msra.mxu0 %v1637
        %1656 = vmatprep.subr.mxu0 0.0
        %1657 = vmatpush1.msra.mxu0 %v1638
        %1658 = vmatprep.subr.mxu0 0.0
        %1659 = vmatpush1.msra.mxu0 %v1639
        %1660 = vmatprep.subr.mxu0 0.0
        %1661 = vmatpush1.msra.mxu0 %v1640
        %1662 = vmatprep.subr.mxu0 0.0
        %1663 = vmatpush1.msra.mxu0 %v1641
        %1664 = vmatprep.subr.mxu0 0.0
        %1665 = vmatpush1.msra.mxu0 %v1642
        %1666 = vmatprep.subr.mxu0 0.0
        %1667 = vmatpush1.msra.mxu0 %v1643
        %1668 = vmatprep.subr.mxu0 0.0
        %1669 = vmatpush1.msra.mxu0 %v1644
        %1670 = vmatprep.subr.mxu0 0.0
        %1671 = vmatpush1.msra.mxu0 0.0
        %1672 = vmatprep.subr.mxu0 0.0
        %1673 = vmatpush1.msra.mxu0 0.0
        %1674 = vmatprep.subr.mxu0 0.0
        %1675 = vmatpush1.msra.mxu0 0.0
        %1676 = vmatprep.subr.mxu0 0.0
        %1677 = vmatpush1.msra.mxu0 0.0
        %1678 = vmatprep.subr.mxu0 0.0
        %1679 = vmatpush1.msra.mxu0 0.0
        %1680 = vmatprep.subr.mxu0 0.0
        %1681 = vmatpush1.msra.mxu0 0.0
        %1682 = vmatprep.subr.mxu0 0.0
        %1683 = vmatpush1.msra.mxu0 0.0
        %1684 = vmatprep.subr.mxu0 0.0
        %1685 = vmatpush1.msra.mxu0 0.0
        %1686 = vmatprep.subr.mxu0 0.0
        %1687 = vmatpush1.msra.mxu0 0.0
        %1688 = vmatprep.subr.mxu0 0.0
        %1689 = vmatpush1.msra.mxu0 0.0
        %1690 = vmatprep.subr.mxu0 0.0
        %1691 = vmatpush1.msra.mxu0 0.0
        %1692 = vmatprep.subr.mxu0 0.0
        %1693 = vmatpush1.msra.mxu0 0.0
        %1694 = vmatprep.subr.mxu0 0.0
        %1695 = vmatpush1.msra.mxu0 0.0
        %1696 = vmatprep.subr.mxu0 0.0
        %1697 = vmatpush1.msra.mxu0 0.0
        %1698 = vmatprep.subr.mxu0 0.0
        %1699 = vmatpush1.msra.mxu0 0.0
        %1700 = vmatprep.subr.mxu0 0.0
        %1701 = vmatpush1.msra.mxu0 0.0
        %1702 = vmatprep.subr.mxu0 0.0
        %1703 = vmatpush1.msra.mxu0 0.0
        %1704 = vmatprep.subr.mxu0 0.0
        %1705 = vmatpush1.msra.mxu0 0.0
        %1706 = vmatprep.subr.mxu0 0.0
        %1707 = vmatpush1.msra.mxu0 0.0
        %1708 = vmatprep.subr.mxu0 0.0
        %1709 = vmatpush1.msra.mxu0 0.0
        %1710 = vmatprep.subr.mxu0 0.0
        %1711 = vmatpush1.msra.mxu0 0.0
        %1712 = vmatprep.subr.mxu0 0.0
        %1713 = vmatpush1.msra.mxu0 0.0
        %1714 = vmatprep.subr.mxu0 0.0
        %1715 = vmatpush1.msra.mxu0 0.0
        %1716 = vmatprep.subr.mxu0 0.0
        %1717 = vmatpush1.msra.mxu0 0.0
        %1718 = vmatprep.mubr.f32.mxu0 0.0
        %1719 = vmatmul.mubr.f32.gmra.mrb[0].mxu0 %v1652
        %v1720 = vpop.f32.mrb[0].mxu0
        %v1721 = vadd.f32 %v1649, %v1720
        %v1722 = vpop.f32.mrb[0].mxu0
        %1723 = vdwg.mxu0
        %v1724 = vadd.f32 %v1520, %v1721
        %v1725 = vsel %vm457, %v1724, 0.0
        %1726 = vadd.xlane.f32.xlu0 %v1725
        %v1727 = vpop.xlane.xlu0 %1726
        %v1728 = vmul.f32 %v1727, %v657
        %v1729 = vsub.f32 %v1724, %v1728
        %v1730 = vmul.f32 %v1729, %v1729
        %v1731 = vsel %vm457, %v1730, 0.0
        %1732 = vadd.xlane.f32.xlu0 %v1731
        %v1733 = vpop.xlane.xlu0 %1732
        %v1734 = vmul.f32 %v1733, %v657
        %v1735 = vadd.f32 %v1734, 1e-05
        %v1736 = vrsqrt.pop %v1735
        %v1737 = vmul.f32 %v1729, %v1736
        %v1738 = vld [vmem:[#allocation2 + $0x128] sm:$0x1]
        %v1739 = vlaneseq
        %v1740 = vshrl.u32 %v1739, 7
        %v1741 = vsub.s32 0, %v1740
        %v1742 = vrot.slane %v1738, %v1741
        %v1743 = vmul.f32 %v1737, %v1742
        %v1744 = vld [vmem:[#allocation2 + $0x130] sm:$0x1]
        %v1745 = vlaneseq
        %v1746 = vshrl.u32 %v1745, 7
        %v1747 = vsub.s32 0, %v1746
        %v1748 = vrot.slane %v1744, %v1747
        %v1749 = vadd.f32 %v1743, %v1748
        %v1750 = vld [vmem:[%s196] sm:$0xff]
        %1751 = vset.pattern.permute.xlu0 0
        %1752 = vperm.xlu0 %1751, %v1750
        %v1753 = vpop.permute.xlu0 %1752
        %vm1754 = vcmp.eq.s32.totalorder %v202, %v1753
        %v1755 = vsel %vm1754, 1, 0
        %v1756 = vcvt.s32.f32 %v1755
        %v1757 = vld [vmem:[#allocation2 + $0x138] sm:$0xff]
        %v1758 = vld [vmem:[#allocation2 + $0x140] sm:$0xff]
        %v1759 = vld [vmem:[#allocation2 + $0x148] sm:$0xff]
        %v1760 = vld [vmem:[#allocation2 + $0x150] sm:$0xff]
        %v1761 = vld [vmem:[#allocation2 + $0x158] sm:$0xff]
        %v1762 = vld [vmem:[#allocation2 + $0x160] sm:$0xff]
        %v1763 = vld [vmem:[#allocation2 + $0x168] sm:$0xff]
        %v1764 = vld [vmem:[#allocation2 + $0x170] sm:$0xff]
        %v1765 = vld [vmem:[#allocation2 + $0x178] sm:$0xff]
        %v1767 = vsel %vm1650, %v1756, 0
        %1769 = vmatprep.subr.mxu0 0.0
        %1770 = vmatpush1.msra.mxu0 %v1757
        %1771 = vmatprep.subr.mxu0 0.0
        %1772 = vmatpush1.msra.mxu0 %v1758
        %1773 = vmatprep.subr.mxu0 0.0
        %1774 = vmatpush1.msra.mxu0 %v1759
        %1775 = vmatprep.subr.mxu0 0.0
        %1776 = vmatpush1.msra.mxu0 %v1760
        %1777 = vmatprep.subr.mxu0 0.0
        %1778 = vmatpush1.msra.mxu0 %v1761
        %1779 = vmatprep.subr.mxu0 0.0
        %1780 = vmatpush1.msra.mxu0 %v1762
        %1781 = vmatprep.subr.mxu0 0.0
        %1782 = vmatpush1.msra.mxu0 %v1763
        %1783 = vmatprep.subr.mxu0 0.0
        %1784 = vmatpush1.msra.mxu0 %v1764
        %1785 = vmatprep.subr.mxu0 0.0
        %1786 = vmatpush1.msra.mxu0 0.0
        %1787 = vmatprep.subr.mxu0 0.0
        %1788 = vmatpush1.msra.mxu0 0.0
        %1789 = vmatprep.subr.mxu0 0.0
        %1790 = vmatpush1.msra.mxu0 0.0
        %1791 = vmatprep.subr.mxu0 0.0
        %1792 = vmatpush1.msra.mxu0 0.0
        %1793 = vmatprep.subr.mxu0 0.0
        %1794 = vmatpush1.msra.mxu0 0.0
        %1795 = vmatprep.subr.mxu0 0.0
        %1796 = vmatpush1.msra.mxu0 0.0
        %1797 = vmatprep.subr.mxu0 0.0
        %1798 = vmatpush1.msra.mxu0 0.0
        %1799 = vmatprep.subr.mxu0 0.0
        %1800 = vmatpush1.msra.mxu0 0.0
        %1801 = vmatprep.subr.mxu0 0.0
        %1802 = vmatpush1.msra.mxu0 0.0
        %1803 = vmatprep.subr.mxu0 0.0
        %1804 = vmatpush1.msra.mxu0 0.0
        %1805 = vmatprep.subr.mxu0 0.0
        %1806 = vmatpush1.msra.mxu0 0.0
        %1807 = vmatprep.subr.mxu0 0.0
        %1808 = vmatpush1.msra.mxu0 0.0
        %1809 = vmatprep.subr.mxu0 0.0
        %1810 = vmatpush1.msra.mxu0 0.0
        %1811 = vmatprep.subr.mxu0 0.0
        %1812 = vmatpush1.msra.mxu0 0.0
        %1813 = vmatprep.subr.mxu0 0.0
        %1814 = vmatpush1.msra.mxu0 0.0
        %1815 = vmatprep.subr.mxu0 0.0
        %1816 = vmatpush1.msra.mxu0 0.0
        %1817 = vmatprep.subr.mxu0 0.0
        %1818 = vmatpush1.msra.mxu0 0.0
        %1819 = vmatprep.subr.mxu0 0.0
        %1820 = vmatpush1.msra.mxu0 0.0
        %1821 = vmatprep.subr.mxu0 0.0
        %1822 = vmatpush1.msra.mxu0 0.0
        %1823 = vmatprep.subr.mxu0 0.0
        %1824 = vmatpush1.msra.mxu0 0.0
        %1825 = vmatprep.subr.mxu0 0.0
        %1826 = vmatpush1.msra.mxu0 0.0
        %1827 = vmatprep.subr.mxu0 0.0
        %1828 = vmatpush1.msra.mxu0 0.0
        %1829 = vmatprep.subr.mxu0 0.0
        %1830 = vmatpush1.msra.mxu0 0.0
        %1831 = vmatprep.subr.mxu0 0.0
        %1832 = vmatpush1.msra.mxu0 0.0
        %1833 = vmatprep.mubr.f32.mxu0 0.0
        %1834 = vmatmul.mubr.f32.gmra.mrb[0].mxu0 %v1767
        %v1835 = vpop.f32.mrb[0].mxu0
        %v1836 = vadd.f32 %v1765, %v1835
        %v1837 = vpop.f32.mrb[0].mxu0
        %1838 = vdwg.mxu0
        %vm1839 = vcmp.le.s32.totalorder %v202, %v324
        %v1840 = vsel %vm1839, 0.0, -1e+09
        %v1841 = vsel %vm457, %v1836, 0.0
        %1842 = vadd.xlane.f32.xlu0 %v1841
        %v1843 = vpop.xlane.xlu0 %1842
        %v1844 = vmul.f32 %v1843, %v657
        %v1845 = vsub.f32 %v1836, %v1844
        %v1846 = vmul.f32 %v1845, %v1845
        %v1847 = vsel %vm457, %v1846, 0.0
        %1848 = vadd.xlane.f32.xlu0 %v1847
        %v1849 = vpop.xlane.xlu0 %1848
        %v1850 = vmul.f32 %v1849, %v657
        %v1851 = vadd.f32 %v1850, 1e-05
        %v1852 = vrsqrt.pop %v1851
        %v1853 = vmul.f32 %v1845, %v1852
        %v1854 = vld [vmem:[#allocation2 + $0x180] sm:$0x1]
        %v1855 = vlaneseq
        %v1856 = vshrl.u32 %v1855, 7
        %v1857 = vsub.s32 0, %v1856
        %v1858 = vrot.slane %v1854, %v1857
        %v1859 = vmul.f32 %v1853, %v1858
        %v1860 = vld [vmem:[#allocation2 + $0x188] sm:$0x1]
        %v1861 = vlaneseq
        %v1862 = vshrl.u32 %v1861, 7
        %v1863 = vsub.s32 0, %v1862
        %v1864 = vrot.slane %v1860, %v1863
        %v1865 = vadd.f32 %v1859, %v1864
        %v1866 = vld [vmem:[#allocation2 + $0x190] sm:$0xff]
        %v1867 = vld [vmem:[#allocation2 + $0x198] sm:$0xff]
        %v1868 = vld [vmem:[#allocation2 + $0x1a0] sm:$0xff]
        %v1869 = vld [vmem:[#allocation2 + $0x1a8] sm:$0xff]
        %v1870 = vld [vmem:[#allocation2 + $0x1b0] sm:$0x1]
        %v1871 = vlaneseq
        %v1872 = vshrl.u32 %v1871, 7
        %v1873 = vsub.s32 0, %v1872
        %v1874 = vrot.slane %v1870, %v1873
        %v1876 = vsel %vm457, %v1865, 0
        %1878 = vmatprep.subr.mxu0 0.0
        %1879 = vmatpush1.msra.mxu0 %v1866
        %1880 = vmatprep.subr.mxu0 0.0
        %1881 = vmatpush1.msra.mxu0 %v1867
        %1882 = vmatprep.subr.mxu0 0.0
        %1883 = vmatpush1.msra.mxu0 %v1868
        %1884 = vmatprep.subr.mxu0 0.0
        %1885 = vmatpush1.msra.mxu0 %v1869
        %1886 = vmatprep.subr.mxu0 0.0
        %1887 = vmatpush1.msra.mxu0 0.0
        %1888 = vmatprep.subr.mxu0 0.0
        %1889 = vmatpush1.msra.mxu0 0.0
        %1890 = vmatprep.subr.mxu0 0.0
        %1891 = vmatpush1.msra.mxu0 0.0
        %1892 = vmatprep.subr.mxu0 0.0
        %1893 = vmatpush1.msra.mxu0 0.0
        %1894 = vmatprep.subr.mxu0 0.0
        %1895 = vmatpush1.msra.mxu0 0.0
        %1896 = vmatprep.subr.mxu0 0.0
        %1897 = vmatpush1.msra.mxu0 0.0
        %1898 = vmatprep.subr.mxu0 0.0
        %1899 = vmatpush1.msra.mxu0 0.0
        %1900 = vmatprep.subr.mxu0 0.0
        %1901 = vmatpush1.msra.mxu0 0.0
        %1902 = vmatprep.subr.mxu0 0.0
        %1903 = vmatpush1.msra.mxu0 0.0
        %1904 = vmatprep.subr.mxu0 0.0
        %1905 = vmatpush1.msra.mxu0 0.0
        %1906 = vmatprep.subr.mxu0 0.0
        %1907 = vmatpush1.msra.mxu0 0.0
        %1908 = vmatprep.subr.mxu0 0.0
        %1909 = vmatpush1.msra.mxu0 0.0
        %1910 = vmatprep.subr.mxu0 0.0
        %1911 = vmatpush1.msra.mxu0 0.0
        %1912 = vmatprep.subr.mxu0 0.0
        %1913 = vmatpush1.msra.mxu0 0.0
        %1914 = vmatprep.subr.mxu0 0.0
        %1915 = vmatpush1.msra.mxu0 0.0
        %1916 = vmatprep.subr.mxu0 0.0
        %1917 = vmatpush1.msra.mxu0 0.0
        %1918 = vmatprep.subr.mxu0 0.0
        %1919 = vmatpush1.msra.mxu0 0.0
        %1920 = vmatprep.subr.mxu0 0.0
        %1921 = vmatpush1.msra.mxu0 0.0
        %1922 = vmatprep.subr.mxu0 0.0
        %1923 = vmatpush1.msra.mxu0 0.0
        %1924 = vmatprep.subr.mxu0 0.0
        %1925 = vmatpush1.msra.mxu0 0.0
        %1926 = vmatprep.subr.mxu0 0.0
        %1927 = vmatpush1.msra.mxu0 0.0
        %1928 = vmatprep.subr.mxu0 0.0
        %1929 = vmatpush1.msra.mxu0 0.0
        %1930 = vmatprep.subr.mxu0 0.0
        %1931 = vmatpush1.msra.mxu0 0.0
        %1932 = vmatprep.subr.mxu0 0.0
        %1933 = vmatpush1.msra.mxu0 0.0
        %1934 = vmatprep.subr.mxu0 0.0
        %1935 = vmatpush1.msra.mxu0 0.0
        %1936 = vmatprep.subr.mxu0 0.0
        %1937 = vmatpush1.msra.mxu0 0.0
        %1938 = vmatprep.subr.mxu0 0.0
        %1939 = vmatpush1.msra.mxu0 0.0
        %1940 = vmatprep.subr.mxu0 0.0
        %1941 = vmatpush1.msra.mxu0 0.0
        %1942 = vmatprep.mubr.f32.mxu0 0.0
        %1943 = vmatmul.mubr.f32.gmra.mrb[0].mxu0 %v1876
        %v1944 = vpop.f32.mrb[0].mxu0
        %v1945 = vadd.f32 %v1874, %v1944
        %v1946 = vpop.f32.mrb[0].mxu0
        %1947 = vdwg.mxu0
        %v1948 = vmul.f32 %v1945, %v207
        %1950 = vrot.lane.b32.xlu0 %v1945, 96
        %v1951 = vpop.permute.xlu0 %1950
        %v1953 = vsel %vm457, %v1948, 0
        %v1955 = vsel %vm457, %v1951, 0
        %1957 = vmatprep.subr.mxu0 0.0
        %1958 = vmatpush1.xpose.msra.mxu0 %v1955
        %1959 = vmatprep.subr.mxu0 0.0
        %1960 = vmatpush1.xpose.msra.mxu0 0.0
        %1961 = vmatprep.subr.mxu0 0.0
        %1962 = vmatpush1.xpose.msra.mxu0 0.0
        %1963 = vmatprep.subr.mxu0 0.0
        %1964 = vmatpush1.xpose.msra.mxu0 0.0
        %1965 = vmatprep.subr.mxu0 0.0
        %1966 = vmatpush1.xpose.msra.mxu0 0.0
        %1967 = vmatprep.subr.mxu0 0.0
        %1968 = vmatpush1.xpose.msra.mxu0 0.0
        %1969 = vmatprep.subr.mxu0 0.0
        %1970 = vmatpush1.xpose.msra.mxu0 0.0
        %1971 = vmatprep.subr.mxu0 0.0
        %1972 = vmatpush1.xpose.msra.mxu0 0.0
        %1973 = vmatprep.subr.mxu0 0.0
        %1974 = vmatpush1.xpose.msra.mxu0 0.0
        %1975 = vmatprep.subr.mxu0 0.0
        %1976 = vmatpush1.xpose.msra.mxu0 0.0
        %1977 = vmatprep.subr.mxu0 0.0
        %1978 = vmatpush1.xpose.msra.mxu0 0.0
        %1979 = vmatprep.subr.mxu0 0.0
        %1980 = vmatpush1.xpose.msra.mxu0 0.0
        %1981 = vmatprep.subr.mxu0 0.0
        %1982 = vmatpush1.xpose.msra.mxu0 0.0
        %1983 = vmatprep.subr.mxu0 0.0
        %1984 = vmatpush1.xpose.msra.mxu0 0.0
        %1985 = vmatprep.subr.mxu0 0.0
        %1986 = vmatpush1.xpose.msra.mxu0 0.0
        %1987 = vmatprep.subr.mxu0 0.0
        %1988 = vmatpush1.xpose.msra.mxu0 0.0
        %1989 = vmatprep.subr.mxu0 0.0
        %1990 = vmatpush1.xpose.msra.mxu0 0.0
        %1991 = vmatprep.subr.mxu0 0.0
        %1992 = vmatpush1.xpose.msra.mxu0 0.0
        %1993 = vmatprep.subr.mxu0 0.0
        %1994 = vmatpush1.xpose.msra.mxu0 0.0
        %1995 = vmatprep.subr.mxu0 0.0
        %1996 = vmatpush1.xpose.msra.mxu0 0.0
        %1997 = vmatprep.subr.mxu0 0.0
        %1998 = vmatpush1.xpose.msra.mxu0 0.0
        %1999 = vmatprep.subr.mxu0 0.0
        %2000 = vmatpush1.xpose.msra.mxu0 0.0
        %2001 = vmatprep.subr.mxu0 0.0
        %2002 = vmatpush1.xpose.msra.mxu0 0.0
        %2003 = vmatprep.subr.mxu0 0.0
        %2004 = vmatpush1.xpose.msra.mxu0 0.0
        %2005 = vmatprep.subr.mxu0 0.0
        %2006 = vmatpush1.xpose.msra.mxu0 0.0
        %2007 = vmatprep.subr.mxu0 0.0
        %2008 = vmatpush1.xpose.msra.mxu0 0.0
        %2009 = vmatprep.subr.mxu0 0.0
        %2010 = vmatpush1.xpose.msra.mxu0 0.0
        %2011 = vmatprep.subr.mxu0 0.0
        %2012 = vmatpush1.xpose.msra.mxu0 0.0
        %2013 = vmatprep.subr.mxu0 0.0
        %2014 = vmatpush1.xpose.msra.mxu0 0.0
        %2015 = vmatprep.subr.mxu0 0.0
        %2016 = vmatpush1.xpose.msra.mxu0 0.0
        %2017 = vmatprep.subr.mxu0 0.0
        %2018 = vmatpush1.xpose.msra.mxu0 0.0
        %2019 = vmatprep.subr.mxu0 0.0
        %2020 = vmatpush1.xpose.msra.mxu0 0.0
        %2021 = vmatprep.mubr.f32.mxu0 0.0
        %2022 = vmatmul.mubr.f32.gmra.mrb[0].mxu0 %v1953
        %v2023 = vpop.f32.mrb[0].mxu0
        %v2024 = vadd.f32 %v1840, %v2023
        %v2025 = vpop.f32.mrb[0].mxu0
        %2026 = vdwg.mxu0
        %v2027 = vsel %vm841, %v2024, -inf
        %2028 = vmax.xlane.f32.xlu0 %v2027
        %v2029 = vpop.xlane.xlu0 %2028
        %v2030 = vsub.f32 %v2024, %v2029
        %v2031 = vmul.f32 %v2030, 1.442695
        %v2032 = vpow.pop %v2031
        %v2033 = vsel %vm841, %v2032, 0.0
        %2034 = vadd.xlane.f32.xlu0 %v2033
        %v2035 = vpop.xlane.xlu0 %2034
        %v2036 = vrcp.pop %v2035
        %v2037 = vmul.f32 %v2032, %v2036
        %v2038 = vmul.f32 %v1945, %v855
        %v2039 = vmul.f32 %v1945, %v212
        %v2041 = vsel %vm457, %v2039, 0
        %2043 = vmatprep.subr.mxu0 0.0
        %2044 = vmatpush1.xpose.msra.mxu0 %v1955
        %2045 = vmatprep.subr.mxu0 0.0
        %2046 = vmatpush1.xpose.msra.mxu0 0.0
        %2047 = vmatprep.subr.mxu0 0.0
        %2048 = vmatpush1.xpose.msra.mxu0 0.0
        %2049 = vmatprep.subr.mxu0 0.0
        %2050 = vmatpush1.xpose.msra.mxu0 0.0
        %2051 = vmatprep.subr.mxu0 0.0
        %2052 = vmatpush1.xpose.msra.mxu0 0.0
        %2053 = vmatprep.subr.mxu0 0.0
        %2054 = vmatpush1.xpose.msra.mxu0 0.0
        %2055 = vmatprep.subr.mxu0 0.0
        %2056 = vmatpush1.xpose.msra.mxu0 0.0
        %2057 = vmatprep.subr.mxu0 0.0
        %2058 = vmatpush1.xpose.msra.mxu0 0.0
        %2059 = vmatprep.subr.mxu0 0.0
        %2060 = vmatpush1.xpose.msra.mxu0 0.0
        %2061 = vmatprep.subr.mxu0 0.0
        %2062 = vmatpush1.xpose.msra.mxu0 0.0
        %2063 = vmatprep.subr.mxu0 0.0
        %2064 = vmatpush1.xpose.msra.mxu0 0.0
        %2065 = vmatprep.subr.mxu0 0.0
        %2066 = vmatpush1.xpose.msra.mxu0 0.0
        %2067 = vmatprep.subr.mxu0 0.0
        %2068 = vmatpush1.xpose.msra.mxu0 0.0
        %2069 = vmatprep.subr.mxu0 0.0
        %2070 = vmatpush1.xpose.msra.mxu0 0.0
        %2071 = vmatprep.subr.mxu0 0.0
        %2072 = vmatpush1.xpose.msra.mxu0 0.0
        %2073 = vmatprep.subr.mxu0 0.0
        %2074 = vmatpush1.xpose.msra.mxu0 0.0
        %2075 = vmatprep.subr.mxu0 0.0
        %2076 = vmatpush1.xpose.msra.mxu0 0.0
        %2077 = vmatprep.subr.mxu0 0.0
        %2078 = vmatpush1.xpose.msra.mxu0 0.0
        %2079 = vmatprep.subr.mxu0 0.0
        %2080 = vmatpush1.xpose.msra.mxu0 0.0
        %2081 = vmatprep.subr.mxu0 0.0
        %2082 = vmatpush1.xpose.msra.mxu0 0.0
        %2083 = vmatprep.subr.mxu0 0.0
        %2084 = vmatpush1.xpose.msra.mxu0 0.0
        %2085 = vmatprep.subr.mxu0 0.0
        %2086 = vmatpush1.xpose.msra.mxu0 0.0
        %2087 = vmatprep.subr.mxu0 0.0
        %2088 = vmatpush1.xpose.msra.mxu0 0.0
        %2089 = vmatprep.subr.mxu0 0.0
        %2090 = vmatpush1.xpose.msra.mxu0 0.0
        %2091 = vmatprep.subr.mxu0 0.0
        %2092 = vmatpush1.xpose.msra.mxu0 0.0
        %2093 = vmatprep.subr.mxu0 0.0
        %2094 = vmatpush1.xpose.msra.mxu0 0.0
        %2095 = vmatprep.subr.mxu0 0.0
        %2096 = vmatpush1.xpose.msra.mxu0 0.0
        %2097 = vmatprep.subr.mxu0 0.0
        %2098 = vmatpush1.xpose.msra.mxu0 0.0
        %2099 = vmatprep.subr.mxu0 0.0
        %2100 = vmatpush1.xpose.msra.mxu0 0.0
        %2101 = vmatprep.subr.mxu0 0.0
        %2102 = vmatpush1.xpose.msra.mxu0 0.0
        %2103 = vmatprep.subr.mxu0 0.0
        %2104 = vmatpush1.xpose.msra.mxu0 0.0
        %2105 = vmatprep.subr.mxu0 0.0
        %2106 = vmatpush1.xpose.msra.mxu0 0.0
        %2107 = vmatprep.mubr.f32.mxu0 0.0
        %2108 = vmatmul.mubr.f32.gmra.mrb[0].mxu0 %v2041
        %v2109 = vpop.f32.mrb[0].mxu0
        %v2110 = vadd.f32 %v1840, %v2109
        %v2111 = vpop.f32.mrb[0].mxu0
        %2112 = vdwg.mxu0
        %v2113 = vsel %vm841, %v2110, -inf
        %2114 = vmax.xlane.f32.xlu0 %v2113
        %v2115 = vpop.xlane.xlu0 %2114
        %v2116 = vsub.f32 %v2110, %v2115
        %v2117 = vmul.f32 %v2116, 1.442695
        %v2118 = vpow.pop %v2117
        %v2119 = vsel %vm841, %v2118, 0.0
        %2120 = vadd.xlane.f32.xlu0 %v2119
        %v2121 = vpop.xlane.xlu0 %2120
        %v2122 = vrcp.pop %v2121
        %v2123 = vmul.f32 %v2118, %v2122
        %v2124 = vmul.f32 %v1945, %v945
        %2126 = vrot.lane.b32.xlu0 %v2124, 64
        %v2127 = vpop.permute.xlu0 %2126
        %v2130 = vsel %vm841, %v2123, 0
        %2132 = vmatprep.subr.mxu0 0.0
        %2133 = vmatpush1.msra.mxu0 %v2127
        %2134 = vmatprep.subr.mxu0 0.0
        %2135 = vmatpush1.msra.mxu0 0.0
        %2136 = vmatprep.subr.mxu0 0.0
        %2137 = vmatpush1.msra.mxu0 0.0
        %2138 = vmatprep.subr.mxu0 0.0
        %2139 = vmatpush1.msra.mxu0 0.0
        %2140 = vmatprep.subr.mxu0 0.0
        %2141 = vmatpush1.msra.mxu0 0.0
        %2142 = vmatprep.subr.mxu0 0.0
        %2143 = vmatpush1.msra.mxu0 0.0
        %2144 = vmatprep.subr.mxu0 0.0
        %2145 = vmatpush1.msra.mxu0 0.0
        %2146 = vmatprep.subr.mxu0 0.0
        %2147 = vmatpush1.msra.mxu0 0.0
        %2148 = vmatprep.subr.mxu0 0.0
        %2149 = vmatpush1.msra.mxu0 0.0
        %2150 = vmatprep.subr.mxu0 0.0
        %2151 = vmatpush1.msra.mxu0 0.0
        %2152 = vmatprep.subr.mxu0 0.0
        %2153 = vmatpush1.msra.mxu0 0.0
        %2154 = vmatprep.subr.mxu0 0.0
        %2155 = vmatpush1.msra.mxu0 0.0
        %2156 = vmatprep.subr.mxu0 0.0
        %2157 = vmatpush1.msra.mxu0 0.0
        %2158 = vmatprep.subr.mxu0 0.0
        %2159 = vmatpush1.msra.mxu0 0.0
        %2160 = vmatprep.subr.mxu0 0.0
        %2161 = vmatpush1.msra.mxu0 0.0
        %2162 = vmatprep.subr.mxu0 0.0
        %2163 = vmatpush1.msra.mxu0 0.0
        %2164 = vmatprep.subr.mxu0 0.0
        %2165 = vmatpush1.msra.mxu0 0.0
        %2166 = vmatprep.subr.mxu0 0.0
        %2167 = vmatpush1.msra.mxu0 0.0
        %2168 = vmatprep.subr.mxu0 0.0
        %2169 = vmatpush1.msra.mxu0 0.0
        %2170 = vmatprep.subr.mxu0 0.0
        %2171 = vmatpush1.msra.mxu0 0.0
        %2172 = vmatprep.subr.mxu0 0.0
        %2173 = vmatpush1.msra.mxu0 0.0
        %2174 = vmatprep.subr.mxu0 0.0
        %2175 = vmatpush1.msra.mxu0 0.0
        %2176 = vmatprep.subr.mxu0 0.0
        %2177 = vmatpush1.msra.mxu0 0.0
        %2178 = vmatprep.subr.mxu0 0.0
        %2179 = vmatpush1.msra.mxu0 0.0
        %2180 = vmatprep.subr.mxu0 0.0
        %2181 = vmatpush1.msra.mxu0 0.0
        %2182 = vmatprep.subr.mxu0 0.0
        %2183 = vmatpush1.msra.mxu0 0.0
        %2184 = vmatprep.subr.mxu0 0.0
        %2185 = vmatpush1.msra.mxu0 0.0
        %2186 = vmatprep.subr.mxu0 0.0
        %2187 = vmatpush1.msra.mxu0 0.0
        %2188 = vmatprep.subr.mxu0 0.0
        %2189 = vmatpush1.msra.mxu0 0.0
        %2190 = vmatprep.subr.mxu0 0.0
        %2191 = vmatpush1.msra.mxu0 0.0
        %2192 = vmatprep.subr.mxu0 0.0
        %2193 = vmatpush1.msra.mxu0 0.0
        %2194 = vmatprep.subr.mxu0 0.0
        %2195 = vmatpush1.msra.mxu0 0.0
        %2196 = vmatprep.mubr.f32.mxu0 0.0
        %2197 = vmatmul.mubr.f32.gmra.mrb[0].mxu0 %v2130
        %v2198 = vpop.f32.mrb[0].mxu0
        %v2199 = vadd.f32 0.0, %v2198
        %v2200 = vpop.f32.mrb[0].mxu0
        %2201 = vdwg.mxu0
        %2203 = vrot.lane.b32.xlu0 %v2038, 64
        %v2204 = vpop.permute.xlu0 %2203
        %v2207 = vsel %vm841, %v2037, 0
        %2209 = vmatprep.subr.mxu0 0.0
        %2210 = vmatpush1.msra.mxu0 %v2204
        %2211 = vmatprep.subr.mxu0 0.0
        %2212 = vmatpush1.msra.mxu0 0.0
        %2213 = vmatprep.subr.mxu0 0.0
        %2214 = vmatpush1.msra.mxu0 0.0
        %2215 = vmatprep.subr.mxu0 0.0
        %2216 = vmatpush1.msra.mxu0 0.0
        %2217 = vmatprep.subr.mxu0 0.0
        %2218 = vmatpush1.msra.mxu0 0.0
        %2219 = vmatprep.subr.mxu0 0.0
        %2220 = vmatpush1.msra.mxu0 0.0
        %2221 = vmatprep.subr.mxu0 0.0
        %2222 = vmatpush1.msra.mxu0 0.0
        %2223 = vmatprep.subr.mxu0 0.0
        %2224 = vmatpush1.msra.mxu0 0.0
        %2225 = vmatprep.subr.mxu0 0.0
        %2226 = vmatpush1.msra.mxu0 0.0
        %2227 = vmatprep.subr.mxu0 0.0
        %2228 = vmatpush1.msra.mxu0 0.0
        %2229 = vmatprep.subr.mxu0 0.0
        %2230 = vmatpush1.msra.mxu0 0.0
        %2231 = vmatprep.subr.mxu0 0.0
        %2232 = vmatpush1.msra.mxu0 0.0
        %2233 = vmatprep.subr.mxu0 0.0
        %2234 = vmatpush1.msra.mxu0 0.0
        %2235 = vmatprep.subr.mxu0 0.0
        %2236 = vmatpush1.msra.mxu0 0.0
        %2237 = vmatprep.subr.mxu0 0.0
        %2238 = vmatpush1.msra.mxu0 0.0
        %2239 = vmatprep.subr.mxu0 0.0
        %2240 = vmatpush1.msra.mxu0 0.0
        %2241 = vmatprep.subr.mxu0 0.0
        %2242 = vmatpush1.msra.mxu0 0.0
        %2243 = vmatprep.subr.mxu0 0.0
        %2244 = vmatpush1.msra.mxu0 0.0
        %2245 = vmatprep.subr.mxu0 0.0
        %2246 = vmatpush1.msra.mxu0 0.0
        %2247 = vmatprep.subr.mxu0 0.0
        %2248 = vmatpush1.msra.mxu0 0.0
        %2249 = vmatprep.subr.mxu0 0.0
        %2250 = vmatpush1.msra.mxu0 0.0
        %2251 = vmatprep.subr.mxu0 0.0
        %2252 = vmatpush1.msra.mxu0 0.0
        %2253 = vmatprep.subr.mxu0 0.0
        %2254 = vmatpush1.msra.mxu0 0.0
        %2255 = vmatprep.subr.mxu0 0.0
        %2256 = vmatpush1.msra.mxu0 0.0
        %2257 = vmatprep.subr.mxu0 0.0
        %2258 = vmatpush1.msra.mxu0 0.0
        %2259 = vmatprep.subr.mxu0 0.0
        %2260 = vmatpush1.msra.mxu0 0.0
        %2261 = vmatprep.subr.mxu0 0.0
        %2262 = vmatpush1.msra.mxu0 0.0
        %2263 = vmatprep.subr.mxu0 0.0
        %2264 = vmatpush1.msra.mxu0 0.0
        %2265 = vmatprep.subr.mxu0 0.0
        %2266 = vmatpush1.msra.mxu0 0.0
        %2267 = vmatprep.subr.mxu0 0.0
        %2268 = vmatpush1.msra.mxu0 0.0
        %2269 = vmatprep.subr.mxu0 0.0
        %2270 = vmatpush1.msra.mxu0 0.0
        %2271 = vmatprep.subr.mxu0 0.0
        %2272 = vmatpush1.msra.mxu0 0.0
        %2273 = vmatprep.mubr.f32.mxu0 0.0
        %2274 = vmatmul.mubr.f32.gmra.mrb[0].mxu0 %v2207
        %v2275 = vpop.f32.mrb[0].mxu0
        %v2276 = vadd.f32 %v2199, %v2275
        %v2277 = vpop.f32.mrb[0].mxu0
        %2278 = vdwg.mxu0
        %v2279 = vmul.f32 %v1945, %v217
        %v2281 = vsel %vm457, %v2279, 0
        %2283 = vmatprep.subr.mxu0 0.0
        %2284 = vmatpush1.xpose.msra.mxu0 %v1955
        %2285 = vmatprep.subr.mxu0 0.0
        %2286 = vmatpush1.xpose.msra.mxu0 0.0
        %2287 = vmatprep.subr.mxu0 0.0
        %2288 = vmatpush1.xpose.msra.mxu0 0.0
        %2289 = vmatprep.subr.mxu0 0.0
        %2290 = vmatpush1.xpose.msra.mxu0 0.0
        %2291 = vmatprep.subr.mxu0 0.0
        %2292 = vmatpush1.xpose.msra.mxu0 0.0
        %2293 = vmatprep.subr.mxu0 0.0
        %2294 = vmatpush1.xpose.msra.mxu0 0.0
        %2295 = vmatprep.subr.mxu0 0.0
        %2296 = vmatpush1.xpose.msra.mxu0 0.0
        %2297 = vmatprep.subr.mxu0 0.0
        %2298 = vmatpush1.xpose.msra.mxu0 0.0
        %2299 = vmatprep.subr.mxu0 0.0
        %2300 = vmatpush1.xpose.msra.mxu0 0.0
        %2301 = vmatprep.subr.mxu0 0.0
        %2302 = vmatpush1.xpose.msra.mxu0 0.0
        %2303 = vmatprep.subr.mxu0 0.0
        %2304 = vmatpush1.xpose.msra.mxu0 0.0
        %2305 = vmatprep.subr.mxu0 0.0
        %2306 = vmatpush1.xpose.msra.mxu0 0.0
        %2307 = vmatprep.subr.mxu0 0.0
        %2308 = vmatpush1.xpose.msra.mxu0 0.0
        %2309 = vmatprep.subr.mxu0 0.0
        %2310 = vmatpush1.xpose.msra.mxu0 0.0
        %2311 = vmatprep.subr.mxu0 0.0
        %2312 = vmatpush1.xpose.msra.mxu0 0.0
        %2313 = vmatprep.subr.mxu0 0.0
        %2314 = vmatpush1.xpose.msra.mxu0 0.0
        %2315 = vmatprep.subr.mxu0 0.0
        %2316 = vmatpush1.xpose.msra.mxu0 0.0
        %2317 = vmatprep.subr.mxu0 0.0
        %2318 = vmatpush1.xpose.msra.mxu0 0.0
        %2319 = vmatprep.subr.mxu0 0.0
        %2320 = vmatpush1.xpose.msra.mxu0 0.0
        %2321 = vmatprep.subr.mxu0 0.0
        %2322 = vmatpush1.xpose.msra.mxu0 0.0
        %2323 = vmatprep.subr.mxu0 0.0
        %2324 = vmatpush1.xpose.msra.mxu0 0.0
        %2325 = vmatprep.subr.mxu0 0.0
        %2326 = vmatpush1.xpose.msra.mxu0 0.0
        %2327 = vmatprep.subr.mxu0 0.0
        %2328 = vmatpush1.xpose.msra.mxu0 0.0
        %2329 = vmatprep.subr.mxu0 0.0
        %2330 = vmatpush1.xpose.msra.mxu0 0.0
        %2331 = vmatprep.subr.mxu0 0.0
        %2332 = vmatpush1.xpose.msra.mxu0 0.0
        %2333 = vmatprep.subr.mxu0 0.0
        %2334 = vmatpush1.xpose.msra.mxu0 0.0
        %2335 = vmatprep.subr.mxu0 0.0
        %2336 = vmatpush1.xpose.msra.mxu0 0.0
        %2337 = vmatprep.subr.mxu0 0.0
        %2338 = vmatpush1.xpose.msra.mxu0 0.0
        %2339 = vmatprep.subr.mxu0 0.0
        %2340 = vmatpush1.xpose.msra.mxu0 0.0
        %2341 = vmatprep.subr.mxu0 0.0
        %2342 = vmatpush1.xpose.msra.mxu0 0.0
        %2343 = vmatprep.subr.mxu0 0.0
        %2344 = vmatpush1.xpose.msra.mxu0 0.0
        %2345 = vmatprep.subr.mxu0 0.0
        %2346 = vmatpush1.xpose.msra.mxu0 0.0
        %2347 = vmatprep.mubr.f32.mxu0 0.0
        %2348 = vmatmul.mubr.f32.gmra.mrb[0].mxu0 %v2281
        %v2349 = vpop.f32.mrb[0].mxu0
        %v2350 = vadd.f32 %v1840, %v2349
        %v2351 = vpop.f32.mrb[0].mxu0
        %2352 = vdwg.mxu0
        %v2353 = vsel %vm841, %v2350, -inf
        %2354 = vmax.xlane.f32.xlu0 %v2353
        %v2355 = vpop.xlane.xlu0 %2354
        %v2356 = vsub.f32 %v2350, %v2355
        %v2357 = vmul.f32 %v2356, 1.442695
        %v2358 = vpow.pop %v2357
        %v2359 = vsel %vm841, %v2358, 0.0
        %2360 = vadd.xlane.f32.xlu0 %v2359
        %v2361 = vpop.xlane.xlu0 %2360
        %v2362 = vrcp.pop %v2361
        %v2363 = vmul.f32 %v2358, %v2362
        %v2364 = vmul.f32 %v1945, %v1189
        %2366 = vrot.lane.b32.xlu0 %v2364, 64
        %v2367 = vpop.permute.xlu0 %2366
        %v2370 = vsel %vm841, %v2363, 0
        %2372 = vmatprep.subr.mxu0 0.0
        %2373 = vmatpush1.msra.mxu0 %v2367
        %2374 = vmatprep.subr.mxu0 0.0
        %2375 = vmatpush1.msra.mxu0 0.0
        %2376 = vmatprep.subr.mxu0 0.0
        %2377 = vmatpush1.msra.mxu0 0.0
        %2378 = vmatprep.subr.mxu0 0.0
        %2379 = vmatpush1.msra.mxu0 0.0
        %2380 = vmatprep.subr.mxu0 0.0
        %2381 = vmatpush1.msra.mxu0 0.0
        %2382 = vmatprep.subr.mxu0 0.0
        %2383 = vmatpush1.msra.mxu0 0.0
        %2384 = vmatprep.subr.mxu0 0.0
        %2385 = vmatpush1.msra.mxu0 0.0
        %2386 = vmatprep.subr.mxu0 0.0
        %2387 = vmatpush1.msra.mxu0 0.0
        %2388 = vmatprep.subr.mxu0 0.0
        %2389 = vmatpush1.msra.mxu0 0.0
        %2390 = vmatprep.subr.mxu0 0.0
        %2391 = vmatpush1.msra.mxu0 0.0
        %2392 = vmatprep.subr.mxu0 0.0
        %2393 = vmatpush1.msra.mxu0 0.0
        %2394 = vmatprep.subr.mxu0 0.0
        %2395 = vmatpush1.msra.mxu0 0.0
        %2396 = vmatprep.subr.mxu0 0.0
        %2397 = vmatpush1.msra.mxu0 0.0
        %2398 = vmatprep.subr.mxu0 0.0
        %2399 = vmatpush1.msra.mxu0 0.0
        %2400 = vmatprep.subr.mxu0 0.0
        %2401 = vmatpush1.msra.mxu0 0.0
        %2402 = vmatprep.subr.mxu0 0.0
        %2403 = vmatpush1.msra.mxu0 0.0
        %2404 = vmatprep.subr.mxu0 0.0
        %2405 = vmatpush1.msra.mxu0 0.0
        %2406 = vmatprep.subr.mxu0 0.0
        %2407 = vmatpush1.msra.mxu0 0.0
        %2408 = vmatprep.subr.mxu0 0.0
        %2409 = vmatpush1.msra.mxu0 0.0
        %2410 = vmatprep.subr.mxu0 0.0
        %2411 = vmatpush1.msra.mxu0 0.0
        %2412 = vmatprep.subr.mxu0 0.0
        %2413 = vmatpush1.msra.mxu0 0.0
        %2414 = vmatprep.subr.mxu0 0.0
        %2415 = vmatpush1.msra.mxu0 0.0
        %2416 = vmatprep.subr.mxu0 0.0
        %2417 = vmatpush1.msra.mxu0 0.0
        %2418 = vmatprep.subr.mxu0 0.0
        %2419 = vmatpush1.msra.mxu0 0.0
        %2420 = vmatprep.subr.mxu0 0.0
        %2421 = vmatpush1.msra.mxu0 0.0
        %2422 = vmatprep.subr.mxu0 0.0
        %2423 = vmatpush1.msra.mxu0 0.0
        %2424 = vmatprep.subr.mxu0 0.0
        %2425 = vmatpush1.msra.mxu0 0.0
        %2426 = vmatprep.subr.mxu0 0.0
        %2427 = vmatpush1.msra.mxu0 0.0
        %2428 = vmatprep.subr.mxu0 0.0
        %2429 = vmatpush1.msra.mxu0 0.0
        %2430 = vmatprep.subr.mxu0 0.0
        %2431 = vmatpush1.msra.mxu0 0.0
        %2432 = vmatprep.subr.mxu0 0.0
        %2433 = vmatpush1.msra.mxu0 0.0
        %2434 = vmatprep.subr.mxu0 0.0
        %2435 = vmatpush1.msra.mxu0 0.0
        %2436 = vmatprep.mubr.f32.mxu0 0.0
        %2437 = vmatmul.mubr.f32.gmra.mrb[0].mxu0 %v2370
        %v2438 = vpop.f32.mrb[0].mxu0
        %v2439 = vadd.f32 0.0, %v2438
        %v2440 = vpop.f32.mrb[0].mxu0
        %2441 = vdwg.mxu0
        %v2442 = vadd.f32 %v2276, %v2439
        %v2443 = vmul.f32 %v1945, %v222
        %v2445 = vsel %vm457, %v2443, 0
        %2447 = vmatprep.subr.mxu0 0.0
        %2448 = vmatpush1.xpose.msra.mxu0 %v1955
        %2449 = vmatprep.subr.mxu0 0.0
        %2450 = vmatpush1.xpose.msra.mxu0 0.0
        %2451 = vmatprep.subr.mxu0 0.0
        %2452 = vmatpush1.xpose.msra.mxu0 0.0
        %2453 = vmatprep.subr.mxu0 0.0
        %2454 = vmatpush1.xpose.msra.mxu0 0.0
        %2455 = vmatprep.subr.mxu0 0.0
        %2456 = vmatpush1.xpose.msra.mxu0 0.0
        %2457 = vmatprep.subr.mxu0 0.0
        %2458 = vmatpush1.xpose.msra.mxu0 0.0
        %2459 = vmatprep.subr.mxu0 0.0
        %2460 = vmatpush1.xpose.msra.mxu0 0.0
        %2461 = vmatprep.subr.mxu0 0.0
        %2462 = vmatpush1.xpose.msra.mxu0 0.0
        %2463 = vmatprep.subr.mxu0 0.0
        %2464 = vmatpush1.xpose.msra.mxu0 0.0
        %2465 = vmatprep.subr.mxu0 0.0
        %2466 = vmatpush1.xpose.msra.mxu0 0.0
        %2467 = vmatprep.subr.mxu0 0.0
        %2468 = vmatpush1.xpose.msra.mxu0 0.0
        %2469 = vmatprep.subr.mxu0 0.0
        %2470 = vmatpush1.xpose.msra.mxu0 0.0
        %2471 = vmatprep.subr.mxu0 0.0
        %2472 = vmatpush1.xpose.msra.mxu0 0.0
        %2473 = vmatprep.subr.mxu0 0.0
        %2474 = vmatpush1.xpose.msra.mxu0 0.0
        %2475 = vmatprep.subr.mxu0 0.0
        %2476 = vmatpush1.xpose.msra.mxu0 0.0
        %2477 = vmatprep.subr.mxu0 0.0
        %2478 = vmatpush1.xpose.msra.mxu0 0.0
        %2479 = vmatprep.subr.mxu0 0.0
        %2480 = vmatpush1.xpose.msra.mxu0 0.0
        %2481 = vmatprep.subr.mxu0 0.0
        %2482 = vmatpush1.xpose.msra.mxu0 0.0
        %2483 = vmatprep.subr.mxu0 0.0
        %2484 = vmatpush1.xpose.msra.mxu0 0.0
        %2485 = vmatprep.subr.mxu0 0.0
        %2486 = vmatpush1.xpose.msra.mxu0 0.0
        %2487 = vmatprep.subr.mxu0 0.0
        %2488 = vmatpush1.xpose.msra.mxu0 0.0
        %2489 = vmatprep.subr.mxu0 0.0
        %2490 = vmatpush1.xpose.msra.mxu0 0.0
        %2491 = vmatprep.subr.mxu0 0.0
        %2492 = vmatpush1.xpose.msra.mxu0 0.0
        %2493 = vmatprep.subr.mxu0 0.0
        %2494 = vmatpush1.xpose.msra.mxu0 0.0
        %2495 = vmatprep.subr.mxu0 0.0
        %2496 = vmatpush1.xpose.msra.mxu0 0.0
        %2497 = vmatprep.subr.mxu0 0.0
        %2498 = vmatpush1.xpose.msra.mxu0 0.0
        %2499 = vmatprep.subr.mxu0 0.0
        %2500 = vmatpush1.xpose.msra.mxu0 0.0
        %2501 = vmatprep.subr.mxu0 0.0
        %2502 = vmatpush1.xpose.msra.mxu0 0.0
        %2503 = vmatprep.subr.mxu0 0.0
        %2504 = vmatpush1.xpose.msra.mxu0 0.0
        %2505 = vmatprep.subr.mxu0 0.0
        %2506 = vmatpush1.xpose.msra.mxu0 0.0
        %2507 = vmatprep.subr.mxu0 0.0
        %2508 = vmatpush1.xpose.msra.mxu0 0.0
        %2509 = vmatprep.subr.mxu0 0.0
        %2510 = vmatpush1.xpose.msra.mxu0 0.0
        %2511 = vmatprep.mubr.f32.mxu0 0.0
        %2512 = vmatmul.mubr.f32.gmra.mrb[0].mxu0 %v2445
        %v2513 = vpop.f32.mrb[0].mxu0
        %v2514 = vadd.f32 %v1840, %v2513
        %v2515 = vpop.f32.mrb[0].mxu0
        %2516 = vdwg.mxu0
        %v2517 = vsel %vm841, %v2514, -inf
        %2518 = vmax.xlane.f32.xlu0 %v2517
        %v2519 = vpop.xlane.xlu0 %2518
        %v2520 = vsub.f32 %v2514, %v2519
        %v2521 = vmul.f32 %v2520, 1.442695
        %v2522 = vpow.pop %v2521
        %v2523 = vsel %vm841, %v2522, 0.0
        %2524 = vadd.xlane.f32.xlu0 %v2523
        %v2525 = vpop.xlane.xlu0 %2524
        %v2526 = vrcp.pop %v2525
        %v2527 = vmul.f32 %v2522, %v2526
        %v2528 = vmul.f32 %v1945, %v1357
        %2530 = vrot.lane.b32.xlu0 %v2528, 64
        %v2531 = vpop.permute.xlu0 %2530
        %v2534 = vsel %vm841, %v2527, 0
        %2536 = vmatprep.subr.mxu0 0.0
        %2537 = vmatpush1.msra.mxu0 %v2531
        %2538 = vmatprep.subr.mxu0 0.0
        %2539 = vmatpush1.msra.mxu0 0.0
        %2540 = vmatprep.subr.mxu0 0.0
        %2541 = vmatpush1.msra.mxu0 0.0
        %2542 = vmatprep.subr.mxu0 0.0
        %2543 = vmatpush1.msra.mxu0 0.0
        %2544 = vmatprep.subr.mxu0 0.0
        %2545 = vmatpush1.msra.mxu0 0.0
        %2546 = vmatprep.subr.mxu0 0.0
        %2547 = vmatpush1.msra.mxu0 0.0
        %2548 = vmatprep.subr.mxu0 0.0
        %2549 = vmatpush1.msra.mxu0 0.0
        %2550 = vmatprep.subr.mxu0 0.0
        %2551 = vmatpush1.msra.mxu0 0.0
        %2552 = vmatprep.subr.mxu0 0.0
        %2553 = vmatpush1.msra.mxu0 0.0
        %2554 = vmatprep.subr.mxu0 0.0
        %2555 = vmatpush1.msra.mxu0 0.0
        %2556 = vmatprep.subr.mxu0 0.0
        %2557 = vmatpush1.msra.mxu0 0.0
        %2558 = vmatprep.subr.mxu0 0.0
        %2559 = vmatpush1.msra.mxu0 0.0
        %2560 = vmatprep.subr.mxu0 0.0
        %2561 = vmatpush1.msra.mxu0 0.0
        %2562 = vmatprep.subr.mxu0 0.0
        %2563 = vmatpush1.msra.mxu0 0.0
        %2564 = vmatprep.subr.mxu0 0.0
        %2565 = vmatpush1.msra.mxu0 0.0
        %2566 = vmatprep.subr.mxu0 0.0
        %2567 = vmatpush1.msra.mxu0 0.0
        %2568 = vmatprep.subr.mxu0 0.0
        %2569 = vmatpush1.msra.mxu0 0.0
        %2570 = vmatprep.subr.mxu0 0.0
        %2571 = vmatpush1.msra.mxu0 0.0
        %2572 = vmatprep.subr.mxu0 0.0
        %2573 = vmatpush1.msra.mxu0 0.0
        %2574 = vmatprep.subr.mxu0 0.0
        %2575 = vmatpush1.msra.mxu0 0.0
        %2576 = vmatprep.subr.mxu0 0.0
        %2577 = vmatpush1.msra.mxu0 0.0
        %2578 = vmatprep.subr.mxu0 0.0
        %2579 = vmatpush1.msra.mxu0 0.0
        %2580 = vmatprep.subr.mxu0 0.0
        %2581 = vmatpush1.msra.mxu0 0.0
        %2582 = vmatprep.subr.mxu0 0.0
        %2583 = vmatpush1.msra.mxu0 0.0
        %2584 = vmatprep.subr.mxu0 0.0
        %2585 = vmatpush1.msra.mxu0 0.0
        %2586 = vmatprep.subr.mxu0 0.0
        %2587 = vmatpush1.msra.mxu0 0.0
        %2588 = vmatprep.subr.mxu0 0.0
        %2589 = vmatpush1.msra.mxu0 0.0
        %2590 = vmatprep.subr.mxu0 0.0
        %2591 = vmatpush1.msra.mxu0 0.0
        %2592 = vmatprep.subr.mxu0 0.0
        %2593 = vmatpush1.msra.mxu0 0.0
        %2594 = vmatprep.subr.mxu0 0.0
        %2595 = vmatpush1.msra.mxu0 0.0
        %2596 = vmatprep.subr.mxu0 0.0
        %2597 = vmatpush1.msra.mxu0 0.0
        %2598 = vmatprep.subr.mxu0 0.0
        %2599 = vmatpush1.msra.mxu0 0.0
        %2600 = vmatprep.mubr.f32.mxu0 0.0
        %2601 = vmatmul.mubr.f32.gmra.mrb[0].mxu0 %v2534
        %v2602 = vpop.f32.mrb[0].mxu0
        %v2603 = vadd.f32 0.0, %v2602
        %v2604 = vpop.f32.mrb[0].mxu0
        %2605 = vdwg.mxu0
        %v2606 = vadd.f32 %v2442, %v2603
        %v2607 = vld [vmem:[#allocation2 + $0x1b8] sm:$0xff]
        %v2608 = vld [vmem:[#allocation2 + $0x1c0] sm:$0xff]
        %v2609 = vld [vmem:[#allocation2 + $0x1c8] sm:$0xff]
        %v2610 = vld [vmem:[#allocation2 + $0x1d0] sm:$0xff]
        %v2611 = vld [vmem:[#allocation2 + $0x1d8] sm:$0x1]
        %v2612 = vlaneseq
        %v2613 = vshrl.u32 %v2612, 7
        %v2614 = vsub.s32 0, %v2613
        %v2615 = vrot.slane %v2611, %v2614
        %v2617 = vsel %vm457, %v2606, 0
        %2619 = vmatprep.subr.mxu0 0.0
        %2620 = vmatpush1.msra.mxu0 %v2607
        %2621 = vmatprep.subr.mxu0 0.0
        %2622 = vmatpush1.msra.mxu0 %v2608
        %2623 = vmatprep.subr.mxu0 0.0
        %2624 = vmatpush1.msra.mxu0 %v2609
        %2625 = vmatprep.subr.mxu0 0.0
        %2626 = vmatpush1.msra.mxu0 %v2610
        %2627 = vmatprep.subr.mxu0 0.0
        %2628 = vmatpush1.msra.mxu0 0.0
        %2629 = vmatprep.subr.mxu0 0.0
        %2630 = vmatpush1.msra.mxu0 0.0
        %2631 = vmatprep.subr.mxu0 0.0
        %2632 = vmatpush1.msra.mxu0 0.0
        %2633 = vmatprep.subr.mxu0 0.0
        %2634 = vmatpush1.msra.mxu0 0.0
        %2635 = vmatprep.subr.mxu0 0.0
        %2636 = vmatpush1.msra.mxu0 0.0
        %2637 = vmatprep.subr.mxu0 0.0
        %2638 = vmatpush1.msra.mxu0 0.0
        %2639 = vmatprep.subr.mxu0 0.0
        %2640 = vmatpush1.msra.mxu0 0.0
        %2641 = vmatprep.subr.mxu0 0.0
        %2642 = vmatpush1.msra.mxu0 0.0
        %2643 = vmatprep.subr.mxu0 0.0
        %2644 = vmatpush1.msra.mxu0 0.0
        %2645 = vmatprep.subr.mxu0 0.0
        %2646 = vmatpush1.msra.mxu0 0.0
        %2647 = vmatprep.subr.mxu0 0.0
        %2648 = vmatpush1.msra.mxu0 0.0
        %2649 = vmatprep.subr.mxu0 0.0
        %2650 = vmatpush1.msra.mxu0 0.0
        %2651 = vmatprep.subr.mxu0 0.0
        %2652 = vmatpush1.msra.mxu0 0.0
        %2653 = vmatprep.subr.mxu0 0.0
        %2654 = vmatpush1.msra.mxu0 0.0
        %2655 = vmatprep.subr.mxu0 0.0
        %2656 = vmatpush1.msra.mxu0 0.0
        %2657 = vmatprep.subr.mxu0 0.0
        %2658 = vmatpush1.msra.mxu0 0.0
        %2659 = vmatprep.subr.mxu0 0.0
        %2660 = vmatpush1.msra.mxu0 0.0
        %2661 = vmatprep.subr.mxu0 0.0
        %2662 = vmatpush1.msra.mxu0 0.0
        %2663 = vmatprep.subr.mxu0 0.0
        %2664 = vmatpush1.msra.mxu0 0.0
        %2665 = vmatprep.subr.mxu0 0.0
        %2666 = vmatpush1.msra.mxu0 0.0
        %2667 = vmatprep.subr.mxu0 0.0
        %2668 = vmatpush1.msra.mxu0 0.0
        %2669 = vmatprep.subr.mxu0 0.0
        %2670 = vmatpush1.msra.mxu0 0.0
        %2671 = vmatprep.subr.mxu0 0.0
        %2672 = vmatpush1.msra.mxu0 0.0
        %2673 = vmatprep.subr.mxu0 0.0
        %2674 = vmatpush1.msra.mxu0 0.0
        %2675 = vmatprep.subr.mxu0 0.0
        %2676 = vmatpush1.msra.mxu0 0.0
        %2677 = vmatprep.subr.mxu0 0.0
        %2678 = vmatpush1.msra.mxu0 0.0
        %2679 = vmatprep.subr.mxu0 0.0
        %2680 = vmatpush1.msra.mxu0 0.0
        %2681 = vmatprep.subr.mxu0 0.0
        %2682 = vmatpush1.msra.mxu0 0.0
        %2683 = vmatprep.mubr.f32.mxu0 0.0
        %2684 = vmatmul.mubr.f32.gmra.mrb[0].mxu0 %v2617
        %v2685 = vpop.f32.mrb[0].mxu0
        %v2686 = vadd.f32 %v2615, %v2685
        %v2687 = vpop.f32.mrb[0].mxu0
        %2688 = vdwg.mxu0
        %v2689 = vadd.f32 %v1836, %v2686
        %v2690 = vsel %vm457, %v2689, 0.0
        %2691 = vadd.xlane.f32.xlu0 %v2690
        %v2692 = vpop.xlane.xlu0 %2691
        %v2693 = vmul.f32 %v2692, %v657
        %v2694 = vsub.f32 %v2689, %v2693
        %v2695 = vmul.f32 %v2694, %v2694
        %v2696 = vsel %vm457, %v2695, 0.0
        %2697 = vadd.xlane.f32.xlu0 %v2696
        %v2698 = vpop.xlane.xlu0 %2697
        %v2699 = vmul.f32 %v2698, %v657
        %v2700 = vadd.f32 %v2699, 1e-05
        %v2701 = vrsqrt.pop %v2700
        %v2702 = vmul.f32 %v2694, %v2701
        %v2703 = vld [vmem:[#allocation2 + $0x1e0] sm:$0x1]
        %v2704 = vlaneseq
        %v2705 = vshrl.u32 %v2704, 7
        %v2706 = vsub.s32 0, %v2705
        %v2707 = vrot.slane %v2703, %v2706
        %v2708 = vmul.f32 %v2702, %v2707
        %v2709 = vld [vmem:[#allocation2 + $0x1e8] sm:$0x1]
        %v2710 = vlaneseq
        %v2711 = vshrl.u32 %v2710, 7
        %v2712 = vsub.s32 0, %v2711
        %v2713 = vrot.slane %v2709, %v2712
        %v2714 = vadd.f32 %v2708, %v2713
        %v2715 = vld [vmem:[#allocation2 + $0x1f0] sm:$0xff]
        %v2716 = vld [vmem:[#allocation2 + $0x1f8] sm:$0xff]
        %v2717 = vld [vmem:[#allocation2 + $0x200] sm:$0xff]
        %v2718 = vld [vmem:[#allocation2 + $0x208] sm:$0xff]
        %v2719 = vld [vmem:[#allocation2 + $0x210] sm:$0x1]
        %v2720 = vlaneseq
        %v2721 = vshrl.u32 %v2720, 7
        %v2722 = vsub.s32 0, %v2721
        %v2723 = vrot.slane %v2719, %v2722
        %v2725 = vsel %vm457, %v2714, 0
        %2727 = vmatprep.subr.mxu0 0.0
        %2728 = vmatpush1.msra.mxu0 %v2715
        %2729 = vmatprep.subr.mxu0 0.0
        %2730 = vmatpush1.msra.mxu0 %v2716
        %2731 = vmatprep.subr.mxu0 0.0
        %2732 = vmatpush1.msra.mxu0 %v2717
        %2733 = vmatprep.subr.mxu0 0.0
        %2734 = vmatpush1.msra.mxu0 %v2718
        %2735 = vmatprep.subr.mxu0 0.0
        %2736 = vmatpush1.msra.mxu0 0.0
        %2737 = vmatprep.subr.mxu0 0.0
        %2738 = vmatpush1.msra.mxu0 0.0
        %2739 = vmatprep.subr.mxu0 0.0
        %2740 = vmatpush1.msra.mxu0 0.0
        %2741 = vmatprep.subr.mxu0 0.0
        %2742 = vmatpush1.msra.mxu0 0.0
        %2743 = vmatprep.subr.mxu0 0.0
        %2744 = vmatpush1.msra.mxu0 0.0
        %2745 = vmatprep.subr.mxu0 0.0
        %2746 = vmatpush1.msra.mxu0 0.0
        %2747 = vmatprep.subr.mxu0 0.0
        %2748 = vmatpush1.msra.mxu0 0.0
        %2749 = vmatprep.subr.mxu0 0.0
        %2750 = vmatpush1.msra.mxu0 0.0
        %2751 = vmatprep.subr.mxu0 0.0
        %2752 = vmatpush1.msra.mxu0 0.0
        %2753 = vmatprep.subr.mxu0 0.0
        %2754 = vmatpush1.msra.mxu0 0.0
        %2755 = vmatprep.subr.mxu0 0.0
        %2756 = vmatpush1.msra.mxu0 0.0
        %2757 = vmatprep.subr.mxu0 0.0
        %2758 = vmatpush1.msra.mxu0 0.0
        %2759 = vmatprep.subr.mxu0 0.0
        %2760 = vmatpush1.msra.mxu0 0.0
        %2761 = vmatprep.subr.mxu0 0.0
        %2762 = vmatpush1.msra.mxu0 0.0
        %2763 = vmatprep.subr.mxu0 0.0
        %2764 = vmatpush1.msra.mxu0 0.0
        %2765 = vmatprep.subr.mxu0 0.0
        %2766 = vmatpush1.msra.mxu0 0.0
        %2767 = vmatprep.subr.mxu0 0.0
        %2768 = vmatpush1.msra.mxu0 0.0
        %2769 = vmatprep.subr.mxu0 0.0
        %2770 = vmatpush1.msra.mxu0 0.0
        %2771 = vmatprep.subr.mxu0 0.0
        %2772 = vmatpush1.msra.mxu0 0.0
        %2773 = vmatprep.subr.mxu0 0.0
        %2774 = vmatpush1.msra.mxu0 0.0
        %2775 = vmatprep.subr.mxu0 0.0
        %2776 = vmatpush1.msra.mxu0 0.0
        %2777 = vmatprep.subr.mxu0 0.0
        %2778 = vmatpush1.msra.mxu0 0.0
        %2779 = vmatprep.subr.mxu0 0.0
        %2780 = vmatpush1.msra.mxu0 0.0
        %2781 = vmatprep.subr.mxu0 0.0
        %2782 = vmatpush1.msra.mxu0 0.0
        %2783 = vmatprep.subr.mxu0 0.0
        %2784 = vmatpush1.msra.mxu0 0.0
        %2785 = vmatprep.subr.mxu0 0.0
        %2786 = vmatpush1.msra.mxu0 0.0
        %2787 = vmatprep.subr.mxu0 0.0
        %2788 = vmatpush1.msra.mxu0 0.0
        %2789 = vmatprep.subr.mxu0 0.0
        %2790 = vmatpush1.msra.mxu0 0.0
        %2791 = vmatprep.mubr.f32.mxu0 0.0
        %2792 = vmatmul.mubr.f32.gmra.mrb[0].mxu0 %v2725
        %v2793 = vpop.f32.mrb[0].mxu0
        %v2794 = vadd.f32 %v2723, %v2793
        %v2795 = vpop.f32.mrb[0].mxu0
        %2796 = vdwg.mxu0
        %v2797 = vld [vmem:[#allocation2 + $0x218] sm:$0xff]
        %v2798 = vld [vmem:[#allocation2 + $0x220] sm:$0xff]
        %v2799 = vld [vmem:[#allocation2 + $0x228] sm:$0xff]
        %v2800 = vld [vmem:[#allocation2 + $0x230] sm:$0xff]
        %v2801 = vld [vmem:[#allocation2 + $0x238] sm:$0x1]
        %v2802 = vlaneseq
        %v2803 = vshrl.u32 %v2802, 7
        %v2804 = vsub.s32 0, %v2803
        %v2805 = vrot.slane %v2801, %v2804
        %v2807 = vsel %vm457, %v1749, 0
        %2809 = vmatprep.subr.mxu0 0.0
        %2810 = vmatpush1.msra.mxu0 %v2797
        %2811 = vmatprep.subr.mxu0 0.0
        %2812 = vmatpush1.msra.mxu0 %v2798
        %2813 = vmatprep.subr.mxu0 0.0
        %2814 = vmatpush1.msra.mxu0 %v2799
        %2815 = vmatprep.subr.mxu0 0.0
        %2816 = vmatpush1.msra.mxu0 %v2800
        %2817 = vmatprep.subr.mxu0 0.0
        %2818 = vmatpush1.msra.mxu0 0.0
        %2819 = vmatprep.subr.mxu0 0.0
        %2820 = vmatpush1.msra.mxu0 0.0
        %2821 = vmatprep.subr.mxu0 0.0
        %2822 = vmatpush1.msra.mxu0 0.0
        %2823 = vmatprep.subr.mxu0 0.0
        %2824 = vmatpush1.msra.mxu0 0.0
        %2825 = vmatprep.subr.mxu0 0.0
        %2826 = vmatpush1.msra.mxu0 0.0
        %2827 = vmatprep.subr.mxu0 0.0
        %2828 = vmatpush1.msra.mxu0 0.0
        %2829 = vmatprep.subr.mxu0 0.0
        %2830 = vmatpush1.msra.mxu0 0.0
        %2831 = vmatprep.subr.mxu0 0.0
        %2832 = vmatpush1.msra.mxu0 0.0
        %2833 = vmatprep.subr.mxu0 0.0
        %2834 = vmatpush1.msra.mxu0 0.0
        %2835 = vmatprep.subr.mxu0 0.0
        %2836 = vmatpush1.msra.mxu0 0.0
        %2837 = vmatprep.subr.mxu0 0.0
        %2838 = vmatpush1.msra.mxu0 0.0
        %2839 = vmatprep.subr.mxu0 0.0
        %2840 = vmatpush1.msra.mxu0 0.0
        %2841 = vmatprep.subr.mxu0 0.0
        %2842 = vmatpush1.msra.mxu0 0.0
        %2843 = vmatprep.subr.mxu0 0.0
        %2844 = vmatpush1.msra.mxu0 0.0
        %2845 = vmatprep.subr.mxu0 0.0
        %2846 = vmatpush1.msra.mxu0 0.0
        %2847 = vmatprep.subr.mxu0 0.0
        %2848 = vmatpush1.msra.mxu0 0.0
        %2849 = vmatprep.subr.mxu0 0.0
        %2850 = vmatpush1.msra.mxu0 0.0
        %2851 = vmatprep.subr.mxu0 0.0
        %2852 = vmatpush1.msra.mxu0 0.0
        %2853 = vmatprep.subr.mxu0 0.0
        %2854 = vmatpush1.msra.mxu0 0.0
        %2855 = vmatprep.subr.mxu0 0.0
        %2856 = vmatpush1.msra.mxu0 0.0
        %2857 = vmatprep.subr.mxu0 0.0
        %2858 = vmatpush1.msra.mxu0 0.0
        %2859 = vmatprep.subr.mxu0 0.0
        %2860 = vmatpush1.msra.mxu0 0.0
        %2861 = vmatprep.subr.mxu0 0.0
        %2862 = vmatpush1.msra.mxu0 0.0
        %2863 = vmatprep.subr.mxu0 0.0
        %2864 = vmatpush1.msra.mxu0 0.0
        %2865 = vmatprep.subr.mxu0 0.0
        %2866 = vmatpush1.msra.mxu0 0.0
        %2867 = vmatprep.subr.mxu0 0.0
        %2868 = vmatpush1.msra.mxu0 0.0
        %2869 = vmatprep.subr.mxu0 0.0
        %2870 = vmatpush1.msra.mxu0 0.0
        %2871 = vmatprep.subr.mxu0 0.0
        %2872 = vmatpush1.msra.mxu0 0.0
        %2873 = vmatprep.mubr.f32.mxu0 0.0
        %2874 = vmatmul.mubr.f32.gmra.mrb[0].mxu0 %v2807
        %v2875 = vpop.f32.mrb[0].mxu0
        %v2876 = vadd.f32 %v2805, %v2875
        %v2877 = vpop.f32.mrb[0].mxu0
        %2878 = vdwg.mxu0
        %v2879 = vmul.f32 %v2794, %v207
        %v2881 = vsel %vm457, %v2879, 0
        %v2884 = vsel %vm457, %v2876, 0
        %2886 = vmatprep.subr.mxu0 0.0
        %2887 = vmatpush1.xpose.msra.mxu0 %v2884
        %2888 = vmatprep.subr.mxu0 0.0
        %2889 = vmatpush1.xpose.msra.mxu0 0.0
        %2890 = vmatprep.subr.mxu0 0.0
        %2891 = vmatpush1.xpose.msra.mxu0 0.0
        %2892 = vmatprep.subr.mxu0 0.0
        %2893 = vmatpush1.xpose.msra.mxu0 0.0
        %2894 = vmatprep.subr.mxu0 0.0
        %2895 = vmatpush1.xpose.msra.mxu0 0.0
        %2896 = vmatprep.subr.mxu0 0.0
        %2897 = vmatpush1.xpose.msra.mxu0 0.0
        %2898 = vmatprep.subr.mxu0 0.0
        %2899 = vmatpush1.xpose.msra.mxu0 0.0
        %2900 = vmatprep.subr.mxu0 0.0
        %2901 = vmatpush1.xpose.msra.mxu0 0.0
        %2902 = vmatprep.subr.mxu0 0.0
        %2903 = vmatpush1.xpose.msra.mxu0 0.0
        %2904 = vmatprep.subr.mxu0 0.0
        %2905 = vmatpush1.xpose.msra.mxu0 0.0
        %2906 = vmatprep.subr.mxu0 0.0
        %2907 = vmatpush1.xpose.msra.mxu0 0.0
        %2908 = vmatprep.subr.mxu0 0.0
        %2909 = vmatpush1.xpose.msra.mxu0 0.0
        %2910 = vmatprep.subr.mxu0 0.0
        %2911 = vmatpush1.xpose.msra.mxu0 0.0
        %2912 = vmatprep.subr.mxu0 0.0
        %2913 = vmatpush1.xpose.msra.mxu0 0.0
        %2914 = vmatprep.subr.mxu0 0.0
        %2915 = vmatpush1.xpose.msra.mxu0 0.0
        %2916 = vmatprep.subr.mxu0 0.0
        %2917 = vmatpush1.xpose.msra.mxu0 0.0
        %2918 = vmatprep.subr.mxu0 0.0
        %2919 = vmatpush1.xpose.msra.mxu0 0.0
        %2920 = vmatprep.subr.mxu0 0.0
        %2921 = vmatpush1.xpose.msra.mxu0 0.0
        %2922 = vmatprep.subr.mxu0 0.0
        %2923 = vmatpush1.xpose.msra.mxu0 0.0
        %2924 = vmatprep.subr.mxu0 0.0
        %2925 = vmatpush1.xpose.msra.mxu0 0.0
        %2926 = vmatprep.subr.mxu0 0.0
        %2927 = vmatpush1.xpose.msra.mxu0 0.0
        %2928 = vmatprep.subr.mxu0 0.0
        %2929 = vmatpush1.xpose.msra.mxu0 0.0
        %2930 = vmatprep.subr.mxu0 0.0
        %2931 = vmatpush1.xpose.msra.mxu0 0.0
        %2932 = vmatprep.subr.mxu0 0.0
        %2933 = vmatpush1.xpose.msra.mxu0 0.0
        %2934 = vmatprep.subr.mxu0 0.0
        %2935 = vmatpush1.xpose.msra.mxu0 0.0
        %2936 = vmatprep.subr.mxu0 0.0
        %2937 = vmatpush1.xpose.msra.mxu0 0.0
        %2938 = vmatprep.subr.mxu0 0.0
        %2939 = vmatpush1.xpose.msra.mxu0 0.0
        %2940 = vmatprep.subr.mxu0 0.0
        %2941 = vmatpush1.xpose.msra.mxu0 0.0
        %2942 = vmatprep.subr.mxu0 0.0
        %2943 = vmatpush1.xpose.msra.mxu0 0.0
        %2944 = vmatprep.subr.mxu0 0.0
        %2945 = vmatpush1.xpose.msra.mxu0 0.0
        %2946 = vmatprep.subr.mxu0 0.0
        %2947 = vmatpush1.xpose.msra.mxu0 0.0
        %2948 = vmatprep.subr.mxu0 0.0
        %2949 = vmatpush1.xpose.msra.mxu0 0.0
        %2950 = vmatprep.mubr.f32.mxu0 0.0
        %2951 = vmatmul.mubr.f32.gmra.mrb[0].mxu0 %v2881
        %v2952 = vpop.f32.mrb[0].mxu0
        %v2953 = vadd.f32 0.0, %v2952
        %v2954 = vpop.f32.mrb[0].mxu0
        %2955 = vdwg.mxu0
        %v2956 = vsel %vm841, %v2953, -inf
        %2957 = vmax.xlane.f32.xlu0 %v2956
        %v2958 = vpop.xlane.xlu0 %2957
        %v2959 = vsub.f32 %v2953, %v2958
        %v2960 = vmul.f32 %v2959, 1.442695
        %v2961 = vpow.pop %v2960
        %v2962 = vsel %vm841, %v2961, 0.0
        %2963 = vadd.xlane.f32.xlu0 %v2962
        %v2964 = vpop.xlane.xlu0 %2963
        %v2965 = vrcp.pop %v2964
        %v2966 = vmul.f32 %v2961, %v2965
        %2967 = vrot.lane.b32.xlu0 %v207, 32
        %v2968 = vpop.permute.xlu0 %2967
        %v2970 = vmul.f32 %v2876, %v2968
        %v2971 = vmul.f32 %v2794, %v212
        %v2973 = vsel %vm457, %v2971, 0
        %2975 = vmatprep.subr.mxu0 0.0
        %2976 = vmatpush1.xpose.msra.mxu0 %v2884
        %2977 = vmatprep.subr.mxu0 0.0
        %2978 = vmatpush1.xpose.msra.mxu0 0.0
        %2979 = vmatprep.subr.mxu0 0.0
        %2980 = vmatpush1.xpose.msra.mxu0 0.0
        %2981 = vmatprep.subr.mxu0 0.0
        %2982 = vmatpush1.xpose.msra.mxu0 0.0
        %2983 = vmatprep.subr.mxu0 0.0
        %2984 = vmatpush1.xpose.msra.mxu0 0.0
        %2985 = vmatprep.subr.mxu0 0.0
        %2986 = vmatpush1.xpose.msra.mxu0 0.0
        %2987 = vmatprep.subr.mxu0 0.0
        %2988 = vmatpush1.xpose.msra.mxu0 0.0
        %2989 = vmatprep.subr.mxu0 0.0
        %2990 = vmatpush1.xpose.msra.mxu0 0.0
        %2991 = vmatprep.subr.mxu0 0.0
        %2992 = vmatpush1.xpose.msra.mxu0 0.0
        %2993 = vmatprep.subr.mxu0 0.0
        %2994 = vmatpush1.xpose.msra.mxu0 0.0
        %2995 = vmatprep.subr.mxu0 0.0
        %2996 = vmatpush1.xpose.msra.mxu0 0.0
        %2997 = vmatprep.subr.mxu0 0.0
        %2998 = vmatpush1.xpose.msra.mxu0 0.0
        %2999 = vmatprep.subr.mxu0 0.0
        %3000 = vmatpush1.xpose.msra.mxu0 0.0
        %3001 = vmatprep.subr.mxu0 0.0
        %3002 = vmatpush1.xpose.msra.mxu0 0.0
        %3003 = vmatprep.subr.mxu0 0.0
        %3004 = vmatpush1.xpose.msra.mxu0 0.0
        %3005 = vmatprep.subr.mxu0 0.0
        %3006 = vmatpush1.xpose.msra.mxu0 0.0
        %3007 = vmatprep.subr.mxu0 0.0
        %3008 = vmatpush1.xpose.msra.mxu0 0.0
        %3009 = vmatprep.subr.mxu0 0.0
        %3010 = vmatpush1.xpose.msra.mxu0 0.0
        %3011 = vmatprep.subr.mxu0 0.0
        %3012 = vmatpush1.xpose.msra.mxu0 0.0
        %3013 = vmatprep.subr.mxu0 0.0
        %3014 = vmatpush1.xpose.msra.mxu0 0.0
        %3015 = vmatprep.subr.mxu0 0.0
        %3016 = vmatpush1.xpose.msra.mxu0 0.0
        %3017 = vmatprep.subr.mxu0 0.0
        %3018 = vmatpush1.xpose.msra.mxu0 0.0
        %3019 = vmatprep.subr.mxu0 0.0
        %3020 = vmatpush1.xpose.msra.mxu0 0.0
        %3021 = vmatprep.subr.mxu0 0.0
        %3022 = vmatpush1.xpose.msra.mxu0 0.0
        %3023 = vmatprep.subr.mxu0 0.0
        %3024 = vmatpush1.xpose.msra.mxu0 0.0
        %3025 = vmatprep.subr.mxu0 0.0
        %3026 = vmatpush1.xpose.msra.mxu0 0.0
        %3027 = vmatprep.subr.mxu0 0.0
        %3028 = vmatpush1.xpose.msra.mxu0 0.0
        %3029 = vmatprep.subr.mxu0 0.0
        %3030 = vmatpush1.xpose.msra.mxu0 0.0
        %3031 = vmatprep.subr.mxu0 0.0
        %3032 = vmatpush1.xpose.msra.mxu0 0.0
        %3033 = vmatprep.subr.mxu0 0.0
        %3034 = vmatpush1.xpose.msra.mxu0 0.0
        %3035 = vmatprep.subr.mxu0 0.0
        %3036 = vmatpush1.xpose.msra.mxu0 0.0
        %3037 = vmatprep.subr.mxu0 0.0
        %3038 = vmatpush1.xpose.msra.mxu0 0.0
        %3039 = vmatprep.mubr.f32.mxu0 0.0
        %3040 = vmatmul.mubr.f32.gmra.mrb[0].mxu0 %v2973
        %v3041 = vpop.f32.mrb[0].mxu0
        %v3042 = vadd.f32 0.0, %v3041
        %v3043 = vpop.f32.mrb[0].mxu0
        %3044 = vdwg.mxu0
        %v3045 = vsel %vm841, %v3042, -inf
        %3046 = vmax.xlane.f32.xlu0 %v3045
        %v3047 = vpop.xlane.xlu0 %3046
        %v3048 = vsub.f32 %v3042, %v3047
        %v3049 = vmul.f32 %v3048, 1.442695
        %v3050 = vpow.pop %v3049
        %v3051 = vsel %vm841, %v3050, 0.0
        %3052 = vadd.xlane.f32.xlu0 %v3051
        %v3053 = vpop.xlane.xlu0 %3052
        %v3054 = vrcp.pop %v3053
        %v3055 = vmul.f32 %v3050, %v3054
        %3056 = vrot.lane.b32.xlu0 %v212, 32
        %v3057 = vpop.permute.xlu0 %3056
        %v3059 = vmul.f32 %v2876, %v3057
        %3061 = vrot.lane.b32.xlu0 %v3059, 96
        %v3062 = vpop.permute.xlu0 %3061
        %v3065 = vsel %vm841, %v3055, 0
        %3067 = vmatprep.subr.mxu0 0.0
        %3068 = vmatpush1.msra.mxu0 %v3062
        %3069 = vmatprep.subr.mxu0 0.0
        %3070 = vmatpush1.msra.mxu0 0.0
        %3071 = vmatprep.subr.mxu0 0.0
        %3072 = vmatpush1.msra.mxu0 0.0
        %3073 = vmatprep.subr.mxu0 0.0
        %3074 = vmatpush1.msra.mxu0 0.0
        %3075 = vmatprep.subr.mxu0 0.0
        %3076 = vmatpush1.msra.mxu0 0.0
        %3077 = vmatprep.subr.mxu0 0.0
        %3078 = vmatpush1.msra.mxu0 0.0
        %3079 = vmatprep.subr.mxu0 0.0
        %3080 = vmatpush1.msra.mxu0 0.0
        %3081 = vmatprep.subr.mxu0 0.0
        %3082 = vmatpush1.msra.mxu0 0.0
        %3083 = vmatprep.subr.mxu0 0.0
        %3084 = vmatpush1.msra.mxu0 0.0
        %3085 = vmatprep.subr.mxu0 0.0
        %3086 = vmatpush1.msra.mxu0 0.0
        %3087 = vmatprep.subr.mxu0 0.0
        %3088 = vmatpush1.msra.mxu0 0.0
        %3089 = vmatprep.subr.mxu0 0.0
        %3090 = vmatpush1.msra.mxu0 0.0
        %3091 = vmatprep.subr.mxu0 0.0
        %3092 = vmatpush1.msra.mxu0 0.0
        %3093 = vmatprep.subr.mxu0 0.0
        %3094 = vmatpush1.msra.mxu0 0.0
        %3095 = vmatprep.subr.mxu0 0.0
        %3096 = vmatpush1.msra.mxu0 0.0
        %3097 = vmatprep.subr.mxu0 0.0
        %3098 = vmatpush1.msra.mxu0 0.0
        %3099 = vmatprep.subr.mxu0 0.0
        %3100 = vmatpush1.msra.mxu0 0.0
        %3101 = vmatprep.subr.mxu0 0.0
        %3102 = vmatpush1.msra.mxu0 0.0
        %3103 = vmatprep.subr.mxu0 0.0
        %3104 = vmatpush1.msra.mxu0 0.0
        %3105 = vmatprep.subr.mxu0 0.0
        %3106 = vmatpush1.msra.mxu0 0.0
        %3107 = vmatprep.subr.mxu0 0.0
        %3108 = vmatpush1.msra.mxu0 0.0
        %3109 = vmatprep.subr.mxu0 0.0
        %3110 = vmatpush1.msra.mxu0 0.0
        %3111 = vmatprep.subr.mxu0 0.0
        %3112 = vmatpush1.msra.mxu0 0.0
        %3113 = vmatprep.subr.mxu0 0.0
        %3114 = vmatpush1.msra.mxu0 0.0
        %3115 = vmatprep.subr.mxu0 0.0
        %3116 = vmatpush1.msra.mxu0 0.0
        %3117 = vmatprep.subr.mxu0 0.0
        %3118 = vmatpush1.msra.mxu0 0.0
        %3119 = vmatprep.subr.mxu0 0.0
        %3120 = vmatpush1.msra.mxu0 0.0
        %3121 = vmatprep.subr.mxu0 0.0
        %3122 = vmatpush1.msra.mxu0 0.0
        %3123 = vmatprep.subr.mxu0 0.0
        %3124 = vmatpush1.msra.mxu0 0.0
        %3125 = vmatprep.subr.mxu0 0.0
        %3126 = vmatpush1.msra.mxu0 0.0
        %3127 = vmatprep.subr.mxu0 0.0
        %3128 = vmatpush1.msra.mxu0 0.0
        %3129 = vmatprep.subr.mxu0 0.0
        %3130 = vmatpush1.msra.mxu0 0.0
        %3131 = vmatprep.mubr.f32.mxu0 0.0
        %3132 = vmatmul.mubr.f32.gmra.mrb[0].mxu0 %v3065
        %v3133 = vpop.f32.mrb[0].mxu0
        %v3134 = vadd.f32 0.0, %v3133
        %v3135 = vpop.f32.mrb[0].mxu0
        %3136 = vdwg.mxu0
        %3138 = vrot.lane.b32.xlu0 %v2970, 96
        %v3139 = vpop.permute.xlu0 %3138
        %v3142 = vsel %vm841, %v2966, 0
        %3144 = vmatprep.subr.mxu0 0.0
        %3145 = vmatpush1.msra.mxu0 %v3139
        %3146 = vmatprep.subr.mxu0 0.0
        %3147 = vmatpush1.msra.mxu0 0.0
        %3148 = vmatprep.subr.mxu0 0.0
        %3149 = vmatpush1.msra.mxu0 0.0
        %3150 = vmatprep.subr.mxu0 0.0
        %3151 = vmatpush1.msra.mxu0 0.0
        %3152 = vmatprep.subr.mxu0 0.0
        %3153 = vmatpush1.msra.mxu0 0.0
        %3154 = vmatprep.subr.mxu0 0.0
        %3155 = vmatpush1.msra.mxu0 0.0
        %3156 = vmatprep.subr.mxu0 0.0
        %3157 = vmatpush1.msra.mxu0 0.0
        %3158 = vmatprep.subr.mxu0 0.0
        %3159 = vmatpush1.msra.mxu0 0.0
        %3160 = vmatprep.subr.mxu0 0.0
        %3161 = vmatpush1.msra.mxu0 0.0
        %3162 = vmatprep.subr.mxu0 0.0
        %3163 = vmatpush1.msra.mxu0 0.0
        %3164 = vmatprep.subr.mxu0 0.0
        %3165 = vmatpush1.msra.mxu0 0.0
        %3166 = vmatprep.subr.mxu0 0.0
        %3167 = vmatpush1.msra.mxu0 0.0
        %3168 = vmatprep.subr.mxu0 0.0
        %3169 = vmatpush1.msra.mxu0 0.0
        %3170 = vmatprep.subr.mxu0 0.0
        %3171 = vmatpush1.msra.mxu0 0.0
        %3172 = vmatprep.subr.mxu0 0.0
        %3173 = vmatpush1.msra.mxu0 0.0
        %3174 = vmatprep.subr.mxu0 0.0
        %3175 = vmatpush1.msra.mxu0 0.0
        %3176 = vmatprep.subr.mxu0 0.0
        %3177 = vmatpush1.msra.mxu0 0.0
        %3178 = vmatprep.subr.mxu0 0.0
        %3179 = vmatpush1.msra.mxu0 0.0
        %3180 = vmatprep.subr.mxu0 0.0
        %3181 = vmatpush1.msra.mxu0 0.0
        %3182 = vmatprep.subr.mxu0 0.0
        %3183 = vmatpush1.msra.mxu0 0.0
        %3184 = vmatprep.subr.mxu0 0.0
        %3185 = vmatpush1.msra.mxu0 0.0
        %3186 = vmatprep.subr.mxu0 0.0
        %3187 = vmatpush1.msra.mxu0 0.0
        %3188 = vmatprep.subr.mxu0 0.0
        %3189 = vmatpush1.msra.mxu0 0.0
        %3190 = vmatprep.subr.mxu0 0.0
        %3191 = vmatpush1.msra.mxu0 0.0
        %3192 = vmatprep.subr.mxu0 0.0
        %3193 = vmatpush1.msra.mxu0 0.0
        %3194 = vmatprep.subr.mxu0 0.0
        %3195 = vmatpush1.msra.mxu0 0.0
        %3196 = vmatprep.subr.mxu0 0.0
        %3197 = vmatpush1.msra.mxu0 0.0
        %3198 = vmatprep.subr.mxu0 0.0
        %3199 = vmatpush1.msra.mxu0 0.0
        %3200 = vmatprep.subr.mxu0 0.0
        %3201 = vmatpush1.msra.mxu0 0.0
        %3202 = vmatprep.subr.mxu0 0.0
        %3203 = vmatpush1.msra.mxu0 0.0
        %3204 = vmatprep.subr.mxu0 0.0
        %3205 = vmatpush1.msra.mxu0 0.0
        %3206 = vmatprep.subr.mxu0 0.0
        %3207 = vmatpush1.msra.mxu0 0.0
        %3208 = vmatprep.mubr.f32.mxu0 0.0
        %3209 = vmatmul.mubr.f32.gmra.mrb[0].mxu0 %v3142
        %v3210 = vpop.f32.mrb[0].mxu0
        %v3211 = vadd.f32 %v3134, %v3210
        %v3212 = vpop.f32.mrb[0].mxu0
        %3213 = vdwg.mxu0
        %v3214 = vmul.f32 %v2794, %v217
        %v3216 = vsel %vm457, %v3214, 0
        %3218 = vmatprep.subr.mxu0 0.0
        %3219 = vmatpush1.xpose.msra.mxu0 %v2884
        %3220 = vmatprep.subr.mxu0 0.0
        %3221 = vmatpush1.xpose.msra.mxu0 0.0
        %3222 = vmatprep.subr.mxu0 0.0
        %3223 = vmatpush1.xpose.msra.mxu0 0.0
        %3224 = vmatprep.subr.mxu0 0.0
        %3225 = vmatpush1.xpose.msra.mxu0 0.0
        %3226 = vmatprep.subr.mxu0 0.0
        %3227 = vmatpush1.xpose.msra.mxu0 0.0
        %3228 = vmatprep.subr.mxu0 0.0
        %3229 = vmatpush1.xpose.msra.mxu0 0.0
        %3230 = vmatprep.subr.mxu0 0.0
        %3231 = vmatpush1.xpose.msra.mxu0 0.0
        %3232 = vmatprep.subr.mxu0 0.0
        %3233 = vmatpush1.xpose.msra.mxu0 0.0
        %3234 = vmatprep.subr.mxu0 0.0
        %3235 = vmatpush1.xpose.msra.mxu0 0.0
        %3236 = vmatprep.subr.mxu0 0.0
        %3237 = vmatpush1.xpose.msra.mxu0 0.0
        %3238 = vmatprep.subr.mxu0 0.0
        %3239 = vmatpush1.xpose.msra.mxu0 0.0
        %3240 = vmatprep.subr.mxu0 0.0
        %3241 = vmatpush1.xpose.msra.mxu0 0.0
        %3242 = vmatprep.subr.mxu0 0.0
        %3243 = vmatpush1.xpose.msra.mxu0 0.0
        %3244 = vmatprep.subr.mxu0 0.0
        %3245 = vmatpush1.xpose.msra.mxu0 0.0
        %3246 = vmatprep.subr.mxu0 0.0
        %3247 = vmatpush1.xpose.msra.mxu0 0.0
        %3248 = vmatprep.subr.mxu0 0.0
        %3249 = vmatpush1.xpose.msra.mxu0 0.0
        %3250 = vmatprep.subr.mxu0 0.0
        %3251 = vmatpush1.xpose.msra.mxu0 0.0
        %3252 = vmatprep.subr.mxu0 0.0
        %3253 = vmatpush1.xpose.msra.mxu0 0.0
        %3254 = vmatprep.subr.mxu0 0.0
        %3255 = vmatpush1.xpose.msra.mxu0 0.0
        %3256 = vmatprep.subr.mxu0 0.0
        %3257 = vmatpush1.xpose.msra.mxu0 0.0
        %3258 = vmatprep.subr.mxu0 0.0
        %3259 = vmatpush1.xpose.msra.mxu0 0.0
        %3260 = vmatprep.subr.mxu0 0.0
        %3261 = vmatpush1.xpose.msra.mxu0 0.0
        %3262 = vmatprep.subr.mxu0 0.0
        %3263 = vmatpush1.xpose.msra.mxu0 0.0
        %3264 = vmatprep.subr.mxu0 0.0
        %3265 = vmatpush1.xpose.msra.mxu0 0.0
        %3266 = vmatprep.subr.mxu0 0.0
        %3267 = vmatpush1.xpose.msra.mxu0 0.0
        %3268 = vmatprep.subr.mxu0 0.0
        %3269 = vmatpush1.xpose.msra.mxu0 0.0
        %3270 = vmatprep.subr.mxu0 0.0
        %3271 = vmatpush1.xpose.msra.mxu0 0.0
        %3272 = vmatprep.subr.mxu0 0.0
        %3273 = vmatpush1.xpose.msra.mxu0 0.0
        %3274 = vmatprep.subr.mxu0 0.0
        %3275 = vmatpush1.xpose.msra.mxu0 0.0
        %3276 = vmatprep.subr.mxu0 0.0
        %3277 = vmatpush1.xpose.msra.mxu0 0.0
        %3278 = vmatprep.subr.mxu0 0.0
        %3279 = vmatpush1.xpose.msra.mxu0 0.0
        %3280 = vmatprep.subr.mxu0 0.0
        %3281 = vmatpush1.xpose.msra.mxu0 0.0
        %3282 = vmatprep.mubr.f32.mxu0 0.0
        %3283 = vmatmul.mubr.f32.gmra.mrb[0].mxu0 %v3216
        %v3284 = vpop.f32.mrb[0].mxu0
        %v3285 = vadd.f32 0.0, %v3284
        %v3286 = vpop.f32.mrb[0].mxu0
        %3287 = vdwg.mxu0
        %v3288 = vsel %vm841, %v3285, -inf
        %3289 = vmax.xlane.f32.xlu0 %v3288
        %v3290 = vpop.xlane.xlu0 %3289
        %v3291 = vsub.f32 %v3285, %v3290
        %v3292 = vmul.f32 %v3291, 1.442695
        %v3293 = vpow.pop %v3292
        %v3294 = vsel %vm841, %v3293, 0.0
        %3295 = vadd.xlane.f32.xlu0 %v3294
        %v3296 = vpop.xlane.xlu0 %3295
        %v3297 = vrcp.pop %v3296
        %v3298 = vmul.f32 %v3293, %v3297
        %3299 = vrot.lane.b32.xlu0 %v217, 32
        %v3300 = vpop.permute.xlu0 %3299
        %v3302 = vmul.f32 %v2876, %v3300
        %3304 = vrot.lane.b32.xlu0 %v3302, 96
        %v3305 = vpop.permute.xlu0 %3304
        %v3308 = vsel %vm841, %v3298, 0
        %3310 = vmatprep.subr.mxu0 0.0
        %3311 = vmatpush1.msra.mxu0 %v3305
        %3312 = vmatprep.subr.mxu0 0.0
        %3313 = vmatpush1.msra.mxu0 0.0
        %3314 = vmatprep.subr.mxu0 0.0
        %3315 = vmatpush1.msra.mxu0 0.0
        %3316 = vmatprep.subr.mxu0 0.0
        %3317 = vmatpush1.msra.mxu0 0.0
        %3318 = vmatprep.subr.mxu0 0.0
        %3319 = vmatpush1.msra.mxu0 0.0
        %3320 = vmatprep.subr.mxu0 0.0
        %3321 = vmatpush1.msra.mxu0 0.0
        %3322 = vmatprep.subr.mxu0 0.0
        %3323 = vmatpush1.msra.mxu0 0.0
        %3324 = vmatprep.subr.mxu0 0.0
        %3325 = vmatpush1.msra.mxu0 0.0
        %3326 = vmatprep.subr.mxu0 0.0
        %3327 = vmatpush1.msra.mxu0 0.0
        %3328 = vmatprep.subr.mxu0 0.0
        %3329 = vmatpush1.msra.mxu0 0.0
        %3330 = vmatprep.subr.mxu0 0.0
        %3331 = vmatpush1.msra.mxu0 0.0
        %3332 = vmatprep.subr.mxu0 0.0
        %3333 = vmatpush1.msra.mxu0 0.0
        %3334 = vmatprep.subr.mxu0 0.0
        %3335 = vmatpush1.msra.mxu0 0.0
        %3336 = vmatprep.subr.mxu0 0.0
        %3337 = vmatpush1.msra.mxu0 0.0
        %3338 = vmatprep.subr.mxu0 0.0
        %3339 = vmatpush1.msra.mxu0 0.0
        %3340 = vmatprep.subr.mxu0 0.0
        %3341 = vmatpush1.msra.mxu0 0.0
        %3342 = vmatprep.subr.mxu0 0.0
        %3343 = vmatpush1.msra.mxu0 0.0
        %3344 = vmatprep.subr.mxu0 0.0
        %3345 = vmatpush1.msra.mxu0 0.0
        %3346 = vmatprep.subr.mxu0 0.0
        %3347 = vmatpush1.msra.mxu0 0.0
        %3348 = vmatprep.subr.mxu0 0.0
        %3349 = vmatpush1.msra.mxu0 0.0
        %3350 = vmatprep.subr.mxu0 0.0
        %3351 = vmatpush1.msra.mxu0 0.0
        %3352 = vmatprep.subr.mxu0 0.0
        %3353 = vmatpush1.msra.mxu0 0.0
        %3354 = vmatprep.subr.mxu0 0.0
        %3355 = vmatpush1.msra.mxu0 0.0
        %3356 = vmatprep.subr.mxu0 0.0
        %3357 = vmatpush1.msra.mxu0 0.0
        %3358 = vmatprep.subr.mxu0 0.0
        %3359 = vmatpush1.msra.mxu0 0.0
        %3360 = vmatprep.subr.mxu0 0.0
        %3361 = vmatpush1.msra.mxu0 0.0
        %3362 = vmatprep.subr.mxu0 0.0
        %3363 = vmatpush1.msra.mxu0 0.0
        %3364 = vmatprep.subr.mxu0 0.0
        %3365 = vmatpush1.msra.mxu0 0.0
        %3366 = vmatprep.subr.mxu0 0.0
        %3367 = vmatpush1.msra.mxu0 0.0
        %3368 = vmatprep.subr.mxu0 0.0
        %3369 = vmatpush1.msra.mxu0 0.0
        %3370 = vmatprep.subr.mxu0 0.0
        %3371 = vmatpush1.msra.mxu0 0.0
        %3372 = vmatprep.subr.mxu0 0.0
        %3373 = vmatpush1.msra.mxu0 0.0
        %3374 = vmatprep.mubr.f32.mxu0 0.0
        %3375 = vmatmul.mubr.f32.gmra.mrb[0].mxu0 %v3308
        %v3376 = vpop.f32.mrb[0].mxu0
        %v3377 = vadd.f32 0.0, %v3376
        %v3378 = vpop.f32.mrb[0].mxu0
        %3379 = vdwg.mxu0
        %v3380 = vadd.f32 %v3211, %v3377
        %v3381 = vmul.f32 %v2794, %v222
        %v3383 = vsel %vm457, %v3381, 0
        %3385 = vmatprep.subr.mxu0 0.0
        %3386 = vmatpush1.xpose.msra.mxu0 %v2884
        %3387 = vmatprep.subr.mxu0 0.0
        %3388 = vmatpush1.xpose.msra.mxu0 0.0
        %3389 = vmatprep.subr.mxu0 0.0
        %3390 = vmatpush1.xpose.msra.mxu0 0.0
        %3391 = vmatprep.subr.mxu0 0.0
        %3392 = vmatpush1.xpose.msra.mxu0 0.0
        %3393 = vmatprep.subr.mxu0 0.0
        %3394 = vmatpush1.xpose.msra.mxu0 0.0
        %3395 = vmatprep.subr.mxu0 0.0
        %3396 = vmatpush1.xpose.msra.mxu0 0.0
        %3397 = vmatprep.subr.mxu0 0.0
        %3398 = vmatpush1.xpose.msra.mxu0 0.0
        %3399 = vmatprep.subr.mxu0 0.0
        %3400 = vmatpush1.xpose.msra.mxu0 0.0
        %3401 = vmatprep.subr.mxu0 0.0
        %3402 = vmatpush1.xpose.msra.mxu0 0.0
        %3403 = vmatprep.subr.mxu0 0.0
        %3404 = vmatpush1.xpose.msra.mxu0 0.0
        %3405 = vmatprep.subr.mxu0 0.0
        %3406 = vmatpush1.xpose.msra.mxu0 0.0
        %3407 = vmatprep.subr.mxu0 0.0
        %3408 = vmatpush1.xpose.msra.mxu0 0.0
        %3409 = vmatprep.subr.mxu0 0.0
        %3410 = vmatpush1.xpose.msra.mxu0 0.0
        %3411 = vmatprep.subr.mxu0 0.0
        %3412 = vmatpush1.xpose.msra.mxu0 0.0
        %3413 = vmatprep.subr.mxu0 0.0
        %3414 = vmatpush1.xpose.msra.mxu0 0.0
        %3415 = vmatprep.subr.mxu0 0.0
        %3416 = vmatpush1.xpose.msra.mxu0 0.0
        %3417 = vmatprep.subr.mxu0 0.0
        %3418 = vmatpush1.xpose.msra.mxu0 0.0
        %3419 = vmatprep.subr.mxu0 0.0
        %3420 = vmatpush1.xpose.msra.mxu0 0.0
        %3421 = vmatprep.subr.mxu0 0.0
        %3422 = vmatpush1.xpose.msra.mxu0 0.0
        %3423 = vmatprep.subr.mxu0 0.0
        %3424 = vmatpush1.xpose.msra.mxu0 0.0
        %3425 = vmatprep.subr.mxu0 0.0
        %3426 = vmatpush1.xpose.msra.mxu0 0.0
        %3427 = vmatprep.subr.mxu0 0.0
        %3428 = vmatpush1.xpose.msra.mxu0 0.0
        %3429 = vmatprep.subr.mxu0 0.0
        %3430 = vmatpush1.xpose.msra.mxu0 0.0
        %3431 = vmatprep.subr.mxu0 0.0
        %3432 = vmatpush1.xpose.msra.mxu0 0.0
        %3433 = vmatprep.subr.mxu0 0.0
        %3434 = vmatpush1.xpose.msra.mxu0 0.0
        %3435 = vmatprep.subr.mxu0 0.0
        %3436 = vmatpush1.xpose.msra.mxu0 0.0
        %3437 = vmatprep.subr.mxu0 0.0
        %3438 = vmatpush1.xpose.msra.mxu0 0.0
        %3439 = vmatprep.subr.mxu0 0.0
        %3440 = vmatpush1.xpose.msra.mxu0 0.0
        %3441 = vmatprep.subr.mxu0 0.0
        %3442 = vmatpush1.xpose.msra.mxu0 0.0
        %3443 = vmatprep.subr.mxu0 0.0
        %3444 = vmatpush1.xpose.msra.mxu0 0.0
        %3445 = vmatprep.subr.mxu0 0.0
        %3446 = vmatpush1.xpose.msra.mxu0 0.0
        %3447 = vmatprep.subr.mxu0 0.0
        %3448 = vmatpush1.xpose.msra.mxu0 0.0
        %3449 = vmatprep.mubr.f32.mxu0 0.0
        %3450 = vmatmul.mubr.f32.gmra.mrb[0].mxu0 %v3383
        %v3451 = vpop.f32.mrb[0].mxu0
        %v3452 = vadd.f32 0.0, %v3451
        %v3453 = vpop.f32.mrb[0].mxu0
        %3454 = vdwg.mxu0
        %v3455 = vsel %vm841, %v3452, -inf
        %3456 = vmax.xlane.f32.xlu0 %v3455
        %v3457 = vpop.xlane.xlu0 %3456
        %v3458 = vsub.f32 %v3452, %v3457
        %v3459 = vmul.f32 %v3458, 1.442695
        %v3460 = vpow.pop %v3459
        %v3461 = vsel %vm841, %v3460, 0.0
        %3462 = vadd.xlane.f32.xlu0 %v3461
        %v3463 = vpop.xlane.xlu0 %3462
        %v3464 = vrcp.pop %v3463
        %v3465 = vmul.f32 %v3460, %v3464
        %3466 = vrot.lane.b32.xlu0 %v222, 32
        %v3467 = vpop.permute.xlu0 %3466
        %v3469 = vmul.f32 %v2876, %v3467
        %3471 = vrot.lane.b32.xlu0 %v3469, 96
        %v3472 = vpop.permute.xlu0 %3471
        %v3475 = vsel %vm841, %v3465, 0
        %3477 = vmatprep.subr.mxu0 0.0
        %3478 = vmatpush1.msra.mxu0 %v3472
        %3479 = vmatprep.subr.mxu0 0.0
        %3480 = vmatpush1.msra.mxu0 0.0
        %3481 = vmatprep.subr.mxu0 0.0
        %3482 = vmatpush1.msra.mxu0 0.0
        %3483 = vmatprep.subr.mxu0 0.0
        %3484 = vmatpush1.msra.mxu0 0.0
        %3485 = vmatprep.subr.mxu0 0.0
        %3486 = vmatpush1.msra.mxu0 0.0
        %3487 = vmatprep.subr.mxu0 0.0
        %3488 = vmatpush1.msra.mxu0 0.0
        %3489 = vmatprep.subr.mxu0 0.0
        %3490 = vmatpush1.msra.mxu0 0.0
        %3491 = vmatprep.subr.mxu0 0.0
        %3492 = vmatpush1.msra.mxu0 0.0
        %3493 = vmatprep.subr.mxu0 0.0
        %3494 = vmatpush1.msra.mxu0 0.0
        %3495 = vmatprep.subr.mxu0 0.0
        %3496 = vmatpush1.msra.mxu0 0.0
        %3497 = vmatprep.subr.mxu0 0.0
        %3498 = vmatpush1.msra.mxu0 0.0
        %3499 = vmatprep.subr.mxu0 0.0
        %3500 = vmatpush1.msra.mxu0 0.0
        %3501 = vmatprep.subr.mxu0 0.0
        %3502 = vmatpush1.msra.mxu0 0.0
        %3503 = vmatprep.subr.mxu0 0.0
        %3504 = vmatpush1.msra.mxu0 0.0
        %3505 = vmatprep.subr.mxu0 0.0
        %3506 = vmatpush1.msra.mxu0 0.0
        %3507 = vmatprep.subr.mxu0 0.0
        %3508 = vmatpush1.msra.mxu0 0.0
        %3509 = vmatprep.subr.mxu0 0.0
        %3510 = vmatpush1.msra.mxu0 0.0
        %3511 = vmatprep.subr.mxu0 0.0
        %3512 = vmatpush1.msra.mxu0 0.0
        %3513 = vmatprep.subr.mxu0 0.0
        %3514 = vmatpush1.msra.mxu0 0.0
        %3515 = vmatprep.subr.mxu0 0.0
        %3516 = vmatpush1.msra.mxu0 0.0
        %3517 = vmatprep.subr.mxu0 0.0
        %3518 = vmatpush1.msra.mxu0 0.0
        %3519 = vmatprep.subr.mxu0 0.0
        %3520 = vmatpush1.msra.mxu0 0.0
        %3521 = vmatprep.subr.mxu0 0.0
        %3522 = vmatpush1.msra.mxu0 0.0
        %3523 = vmatprep.subr.mxu0 0.0
        %3524 = vmatpush1.msra.mxu0 0.0
        %3525 = vmatprep.subr.mxu0 0.0
        %3526 = vmatpush1.msra.mxu0 0.0
        %3527 = vmatprep.subr.mxu0 0.0
        %3528 = vmatpush1.msra.mxu0 0.0
        %3529 = vmatprep.subr.mxu0 0.0
        %3530 = vmatpush1.msra.mxu0 0.0
        %3531 = vmatprep.subr.mxu0 0.0
        %3532 = vmatpush1.msra.mxu0 0.0
        %3533 = vmatprep.subr.mxu0 0.0
        %3534 = vmatpush1.msra.mxu0 0.0
        %3535 = vmatprep.subr.mxu0 0.0
        %3536 = vmatpush1.msra.mxu0 0.0
        %3537 = vmatprep.subr.mxu0 0.0
        %3538 = vmatpush1.msra.mxu0 0.0
        %3539 = vmatprep.subr.mxu0 0.0
        %3540 = vmatpush1.msra.mxu0 0.0
        %3541 = vmatprep.mubr.f32.mxu0 0.0
        %3542 = vmatmul.mubr.f32.gmra.mrb[0].mxu0 %v3475
        %v3543 = vpop.f32.mrb[0].mxu0
        %v3544 = vadd.f32 0.0, %v3543
        %v3545 = vpop.f32.mrb[0].mxu0
        %3546 = vdwg.mxu0
        %v3547 = vadd.f32 %v3380, %v3544
        %v3548 = vld [vmem:[#allocation2 + $0x240] sm:$0xff]
        %v3549 = vld [vmem:[#allocation2 + $0x248] sm:$0xff]
        %v3550 = vld [vmem:[#allocation2 + $0x250] sm:$0xff]
        %v3551 = vld [vmem:[#allocation2 + $0x258] sm:$0xff]
        %v3552 = vld [vmem:[#allocation2 + $0x260] sm:$0x1]
        %v3553 = vlaneseq
        %v3554 = vshrl.u32 %v3553, 7
        %v3555 = vsub.s32 0, %v3554
        %v3556 = vrot.slane %v3552, %v3555
        %v3558 = vsel %vm457, %v3547, 0
        %3560 = vmatprep.subr.mxu0 0.0
        %3561 = vmatpush1.msra.mxu0 %v3548
        %3562 = vmatprep.subr.mxu0 0.0
        %3563 = vmatpush1.msra.mxu0 %v3549
        %3564 = vmatprep.subr.mxu0 0.0
        %3565 = vmatpush1.msra.mxu0 %v3550
        %3566 = vmatprep.subr.mxu0 0.0
        %3567 = vmatpush1.msra.mxu0 %v3551
        %3568 = vmatprep.subr.mxu0 0.0
        %3569 = vmatpush1.msra.mxu0 0.0
        %3570 = vmatprep.subr.mxu0 0.0
        %3571 = vmatpush1.msra.mxu0 0.0
        %3572 = vmatprep.subr.mxu0 0.0
        %3573 = vmatpush1.msra.mxu0 0.0
        %3574 = vmatprep.subr.mxu0 0.0
        %3575 = vmatpush1.msra.mxu0 0.0
        %3576 = vmatprep.subr.mxu0 0.0
        %3577 = vmatpush1.msra.mxu0 0.0
        %3578 = vmatprep.subr.mxu0 0.0
        %3579 = vmatpush1.msra.mxu0 0.0
        %3580 = vmatprep.subr.mxu0 0.0
        %3581 = vmatpush1.msra.mxu0 0.0
        %3582 = vmatprep.subr.mxu0 0.0
        %3583 = vmatpush1.msra.mxu0 0.0
        %3584 = vmatprep.subr.mxu0 0.0
        %3585 = vmatpush1.msra.mxu0 0.0
        %3586 = vmatprep.subr.mxu0 0.0
        %3587 = vmatpush1.msra.mxu0 0.0
        %3588 = vmatprep.subr.mxu0 0.0
        %3589 = vmatpush1.msra.mxu0 0.0
        %3590 = vmatprep.subr.mxu0 0.0
        %3591 = vmatpush1.msra.mxu0 0.0
        %3592 = vmatprep.subr.mxu0 0.0
        %3593 = vmatpush1.msra.mxu0 0.0
        %3594 = vmatprep.subr.mxu0 0.0
        %3595 = vmatpush1.msra.mxu0 0.0
        %3596 = vmatprep.subr.mxu0 0.0
        %3597 = vmatpush1.msra.mxu0 0.0
        %3598 = vmatprep.subr.mxu0 0.0
        %3599 = vmatpush1.msra.mxu0 0.0
        %3600 = vmatprep.subr.mxu0 0.0
        %3601 = vmatpush1.msra.mxu0 0.0
        %3602 = vmatprep.subr.mxu0 0.0
        %3603 = vmatpush1.msra.mxu0 0.0
        %3604 = vmatprep.subr.mxu0 0.0
        %3605 = vmatpush1.msra.mxu0 0.0
        %3606 = vmatprep.subr.mxu0 0.0
        %3607 = vmatpush1.msra.mxu0 0.0
        %3608 = vmatprep.subr.mxu0 0.0
        %3609 = vmatpush1.msra.mxu0 0.0
        %3610 = vmatprep.subr.mxu0 0.0
        %3611 = vmatpush1.msra.mxu0 0.0
        %3612 = vmatprep.subr.mxu0 0.0
        %3613 = vmatpush1.msra.mxu0 0.0
        %3614 = vmatprep.subr.mxu0 0.0
        %3615 = vmatpush1.msra.mxu0 0.0
        %3616 = vmatprep.subr.mxu0 0.0
        %3617 = vmatpush1.msra.mxu0 0.0
        %3618 = vmatprep.subr.mxu0 0.0
        %3619 = vmatpush1.msra.mxu0 0.0
        %3620 = vmatprep.subr.mxu0 0.0
        %3621 = vmatpush1.msra.mxu0 0.0
        %3622 = vmatprep.subr.mxu0 0.0
        %3623 = vmatpush1.msra.mxu0 0.0
        %3624 = vmatprep.mubr.f32.mxu0 0.0
        %3625 = vmatmul.mubr.f32.gmra.mrb[0].mxu0 %v3558
        %v3626 = vpop.f32.mrb[0].mxu0
        %v3627 = vadd.f32 %v3556, %v3626
        %v3628 = vpop.f32.mrb[0].mxu0
        %3629 = vdwg.mxu0
        %v3630 = vadd.f32 %v2689, %v3627
        %v3631 = vsel %vm457, %v3630, 0.0
        %3632 = vadd.xlane.f32.xlu0 %v3631
        %v3633 = vpop.xlane.xlu0 %3632
        %v3634 = vmul.f32 %v3633, %v657
        %v3635 = vsub.f32 %v3630, %v3634
        %v3636 = vmul.f32 %v3635, %v3635
        %v3637 = vsel %vm457, %v3636, 0.0
        %3638 = vadd.xlane.f32.xlu0 %v3637
        %v3639 = vpop.xlane.xlu0 %3638
        %v3640 = vmul.f32 %v3639, %v657
        %v3641 = vadd.f32 %v3640, 1e-05
        %v3642 = vrsqrt.pop %v3641
        %v3643 = vmul.f32 %v3635, %v3642
        %v3644 = vld [vmem:[#allocation2 + $0x268] sm:$0x1]
        %v3645 = vlaneseq
        %v3646 = vshrl.u32 %v3645, 7
        %v3647 = vsub.s32 0, %v3646
        %v3648 = vrot.slane %v3644, %v3647
        %v3649 = vmul.f32 %v3643, %v3648
        %v3650 = vld [vmem:[#allocation2 + $0x270] sm:$0x1]
        %v3651 = vlaneseq
        %v3652 = vshrl.u32 %v3651, 7
        %v3653 = vsub.s32 0, %v3652
        %v3654 = vrot.slane %v3650, %v3653
        %v3655 = vadd.f32 %v3649, %v3654
        %v3656 = vld [vmem:[#allocation2 + $0x278] sm:$0xff]
        %v3657 = vld [vmem:[#allocation2 + $0x280] sm:$0xff]
        %v3658 = vld [vmem:[#allocation2 + $0x288] sm:$0xff]
        %v3659 = vld [vmem:[#allocation2 + $0x290] sm:$0xff]
        %v3660 = vld [vmem:[#allocation2 + $0x298] sm:$0x1]
        %v3661 = vlaneseq
        %v3662 = vshrl.u32 %v3661, 7
        %v3663 = vsub.s32 0, %v3662
        %v3664 = vrot.slane %v3660, %v3663
        %v3666 = vsel %vm457, %v3655, 0
        %3668 = vmatprep.subr.mxu0 0.0
        %3669 = vmatpush1.msra.mxu0 %v3656
        %3670 = vmatprep.subr.mxu0 0.0
        %3671 = vmatpush1.msra.mxu0 %v3657
        %3672 = vmatprep.subr.mxu0 0.0
        %3673 = vmatpush1.msra.mxu0 %v3658
        %3674 = vmatprep.subr.mxu0 0.0
        %3675 = vmatpush1.msra.mxu0 %v3659
        %3676 = vmatprep.subr.mxu0 0.0
        %3677 = vmatpush1.msra.mxu0 0.0
        %3678 = vmatprep.subr.mxu0 0.0
        %3679 = vmatpush1.msra.mxu0 0.0
        %3680 = vmatprep.subr.mxu0 0.0
        %3681 = vmatpush1.msra.mxu0 0.0
        %3682 = vmatprep.subr.mxu0 0.0
        %3683 = vmatpush1.msra.mxu0 0.0
        %3684 = vmatprep.subr.mxu0 0.0
        %3685 = vmatpush1.msra.mxu0 0.0
        %3686 = vmatprep.subr.mxu0 0.0
        %3687 = vmatpush1.msra.mxu0 0.0
        %3688 = vmatprep.subr.mxu0 0.0
        %3689 = vmatpush1.msra.mxu0 0.0
        %3690 = vmatprep.subr.mxu0 0.0
        %3691 = vmatpush1.msra.mxu0 0.0
        %3692 = vmatprep.subr.mxu0 0.0
        %3693 = vmatpush1.msra.mxu0 0.0
        %3694 = vmatprep.subr.mxu0 0.0
        %3695 = vmatpush1.msra.mxu0 0.0
        %3696 = vmatprep.subr.mxu0 0.0
        %3697 = vmatpush1.msra.mxu0 0.0
        %3698 = vmatprep.subr.mxu0 0.0
        %3699 = vmatpush1.msra.mxu0 0.0
        %3700 = vmatprep.subr.mxu0 0.0
        %3701 = vmatpush1.msra.mxu0 0.0
        %3702 = vmatprep.subr.mxu0 0.0
        %3703 = vmatpush1.msra.mxu0 0.0
        %3704 = vmatprep.subr.mxu0 0.0
        %3705 = vmatpush1.msra.mxu0 0.0
        %3706 = vmatprep.subr.mxu0 0.0
        %3707 = vmatpush1.msra.mxu0 0.0
        %3708 = vmatprep.subr.mxu0 0.0
        %3709 = vmatpush1.msra.mxu0 0.0
        %3710 = vmatprep.subr.mxu0 0.0
        %3711 = vmatpush1.msra.mxu0 0.0
        %3712 = vmatprep.subr.mxu0 0.0
        %3713 = vmatpush1.msra.mxu0 0.0
        %3714 = vmatprep.subr.mxu0 0.0
        %3715 = vmatpush1.msra.mxu0 0.0
        %3716 = vmatprep.subr.mxu0 0.0
        %3717 = vmatpush1.msra.mxu0 0.0
        %3718 = vmatprep.subr.mxu0 0.0
        %3719 = vmatpush1.msra.mxu0 0.0
        %3720 = vmatprep.subr.mxu0 0.0
        %3721 = vmatpush1.msra.mxu0 0.0
        %3722 = vmatprep.subr.mxu0 0.0
        %3723 = vmatpush1.msra.mxu0 0.0
        %3724 = vmatprep.subr.mxu0 0.0
        %3725 = vmatpush1.msra.mxu0 0.0
        %3726 = vmatprep.subr.mxu0 0.0
        %3727 = vmatpush1.msra.mxu0 0.0
        %3728 = vmatprep.subr.mxu0 0.0
        %3729 = vmatpush1.msra.mxu0 0.0
        %3730 = vmatprep.subr.mxu0 0.0
        %3731 = vmatpush1.msra.mxu0 0.0
        %3732 = vmatprep.mubr.f32.mxu0 0.0
        %3733 = vmatmul.mubr.f32.gmra.mrb[0].mxu0 %v3666
        %v3734 = vpop.f32.mrb[0].mxu0
        %v3735 = vadd.f32 %v3664, %v3734
        %v3736 = vpop.f32.mrb[0].mxu0
        %3737 = vdwg.mxu0
        %v3738 = vmul.f32 %v3735, %v3735
        %v3739 = vmul.f32 %v3735, %v3738
        %v3740 = vmul.f32 %v3739, 0.044715
        %v3741 = vadd.f32 %v3735, %v3740
        %v3742 = vmul.f32 %v3741, 0.7978846
        %v3743 = vtanh.pop %v3742
        %v3744 = vadd.f32 %v3743, 1.0
        %v3745 = vmul.f32 %v3744, 0.5
        %v3746 = vmul.f32 %v3735, %v3745
        %v3747 = vld [vmem:[#allocation2 + $0x2a0] sm:$0xff]
        %v3748 = vld [vmem:[#allocation2 + $0x2a8] sm:$0xff]
        %v3749 = vld [vmem:[#allocation2 + $0x2b0] sm:$0xff]
        %v3750 = vld [vmem:[#allocation2 + $0x2b8] sm:$0xff]
        %v3751 = vld [vmem:[#allocation2 + $0x2c0] sm:$0xff]
        %v3752 = vld [vmem:[#allocation2 + $0x2c8] sm:$0xff]
        %v3753 = vld [vmem:[#allocation2 + $0x2d0] sm:$0xff]
        %v3754 = vld [vmem:[#allocation2 + $0x2d8] sm:$0xff]
        %v3755 = vld [vmem:[#allocation2 + $0x2e0] sm:$0x1]
        %v3756 = vlaneseq
        %v3757 = vshrl.u32 %v3756, 7
        %v3758 = vsub.s32 0, %v3757
        %v3759 = vrot.slane %v3755, %v3758
        %v3761 = vsel %vm1650, %v3746, 0
        %3763 = vmatprep.subr.mxu0 0.0
        %3764 = vmatpush1.msra.mxu0 %v3747
        %3765 = vmatprep.subr.mxu0 0.0
        %3766 = vmatpush1.msra.mxu0 %v3748
        %3767 = vmatprep.subr.mxu0 0.0
        %3768 = vmatpush1.msra.mxu0 %v3749
        %3769 = vmatprep.subr.mxu0 0.0
        %3770 = vmatpush1.msra.mxu0 %v3750
        %3771 = vmatprep.subr.mxu0 0.0
        %3772 = vmatpush1.msra.mxu0 %v3751
        %3773 = vmatprep.subr.mxu0 0.0
        %3774 = vmatpush1.msra.mxu0 %v3752
        %3775 = vmatprep.subr.mxu0 0.0
        %3776 = vmatpush1.msra.mxu0 %v3753
        %3777 = vmatprep.subr.mxu0 0.0
        %3778 = vmatpush1.msra.mxu0 %v3754
        %3779 = vmatprep.subr.mxu0 0.0
        %3780 = vmatpush1.msra.mxu0 0.0
        %3781 = vmatprep.subr.mxu0 0.0
        %3782 = vmatpush1.msra.mxu0 0.0
        %3783 = vmatprep.subr.mxu0 0.0
        %3784 = vmatpush1.msra.mxu0 0.0
        %3785 = vmatprep.subr.mxu0 0.0
        %3786 = vmatpush1.msra.mxu0 0.0
        %3787 = vmatprep.subr.mxu0 0.0
        %3788 = vmatpush1.msra.mxu0 0.0
        %3789 = vmatprep.subr.mxu0 0.0
        %3790 = vmatpush1.msra.mxu0 0.0
        %3791 = vmatprep.subr.mxu0 0.0
        %3792 = vmatpush1.msra.mxu0 0.0
        %3793 = vmatprep.subr.mxu0 0.0
        %3794 = vmatpush1.msra.mxu0 0.0
        %3795 = vmatprep.subr.mxu0 0.0
        %3796 = vmatpush1.msra.mxu0 0.0
        %3797 = vmatprep.subr.mxu0 0.0
        %3798 = vmatpush1.msra.mxu0 0.0
        %3799 = vmatprep.subr.mxu0 0.0
        %3800 = vmatpush1.msra.mxu0 0.0
        %3801 = vmatprep.subr.mxu0 0.0
        %3802 = vmatpush1.msra.mxu0 0.0
        %3803 = vmatprep.subr.mxu0 0.0
        %3804 = vmatpush1.msra.mxu0 0.0
        %3805 = vmatprep.subr.mxu0 0.0
        %3806 = vmatpush1.msra.mxu0 0.0
        %3807 = vmatprep.subr.mxu0 0.0
        %3808 = vmatpush1.msra.mxu0 0.0
        %3809 = vmatprep.subr.mxu0 0.0
        %3810 = vmatpush1.msra.mxu0 0.0
        %3811 = vmatprep.subr.mxu0 0.0
        %3812 = vmatpush1.msra.mxu0 0.0
        %3813 = vmatprep.subr.mxu0 0.0
        %3814 = vmatpush1.msra.mxu0 0.0
        %3815 = vmatprep.subr.mxu0 0.0
        %3816 = vmatpush1.msra.mxu0 0.0
        %3817 = vmatprep.subr.mxu0 0.0
        %3818 = vmatpush1.msra.mxu0 0.0
        %3819 = vmatprep.subr.mxu0 0.0
        %3820 = vmatpush1.msra.mxu0 0.0
        %3821 = vmatprep.subr.mxu0 0.0
        %3822 = vmatpush1.msra.mxu0 0.0
        %3823 = vmatprep.subr.mxu0 0.0
        %3824 = vmatpush1.msra.mxu0 0.0
        %3825 = vmatprep.subr.mxu0 0.0
        %3826 = vmatpush1.msra.mxu0 0.0
        %3827 = vmatprep.mubr.f32.mxu0 0.0
        %3828 = vmatmul.mubr.f32.gmra.mrb[0].mxu0 %v3761
        %v3829 = vpop.f32.mrb[0].mxu0
        %v3830 = vadd.f32 %v3759, %v3829
        %v3831 = vpop.f32.mrb[0].mxu0
        %3832 = vdwg.mxu0
        %v3833 = vadd.f32 %v3630, %v3830
        %v3834 = vsel %vm457, %v3833, 0.0
        %3835 = vadd.xlane.f32.xlu0 %v3834
        %v3836 = vpop.xlane.xlu0 %3835
        %v3837 = vmul.f32 %v3836, %v657
        %v3838 = vsub.f32 %v3833, %v3837
        %v3839 = vmul.f32 %v3838, %v3838
        %v3840 = vsel %vm457, %v3839, 0.0
        %3841 = vadd.xlane.f32.xlu0 %v3840
        %v3842 = vpop.xlane.xlu0 %3841
        %v3843 = vmul.f32 %v3842, %v657
        %v3844 = vadd.f32 %v3843, 1e-05
        %v3845 = vrsqrt.pop %v3844
        %v3846 = vmul.f32 %v3838, %v3845
        %v3847 = vld [vmem:[#allocation2 + $0x2e8] sm:$0x1]
        %v3848 = vlaneseq
        %v3849 = vshrl.u32 %v3848, 7
        %v3850 = vsub.s32 0, %v3849
        %v3851 = vrot.slane %v3847, %v3850
        %v3852 = vmul.f32 %v3846, %v3851
        %v3853 = vld [vmem:[#allocation2 + $0x2f0] sm:$0x1]
        %v3854 = vlaneseq
        %v3855 = vshrl.u32 %v3854, 7
        %v3856 = vsub.s32 0, %v3855
        %v3857 = vrot.slane %v3853, %v3856
        %v3858 = vadd.f32 %v3852, %v3857
        %v3859 = vld [vmem:[#allocation2 + $0x2f8] sm:$0xff]
        %v3860 = vld [vmem:[#allocation2 + $0x300] sm:$0xff]
        %v3861 = vld [vmem:[#allocation2 + $0x308] sm:$0xff]
        %v3862 = vld [vmem:[#allocation2 + $0x310] sm:$0xff]
        %v3864 = vsel %vm457, %v3858, 0
        %3866 = vmatprep.subr.mxu0 0.0
        %3867 = vmatpush1.msra.mxu0 %v3859
        %3868 = vmatprep.subr.mxu0 0.0
        %3869 = vmatpush1.msra.mxu0 %v3860
        %3870 = vmatprep.subr.mxu0 0.0
        %3871 = vmatpush1.msra.mxu0 %v3861
        %3872 = vmatprep.subr.mxu0 0.0
        %3873 = vmatpush1.msra.mxu0 %v3862
        %3874 = vmatprep.subr.mxu0 0.0
        %3875 = vmatpush1.msra.mxu0 0.0
        %3876 = vmatprep.subr.mxu0 0.0
        %3877 = vmatpush1.msra.mxu0 0.0
        %3878 = vmatprep.subr.mxu0 0.0
        %3879 = vmatpush1.msra.mxu0 0.0
        %3880 = vmatprep.subr.mxu0 0.0
        %3881 = vmatpush1.msra.mxu0 0.0
        %3882 = vmatprep.subr.mxu0 0.0
        %3883 = vmatpush1.msra.mxu0 0.0
        %3884 = vmatprep.subr.mxu0 0.0
        %3885 = vmatpush1.msra.mxu0 0.0
        %3886 = vmatprep.subr.mxu0 0.0
        %3887 = vmatpush1.msra.mxu0 0.0
        %3888 = vmatprep.subr.mxu0 0.0
        %3889 = vmatpush1.msra.mxu0 0.0
        %3890 = vmatprep.subr.mxu0 0.0
        %3891 = vmatpush1.msra.mxu0 0.0
        %3892 = vmatprep.subr.mxu0 0.0
        %3893 = vmatpush1.msra.mxu0 0.0
        %3894 = vmatprep.subr.mxu0 0.0
        %3895 = vmatpush1.msra.mxu0 0.0
        %3896 = vmatprep.subr.mxu0 0.0
        %3897 = vmatpush1.msra.mxu0 0.0
        %3898 = vmatprep.subr.mxu0 0.0
        %3899 = vmatpush1.msra.mxu0 0.0
        %3900 = vmatprep.subr.mxu0 0.0
        %3901 = vmatpush1.msra.mxu0 0.0
        %3902 = vmatprep.subr.mxu0 0.0
        %3903 = vmatpush1.msra.mxu0 0.0
        %3904 = vmatprep.subr.mxu0 0.0
        %3905 = vmatpush1.msra.mxu0 0.0
        %3906 = vmatprep.subr.mxu0 0.0
        %3907 = vmatpush1.msra.mxu0 0.0
        %3908 = vmatprep.subr.mxu0 0.0
        %3909 = vmatpush1.msra.mxu0 0.0
        %3910 = vmatprep.subr.mxu0 0.0
        %3911 = vmatpush1.msra.mxu0 0.0
        %3912 = vmatprep.subr.mxu0 0.0
        %3913 = vmatpush1.msra.mxu0 0.0
        %3914 = vmatprep.subr.mxu0 0.0
        %3915 = vmatpush1.msra.mxu0 0.0
        %3916 = vmatprep.subr.mxu0 0.0
        %3917 = vmatpush1.msra.mxu0 0.0
        %3918 = vmatprep.subr.mxu0 0.0
        %3919 = vmatpush1.msra.mxu0 0.0
        %3920 = vmatprep.subr.mxu0 0.0
        %3921 = vmatpush1.msra.mxu0 0.0
        %3922 = vmatprep.subr.mxu0 0.0
        %3923 = vmatpush1.msra.mxu0 0.0
        %3924 = vmatprep.subr.mxu0 0.0
        %3925 = vmatpush1.msra.mxu0 0.0
        %3926 = vmatprep.subr.mxu0 0.0
        %3927 = vmatpush1.msra.mxu0 0.0
        %3928 = vmatprep.subr.mxu0 0.0
        %3929 = vmatpush1.msra.mxu0 0.0
        %3930 = vmatprep.mubr.f32.mxu0 0.0
        %3931 = vmatmul.mubr.f32.gmra.mrb[0].mxu0 %v3864
        %v3932 = vpop.f32.mrb[0].mxu0
        %v3933 = vadd.f32 0.0, %v3932
        %v3934 = vpop.f32.mrb[0].mxu0
        %3935 = vdwg.mxu0
        %v3936 = vld [vmem:[#allocation2 + $0x318] sm:$0xff]
        %v3937 = vld [vmem:[#allocation2 + $0x320] sm:$0xff]
        %v3938 = vld [vmem:[#allocation2 + $0x328] sm:$0xff]
        %v3939 = vld [vmem:[#allocation2 + $0x330] sm:$0xff]
        %v3940 = vld [vmem:[#allocation2 + $0x338] sm:$0xff]
        %v3941 = vld [vmem:[#allocation2 + $0x340] sm:$0xff]
        %v3942 = vld [vmem:[#allocation2 + $0x348] sm:$0xff]
        %v3943 = vld [vmem:[#allocation2 + $0x350] sm:$0xff]
        %v3945 = vsel %vm1650, %v3933, 0
        %3947 = vmatprep.subr.mxu0 0.0
        %3948 = vmatpush1.msra.mxu0 %v3936
        %3949 = vmatprep.subr.mxu0 0.0
        %3950 = vmatpush1.msra.mxu0 %v3937
        %3951 = vmatprep.subr.mxu0 0.0
        %3952 = vmatpush1.msra.mxu0 %v3938
        %3953 = vmatprep.subr.mxu0 0.0
        %3954 = vmatpush1.msra.mxu0 %v3939
        %3955 = vmatprep.subr.mxu0 0.0
        %3956 = vmatpush1.msra.mxu0 %v3940
        %3957 = vmatprep.subr.mxu0 0.0
        %3958 = vmatpush1.msra.mxu0 %v3941
        %3959 = vmatprep.subr.mxu0 0.0
        %3960 = vmatpush1.msra.mxu0 %v3942
        %3961 = vmatprep.subr.mxu0 0.0
        %3962 = vmatpush1.msra.mxu0 %v3943
        %3963 = vmatprep.subr.mxu0 0.0
        %3964 = vmatpush1.msra.mxu0 0.0
        %3965 = vmatprep.subr.mxu0 0.0
        %3966 = vmatpush1.msra.mxu0 0.0
        %3967 = vmatprep.subr.mxu0 0.0
        %3968 = vmatpush1.msra.mxu0 0.0
        %3969 = vmatprep.subr.mxu0 0.0
        %3970 = vmatpush1.msra.mxu0 0.0
        %3971 = vmatprep.subr.mxu0 0.0
        %3972 = vmatpush1.msra.mxu0 0.0
        %3973 = vmatprep.subr.mxu0 0.0
        %3974 = vmatpush1.msra.mxu0 0.0
        %3975 = vmatprep.subr.mxu0 0.0
        %3976 = vmatpush1.msra.mxu0 0.0
        %3977 = vmatprep.subr.mxu0 0.0
        %3978 = vmatpush1.msra.mxu0 0.0
        %3979 = vmatprep.subr.mxu0 0.0
        %3980 = vmatpush1.msra.mxu0 0.0
        %3981 = vmatprep.subr.mxu0 0.0
        %3982 = vmatpush1.msra.mxu0 0.0
        %3983 = vmatprep.subr.mxu0 0.0
        %3984 = vmatpush1.msra.mxu0 0.0
        %3985 = vmatprep.subr.mxu0 0.0
        %3986 = vmatpush1.msra.mxu0 0.0
        %3987 = vmatprep.subr.mxu0 0.0
        %3988 = vmatpush1.msra.mxu0 0.0
        %3989 = vmatprep.subr.mxu0 0.0
        %3990 = vmatpush1.msra.mxu0 0.0
        %3991 = vmatprep.subr.mxu0 0.0
        %3992 = vmatpush1.msra.mxu0 0.0
        %3993 = vmatprep.subr.mxu0 0.0
        %3994 = vmatpush1.msra.mxu0 0.0
        %3995 = vmatprep.subr.mxu0 0.0
        %3996 = vmatpush1.msra.mxu0 0.0
        %3997 = vmatprep.subr.mxu0 0.0
        %3998 = vmatpush1.msra.mxu0 0.0
        %3999 = vmatprep.subr.mxu0 0.0
        %4000 = vmatpush1.msra.mxu0 0.0
        %4001 = vmatprep.subr.mxu0 0.0
        %4002 = vmatpush1.msra.mxu0 0.0
        %4003 = vmatprep.subr.mxu0 0.0
        %4004 = vmatpush1.msra.mxu0 0.0
        %4005 = vmatprep.subr.mxu0 0.0
        %4006 = vmatpush1.msra.mxu0 0.0
        %4007 = vmatprep.subr.mxu0 0.0
        %4008 = vmatpush1.msra.mxu0 0.0
        %4009 = vmatprep.subr.mxu0 0.0
        %4010 = vmatpush1.msra.mxu0 0.0
        %4011 = vmatprep.mubr.f32.mxu0 0.0
        %4012 = vmatmul.mubr.f32.gmra.mrb[0].mxu0 %v3945
        %v4013 = vpop.f32.mrb[0].mxu0
        %v4014 = vadd.f32 0.0, %v4013
        %v4015 = vpop.f32.mrb[0].mxu0
        %4016 = vdwg.mxu0
        %v4017 = vsel %vm227, %v4014, -inf
        %4018 = vmax.xlane.f32.xlu0 %v4017
        %v4019 = vpop.xlane.xlu0 %4018
        %vm4020 = vcmp.eq.f32.partialorder %v4014, %v4019
        %v4021 = vsel %vm4020, %v202, 16
        %v4022 = vsel %vm227, %v4021, 2147483647
        %v4023 = vand.u32 %v4022, 65535
        %v4024 = vshra.s32 %v4022, 16
        %v4025 = vcvt.s32.f32 %v4023
        %v4026 = vcvt.s32.f32 %v4024
        %4027 = vmin.xlane.f32.xlu0 %v4026
        %v4028 = vpop.xlane.xlu0 %4027
        %vm4029 = vcmp.eq.f32.partialorder %v4026, %v4028
        %v4030 = vsel %vm4029, %v4025, inf
        %4031 = vmin.xlane.f32.xlu0 %v4030
        %v4032 = vpop.xlane.xlu0 %4031
        %v4033 = vcvt.f32.s32 %v4032
        %v4034 = vcvt.f32.s32 %v4028
        %v4035 = vshll.u32 %v4034, 16
        %v4036 = vadd.s32 %v4035, %v4033
        %v4037 = vcvt.s32.f32 %v4036
        %vm4038 = vcmp.ge.s32.totalorder %v1750, 0
        %v4039 = vsel %vm4038, 1, 0
        %v4040 = vcvt.s32.f32 %v4039
        %v4041 = vsel %vm4038, %v1750, 0
        %v4042 = vsub.f32 %v4014, %v4019
        %v4043 = vmul.f32 %v4042, 1.442695
        %v4044 = vpow.pop %v4043
        %v4045 = vsel %vm227, %v4044, 0.0
        %4046 = vadd.xlane.f32.xlu0 %v4045
        %v4047 = vpop.xlane.xlu0 %4046
        %v4048 = vlog2.pop %v4047
        %v4049 = vmul.f32 %v4048, 0.6931472
        %v4050 = vadd.f32 %v4049, %v4019
        %4051 = vset.pattern.permute.xlu0 1
        %4052 = vperm.xlu0 %4051, %v4041
        %v4053 = vpop.permute.xlu0 %4052
        %vm4054 = vcmp.eq.s32.totalorder %v202, %v4053
        %v4055 = vsel %vm4054, %v4014, 0.0
        %v4056 = vsel %vm227, %v4055, 0.0
        %4057 = vadd.xlane.f32.xlu0 %v4056
        %v4058 = vpop.xlane.xlu0 %4057
        %v4059 = vsub.f32 %v4050, %v4058
        %v4060 = vmul.f32 %v4059, %v4040
        %vm4061 = vcmp.eq.s32.totalorder %v202, %v324
        %vm4062 = vcmp.eq.s32.totalorder %v202, %v325
        %v4063 = vsel %vm4061, 1, 0
        %v4064 = vsel %vm4062, 1, 0
        %v4065 = vcvt.s32.f32 %v4063
        %v4066 = vcvt.s32.f32 %v4064
        %vm4067 = vcmp.eq.s32.totalorder %v202, 16
        %v4068 = vsel %vm4067, 1, 0
        %v4069 = vcvt.s32.f32 %v4068
        %v4070 = vmul.f32 %v4037, %v4069
        %v4072 = vsel %vm227, %v4014, 0
        %4074 = vmatprep.subr.mxu0 0.0
        %4075 = vmatpush1.msra.mxu0 %v4065
        %4076 = vmatprep.subr.mxu0 0.0
        %4077 = vmatpush1.msra.mxu0 %v4066
        %4078 = vmatprep.subr.mxu0 0.0
        %4079 = vmatpush1.msra.mxu0 0.0
        %4080 = vmatprep.subr.mxu0 0.0
        %4081 = vmatpush1.msra.mxu0 0.0
        %4082 = vmatprep.subr.mxu0 0.0
        %4083 = vmatpush1.msra.mxu0 0.0
        %4084 = vmatprep.subr.mxu0 0.0
        %4085 = vmatpush1.msra.mxu0 0.0
        %4086 = vmatprep.subr.mxu0 0.0
        %4087 = vmatpush1.msra.mxu0 0.0
        %4088 = vmatprep.subr.mxu0 0.0
        %4089 = vmatpush1.msra.mxu0 0.0
        %4090 = vmatprep.subr.mxu0 0.0
        %4091 = vmatpush1.msra.mxu0 0.0
        %4092 = vmatprep.subr.mxu0 0.0
        %4093 = vmatpush1.msra.mxu0 0.0
        %4094 = vmatprep.subr.mxu0 0.0
        %4095 = vmatpush1.msra.mxu0 0.0
        %4096 = vmatprep.subr.mxu0 0.0
        %4097 = vmatpush1.msra.mxu0 0.0
        %4098 = vmatprep.subr.mxu0 0.0
        %4099 = vmatpush1.msra.mxu0 0.0
        %4100 = vmatprep.subr.mxu0 0.0
        %4101 = vmatpush1.msra.mxu0 0.0
        %4102 = vmatprep.subr.mxu0 0.0
        %4103 = vmatpush1.msra.mxu0 0.0
        %4104 = vmatprep.subr.mxu0 0.0
        %4105 = vmatpush1.msra.mxu0 0.0
        %4106 = vmatprep.subr.mxu0 0.0
        %4107 = vmatpush1.msra.mxu0 0.0
        %4108 = vmatprep.subr.mxu0 0.0
        %4109 = vmatpush1.msra.mxu0 0.0
        %4110 = vmatprep.subr.mxu0 0.0
        %4111 = vmatpush1.msra.mxu0 0.0
        %4112 = vmatprep.subr.mxu0 0.0
        %4113 = vmatpush1.msra.mxu0 0.0
        %4114 = vmatprep.subr.mxu0 0.0
        %4115 = vmatpush1.msra.mxu0 0.0
        %4116 = vmatprep.subr.mxu0 0.0
        %4117 = vmatpush1.msra.mxu0 0.0
        %4118 = vmatprep.subr.mxu0 0.0
        %4119 = vmatpush1.msra.mxu0 0.0
        %4120 = vmatprep.subr.mxu0 0.0
        %4121 = vmatpush1.msra.mxu0 0.0
        %4122 = vmatprep.subr.mxu0 0.0
        %4123 = vmatpush1.msra.mxu0 0.0
        %4124 = vmatprep.subr.mxu0 0.0
        %4125 = vmatpush1.msra.mxu0 0.0
        %4126 = vmatprep.subr.mxu0 0.0
        %4127 = vmatpush1.msra.mxu0 0.0
        %4128 = vmatprep.subr.mxu0 0.0
        %4129 = vmatpush1.msra.mxu0 0.0
        %4130 = vmatprep.subr.mxu0 0.0
        %4131 = vmatpush1.msra.mxu0 0.0
        %4132 = vmatprep.subr.mxu0 0.0
        %4133 = vmatpush1.msra.mxu0 0.0
        %4134 = vmatprep.subr.mxu0 0.0
        %4135 = vmatpush1.msra.mxu0 0.0
        %4136 = vmatprep.subr.mxu0 0.0
        %4137 = vmatpush1.msra.mxu0 0.0
        %4138 = vmatprep.mubr.f32.mxu0 0.0
        %4139 = vmatmul.mubr.f32.gmra.mrb[0].mxu0 %v4072
        %v4140 = vpop.f32.mrb[0].mxu0
        %v4141 = vadd.f32 %v4070, %v4140
        %v4142 = vpop.f32.mrb[0].mxu0
        %4143 = vdwg.mxu0
        %vm4144 = vcmp.eq.s32.totalorder %v202, 17
        %v4145 = vsel %vm4144, 1, 0
        %v4146 = vcvt.s32.f32 %v4145
        %4148 = vset.pattern.permute.xlu0 1
        %4149 = vperm.xlu0 %4148, %v4060
        %v4150 = vpop.permute.xlu0 %4149
        %v4152 = vmul.f32 %v4150, %v4146
        %v4153 = vadd.f32 %v4141, %v4152
        %vm4154 = vcmp.eq.s32.totalorder %v202, 18
        %v4155 = vsel %vm4154, 1, 0
        %v4156 = vcvt.s32.f32 %v4155
        %4158 = vset.pattern.permute.xlu0 1
        %4159 = vperm.xlu0 %4158, %v4040
        %v4160 = vpop.permute.xlu0 %4159
        %v4162 = vmul.f32 %v4160, %v4156
        %v4163 = vadd.f32 %v4153, %v4162
        %4164 = vst [vmem:[%s200] sm:$0xff] %v4163
        %p4165 = scmp.lt.s32.totalorder %s15, 1
        %s4166 = scalar_select %p4165, %s15, 1
        %s4167 = smul.addr %s4166, 8
        %s4168 = scalar_lea.vmem %s3, %s4167
        // Predicated region
        $region37: #{_forward_core.1} parent=31 // pred_check
          %p4169 = pneg %p106
        $region38: #{_forward_core.1} parent=31 // pred_check_branch
          %4171 = sbr.rel (%p4169) target = $region40
        $region39: #{_forward_core.1} parent=31 // pred_region
          _
        $region40: #{_forward_core.1} parent=31 // pred_fallthru
          _
      $region32: #{_forward_core.1} parent=5 // pred_fallthru
        _
      %p4172 = scmp.le.s32.totalorder 2, %s10
      // Predicated region
      $region41: #{_forward_core.1} parent=5 // pred_check
        %p4173 = pneg %p4172
      $region42: #{_forward_core.1} parent=5 // pred_check_branch
        %4175 = sbr.rel (%p4173) target = $region44
      $region43: #{_forward_core.1} parent=5 // pred_region
        %s4176 = ssub.s32 %s10, 2
        // Predicated region
        $region45: #{_forward_core.1} parent=43 // pred_check
          %p4177 = pneg %p112
        $region46: #{_forward_core.1} parent=43 // pred_check_branch
          %4179 = sbr.rel (%p4177) target = $region48
        $region47: #{_forward_core.1} parent=43 // pred_region
          %p4180 = scmp.lt.s32.totalorder %s16, 1
          %s4181 = scalar_select %p4180, %s16, 1
          %s4182 = smul.addr %s4181, 8
          %s4183 = scalar_lea.vmem %s3, %s4182
        $region48: #{_forward_core.1} parent=43 // pred_fallthru
          _
      $region44: #{_forward_core.1} parent=5 // pred_fallthru
        _
    $region6: #{_forward_core.1} parent=1 // loop_footer
      %s14 = sadd.s32 1, %s10
    $region7: #{_forward_core.1} parent=1 // loop_footer_branch
      %9 = sbr.rel target = $region3
    $region8: #{_forward_core.1} parent=1 // loop_exit
      _
    %4184 = vsyncpa [#allocation3], 1
    %s4185 = scalar_lea.sflag [#allocation3], 1
    %4186 = vsyncpa %s4185, 1

</llo_original>
